<compile_context>
chip_gen: v6e
topology: v6e:2x2x1
jax: 0.10.0
libtpu: 0.0.40
codegen_flags: <defaults>
</compile_context>

<pallas_src>
import jax
import jax.numpy as jnp
from jax.experimental import pallas as pl
from jax.experimental.pallas import tpu as pltpu

NUM_FEATURES = 1536   # efficientnet_b3 classifier.in_features
NUM_CLASSES = 50
NUM_CONDITIONS = 4
OUT_PAD = 128         # lane-dense fused output width (50 part + 4 cond + zero pad)
HID1 = 512            # part head hidden 1
HID2 = 256            # part head hidden 2
CHID = 128            # condition head hidden


def _autoparts_head_kernel(pooled_ref,
                           wcat_ref, bcat_ref,
                           w2_ref, b2_ref,
                           wtail_ref, btail_ref,
                           out_ref):
    # pooled_ref: (bt, 1536) bf16 -- already avg-pooled / flattened features.
    p = pooled_ref[...]

    # Fused first layers of both heads: (bt,1536) @ (1536,640), f32 accumulate.
    hc = jnp.dot(p, wcat_ref[...], preferred_element_type=jnp.float32)
    hc = jnp.maximum(hc + bcat_ref[...], 0.0)            # f32 bias/ReLU (v5e: no bf16 VPU)

    h = hc[:, :HID1].astype(jnp.bfloat16)                 # part-head hidden  (bt, 512)
    c = hc[:, HID1:].astype(jnp.bfloat16)                 # cond-head hidden  (bt, 128)

    # Part head second layer: (bt,512) @ (512,256).
    h2 = jnp.dot(h, w2_ref[...], preferred_element_type=jnp.float32) + b2_ref[...]
    h2 = jnp.maximum(h2, 0.0).astype(jnp.bfloat16)        # (bt, 256)

    # Fused epilogue: one (bt,384) @ (384,128) matmul producing the lane-dense
    # logit slab: cols [0:50] = part logits, [50:54] = condition logits.
    # (slices / concat are at 128-lane boundaries -> no layout cost)
    tail = jnp.concatenate([h2, c], axis=-1)              # (bt, 384) bf16
    out_ref[...] = (jnp.dot(tail, wtail_ref[...], preferred_element_type=jnp.float32)
                    + btail_ref[...])


def init_params(key):
    """Deterministic synthetic parameters matching the module's layer shapes (f32)."""
    ks = jax.random.split(key, 10)
    wscale, bscale = 0.02, 0.01

    def lin(kw, kb, fan_in, fan_out):
        w = jax.random.normal(kw, (fan_in, fan_out), jnp.float32) * wscale
        b = jax.random.normal(kb, (1, fan_out), jnp.float32) * bscale
        return w, b

    w1, b1 = lin(ks[0], ks[5], NUM_FEATURES, HID1)
    w2, b2 = lin(ks[1], ks[6], HID1, HID2)
    w3, b3 = lin(ks[2], ks[7], HID2, NUM_CLASSES)
    cw1, cb1 = lin(ks[3], ks[8], NUM_FEATURES, CHID)
    cw2, cb2 = lin(ks[4], ks[9], CHID, NUM_CONDITIONS)
    return (w1, b1, w2, b2, w3, b3, cw1, cb1, cw2, cb2)


def _pack_params(params):
    """Fuse / pad the five Linear layers into the kernel's three weight slabs."""
    w1, b1, w2, b2, w3, b3, cw1, cb1, cw2, cb2 = params

    wcat = jnp.concatenate([w1, cw1], axis=1).astype(jnp.bfloat16)        # (1536, 640)
    bcat = jnp.concatenate([b1, cb1], axis=1)                             # (1, 640) f32
    w2b = w2.astype(jnp.bfloat16)                                         # (512, 256)

    # Fused tail: rows [0:256] x cols [0:50] = w3 ; rows [256:384] x cols [50:54] = cw2.
    wtail = jnp.zeros((HID2 + CHID, OUT_PAD), jnp.float32)
    wtail = wtail.at[:HID2, :NUM_CLASSES].set(w3)
    wtail = wtail.at[HID2:, NUM_CLASSES:NUM_CLASSES + NUM_CONDITIONS].set(cw2)
    wtail = wtail.astype(jnp.bfloat16)                                    # (384, 128)

    btail = (jnp.zeros((1, OUT_PAD), jnp.float32)
             .at[:, :NUM_CLASSES].set(b3)
             .at[:, NUM_CLASSES:NUM_CLASSES + NUM_CONDITIONS].set(cb2))   # (1, 128) f32
    return wcat, bcat, w2b, b2, wtail, btail


def _pick_batch_tile(B):
    """Batch tile: multiple of 8 (or == B for tiny B); >= 2 grid steps once B >= 16
    so v7x's two TensorCores both get parallel work."""
    if B <= 8:
        return B
    bt = max(8, 8 * (B // 16))        # ~B/2 rounded down to a multiple of 8
    return min(bt, 128)


def autoparts_forward(feat_nchw, params):
    """feat_nchw: (B, C, H, W) float32 feature map from the (elided) backbone."""
    B, C, H, W = feat_nchw.shape
    assert C == NUM_FEATURES

    # backbone.avgpool + flatten, fused by XLA into its single f32 read of the
    # backbone output; only the (B, 1536) bf16 pooled vector reaches the kernel.
    pooled = jnp.mean(feat_nchw, axis=(2, 3)).astype(jnp.bfloat16)        # (B, 1536)

    wcat, bcat, w2b, b2, wtail, btail = _pack_params(params)

    bt = _pick_batch_tile(B)
    grid = (pl.cdiv(B, bt),)

    weight_mac = C * (HID1 + CHID) + HID1 * HID2 + (HID2 + CHID) * OUT_PAD
    cost = pl.CostEstimate(
        flops=2 * B * weight_mac,
        transcendentals=0,
        bytes_accessed=(B * C * 2                                   # pooled bf16 in
                        + weight_mac * 2                            # bf16 weights
                        + (HID1 + CHID + HID2 + OUT_PAD) * 4        # f32 biases
                        + B * OUT_PAD * 4),                         # f32 logit slab out
    )

    fused_out = pl.pallas_call(
        _autoparts_head_kernel,
        out_shape=jax.ShapeDtypeStruct((B, OUT_PAD), jnp.float32),
        grid_spec=pltpu.PrefetchScalarGridSpec(
            num_scalar_prefetch=0,
            grid=grid,
            in_specs=[
                pl.BlockSpec((bt, C), lambda b: (b, 0)),       # pooled feats, batch-tiled
                pl.BlockSpec(wcat.shape, lambda b: (0, 0)),    # weights VMEM-resident
                pl.BlockSpec(bcat.shape, lambda b: (0, 0)),
                pl.BlockSpec(w2b.shape, lambda b: (0, 0)),
                pl.BlockSpec(b2.shape, lambda b: (0, 0)),
                pl.BlockSpec(wtail.shape, lambda b: (0, 0)),
                pl.BlockSpec(btail.shape, lambda b: (0, 0)),
            ],
            out_specs=pl.BlockSpec((bt, OUT_PAD), lambda b: (b, 0)),
        ),
        compiler_params=pltpu.CompilerParams(
            dimension_semantics=("parallel",),     # shard batch steps across v7x's 2 TCs
            vmem_limit_bytes=32 << 20,             # ample; working set ~5 MiB
        ),
        cost_estimate=cost,
    )(pooled, wcat, bcat, w2b, b2, wtail, btail)

    part_logits = fused_out[:, :NUM_CLASSES]
    condition_logits = fused_out[:, NUM_CLASSES:NUM_CLASSES + NUM_CONDITIONS]
    return part_logits, condition_logits


def _reference(feat_nchw, params):
    """Pure-JAX reference mirroring the kernel's bf16-weight / f32-accumulate math."""
    w1, b1, w2, b2, w3, b3, cw1, cb1, cw2, cb2 = params
    bf16 = lambda a: a.astype(jnp.bfloat16)
    dot = lambda a, b: jnp.dot(a, b, preferred_element_type=jnp.float32)

    pooled = bf16(jnp.mean(feat_nchw, axis=(2, 3)))                       # (B, 1536)

    h = jnp.maximum(dot(pooled, bf16(w1)) + b1, 0.0)
    h = jnp.maximum(dot(bf16(h), bf16(w2)) + b2, 0.0)
    part = dot(bf16(h), bf16(w3)) + b3

    c = jnp.maximum(dot(pooled, bf16(cw1)) + cb1, 0.0)
    cond = dot(bf16(c), bf16(cw2)) + cb2
    return part, cond


if __name__ == "__main__":
    key = jax.random.PRNGKey(0)
    k_feat, k_params = jax.random.split(key)

    # Synthetic EfficientNet-B3 feature map (B, 1536, 8, 8), NCHW like PyTorch.
    B, Hf, Wf = 2, 8, 8
    x = jax.random.normal(k_feat, (B, NUM_FEATURES, Hf, Wf), jnp.float32)

    params = init_params(k_params)

    part_logits, condition_logits = autoparts_forward(x, params)
    jax.block_until_ready((part_logits, condition_logits))

    ref_part, ref_cond = _reference(x, params)
    assert part_logits.shape == (B, NUM_CLASSES)
    assert condition_logits.shape == (B, NUM_CONDITIONS)
    assert jnp.allclose(part_logits, ref_part, atol=1e-3, rtol=1e-3)
    assert jnp.allclose(condition_logits, ref_cond, atol=1e-3, rtol=1e-3)

    print("KERNEL_OK")
</pallas_src>

<mosaic_0001>
module attributes {stable_mosaic.version = 11 : i64} {
  func.func @_autoparts_head_kernel(%arg0: i32, %arg1: memref<2x1536xbf16, #tpu.memory_space<vmem>>, %arg2: memref<1536x640xbf16, #tpu.memory_space<vmem>>, %arg3: memref<1x640xf32, #tpu.memory_space<vmem>>, %arg4: memref<512x256xbf16, #tpu.memory_space<vmem>>, %arg5: memref<1x256xf32, #tpu.memory_space<vmem>>, %arg6: memref<384x128xbf16, #tpu.memory_space<vmem>>, %arg7: memref<1x128xf32, #tpu.memory_space<vmem>>, %arg8: memref<2x128xf32, #tpu.memory_space<vmem>>) attributes {dimension_semantics = [#tpu.dimension_semantics<parallel>], iteration_bounds = array<i64: 1>, scalar_prefetch = 0 : i64, scratch_operands = 0 : i64, tpu.core_type = #tpu.core_type<tc>, window_params = [{transform_indices = @transform_0, window_bounds = array<i64: 2, 1536>}, {pipeline_mode = #tpu.pipeline_mode<synchronous>, transform_indices = @transform_1, window_bounds = array<i64: 1536, 640>}, {pipeline_mode = #tpu.pipeline_mode<synchronous>, transform_indices = @transform_2, window_bounds = array<i64: 1, 640>}, {pipeline_mode = #tpu.pipeline_mode<synchronous>, transform_indices = @transform_3, window_bounds = array<i64: 512, 256>}, {pipeline_mode = #tpu.pipeline_mode<synchronous>, transform_indices = @transform_4, window_bounds = array<i64: 1, 256>}, {pipeline_mode = #tpu.pipeline_mode<synchronous>, transform_indices = @transform_5, window_bounds = array<i64: 384, 128>}, {pipeline_mode = #tpu.pipeline_mode<synchronous>, transform_indices = @transform_6, window_bounds = array<i64: 1, 128>}, {transform_indices = @transform_7, window_bounds = array<i64: 2, 128>}]} {
    %c0 = arith.constant 0 : index
    %c0_0 = arith.constant 0 : index
    %0 = vector.load %arg1[%c0, %c0_0] : memref<2x1536xbf16, #tpu.memory_space<vmem>>, vector<2x1536xbf16>
    %c0_1 = arith.constant 0 : index
    %c0_2 = arith.constant 0 : index
    %1 = vector.load %arg2[%c0_1, %c0_2] : memref<1536x640xbf16, #tpu.memory_space<vmem>>, vector<1536x640xbf16>
    %cst = arith.constant dense<0.000000e+00> : vector<2x640xf32>
    %2 = tpu.matmul %0, %1, %cst {dimension_numbers = #tpu.dot_dimension_numbers<[1], [0], [0], [1], [0, 0, 1, 1], [], []>} : vector<2x1536xbf16>, vector<1536x640xbf16>, vector<2x640xf32> -> vector<2x640xf32>
    %c0_3 = arith.constant 0 : index
    %c0_4 = arith.constant 0 : index
    %3 = vector.load %arg3[%c0_3, %c0_4] : memref<1x640xf32, #tpu.memory_space<vmem>>, vector<1x640xf32>
    %4 = vector.broadcast %3 : vector<1x640xf32> to vector<2x640xf32>
    %5 = arith.addf %2, %4 : vector<2x640xf32>
    %cst_5 = arith.constant 0.000000e+00 : f32
    %6 = vector.broadcast %cst_5 : f32 to vector<2x640xf32>
    %7 = arith.maximumf %5, %6 : vector<2x640xf32>
    %8 = vector.extract_strided_slice %7 {offsets = [0, 0], sizes = [2, 512], strides = [1, 1]} : vector<2x640xf32> to vector<2x512xf32>
    %9 = arith.truncf %8 : vector<2x512xf32> to vector<2x512xbf16>
    %10 = vector.extract_strided_slice %7 {offsets = [0, 512], sizes = [2, 128], strides = [1, 1]} : vector<2x640xf32> to vector<2x128xf32>
    %11 = arith.truncf %10 : vector<2x128xf32> to vector<2x128xbf16>
    %c0_6 = arith.constant 0 : index
    %c0_7 = arith.constant 0 : index
    %12 = vector.load %arg4[%c0_6, %c0_7] : memref<512x256xbf16, #tpu.memory_space<vmem>>, vector<512x256xbf16>
    %cst_8 = arith.constant dense<0.000000e+00> : vector<2x256xf32>
    %13 = tpu.matmul %9, %12, %cst_8 {dimension_numbers = #tpu.dot_dimension_numbers<[1], [0], [0], [1], [0, 0, 1, 1], [], []>} : vector<2x512xbf16>, vector<512x256xbf16>, vector<2x256xf32> -> vector<2x256xf32>
    %c0_9 = arith.constant 0 : index
    %c0_10 = arith.constant 0 : index
    %14 = vector.load %arg5[%c0_9, %c0_10] : memref<1x256xf32, #tpu.memory_space<vmem>>, vector<1x256xf32>
    %15 = vector.broadcast %14 : vector<1x256xf32> to vector<2x256xf32>
    %16 = arith.addf %13, %15 : vector<2x256xf32>
    %cst_11 = arith.constant 0.000000e+00 : f32
    %17 = vector.broadcast %cst_11 : f32 to vector<2x256xf32>
    %18 = arith.maximumf %16, %17 : vector<2x256xf32>
    %19 = arith.truncf %18 : vector<2x256xf32> to vector<2x256xbf16>
    %20 = tpu.concatenate %19, %11 in 1 : vector<2x256xbf16>, vector<2x128xbf16> -> vector<2x384xbf16>
    %c0_12 = arith.constant 0 : index
    %c0_13 = arith.constant 0 : index
    %21 = vector.load %arg6[%c0_12, %c0_13] : memref<384x128xbf16, #tpu.memory_space<vmem>>, vector<384x128xbf16>
    %cst_14 = arith.constant dense<0.000000e+00> : vector<2x128xf32>
    %22 = tpu.matmul %20, %21, %cst_14 {dimension_numbers = #tpu.dot_dimension_numbers<[1], [0], [0], [1], [0, 0, 1, 1], [], []>} : vector<2x384xbf16>, vector<384x128xbf16>, vector<2x128xf32> -> vector<2x128xf32>
    %c0_15 = arith.constant 0 : index
    %c0_16 = arith.constant 0 : index
    %23 = vector.load %arg7[%c0_15, %c0_16] : memref<1x128xf32, #tpu.memory_space<vmem>>, vector<1x128xf32>
    %24 = vector.broadcast %23 : vector<1x128xf32> to vector<2x128xf32>
    %25 = arith.addf %22, %24 : vector<2x128xf32>
    %c0_17 = arith.constant 0 : index
    %c0_18 = arith.constant 0 : index
    %26 = vector.load %arg8[%c0_17, %c0_18] : memref<2x128xf32, #tpu.memory_space<vmem>>, vector<2x128xf32>
    tpu.vector_store %arg8[%c0_17, %c0_18], %25 {strides = array<i32>} : memref<2x128xf32, #tpu.memory_space<vmem>>, vector<2x128xf32>,
    return
  }
  func.func @transform_0(%arg0: i32) -> (i32, i32) {
    %c0_i32 = arith.constant 0 : i32
    %c0_i32_0 = arith.constant 0 : i32
    return %arg0, %c0_i32 : i32, i32
  }
  func.func @transform_1(%arg0: i32) -> (i32, i32) {
    %c0_i32 = arith.constant 0 : i32
    %c0_i32_0 = arith.constant 0 : i32
    %c0_i32_1 = arith.constant 0 : i32
    return %c0_i32, %c0_i32_0 : i32, i32
  }
  func.func @transform_2(%arg0: i32) -> (i32, i32) {
    %c0_i32 = arith.constant 0 : i32
    %c0_i32_0 = arith.constant 0 : i32
    %c0_i32_1 = arith.constant 0 : i32
    return %c0_i32, %c0_i32_0 : i32, i32
  }
  func.func @transform_3(%arg0: i32) -> (i32, i32) {
    %c0_i32 = arith.constant 0 : i32
    %c0_i32_0 = arith.constant 0 : i32
    %c0_i32_1 = arith.constant 0 : i32
    return %c0_i32, %c0_i32_0 : i32, i32
  }
  func.func @transform_4(%arg0: i32) -> (i32, i32) {
    %c0_i32 = arith.constant 0 : i32
    %c0_i32_0 = arith.constant 0 : i32
    %c0_i32_1 = arith.constant 0 : i32
    return %c0_i32, %c0_i32_0 : i32, i32
  }
  func.func @transform_5(%arg0: i32) -> (i32, i32) {
    %c0_i32 = arith.constant 0 : i32
    %c0_i32_0 = arith.constant 0 : i32
    %c0_i32_1 = arith.constant 0 : i32
    return %c0_i32, %c0_i32_0 : i32, i32
  }
  func.func @transform_6(%arg0: i32) -> (i32, i32) {
    %c0_i32 = arith.constant 0 : i32
    %c0_i32_0 = arith.constant 0 : i32
    %c0_i32_1 = arith.constant 0 : i32
    return %c0_i32, %c0_i32_0 : i32, i32
  }
  func.func @transform_7(%arg0: i32) -> (i32, i32) {
    %c0_i32 = arith.constant 0 : i32
    %c0_i32_0 = arith.constant 0 : i32
    return %arg0, %c0_i32 : i32, i32
  }
}

</mosaic_0001>

<llo_original>
// kernel: tpu_custom_call.1
$region0: #{tpu_custom_call.1}
  #allocation0 [shape = 'u32[]', space=smem, size = 0x4, offset = 0x4, fixed_abs, tag = 'smem constant byte address 0x4 - core index']
  #allocation1 [shape = 'u32[144,128]{1,0:T(1,128)}', space=vmem, size = 0x12000, scoped, tag = 'internal scratch']
  %s0 = inlined_call_operand.hbm [shape: bf16[2,1536], index: 0, kind: input, shape index: {}]
  %s1 = inlined_call_operand.hbm [shape: bf16[1536,640], index: 1, kind: input, shape index: {}]
  %s2 = inlined_call_operand.hbm [shape: f32[1,640], index: 2, kind: input, shape index: {}]
  %s3 = inlined_call_operand.hbm [shape: bf16[512,256], index: 3, kind: input, shape index: {}]
  %s4 = inlined_call_operand.hbm [shape: f32[1,256], index: 4, kind: input, shape index: {}]
  %s5 = inlined_call_operand.hbm [shape: bf16[384,128], index: 5, kind: input, shape index: {}]
  %s6 = inlined_call_operand.hbm [shape: f32[1,128], index: 6, kind: input, shape index: {}]
  %s7 = inlined_call_operand.hbm [shape: f32[2,128], index: 7, kind: output, shape index: {}]
  %s8 = sld [smem:[#allocation0]]
  $region66: #{tpu_custom_call.1} parent=0
    _
  %s10 = ssub.s32 1, %s8
  %s11 = scalar_select 0, %s10, %s8
  $region1: #{tpu_custom_call.1} parent=0
    #allocation2 [shape = 'u8[6144]{0}', space=vmem, size = 0x1800, scoped, tag = 'input window, operand 0, single buffered']
    #allocation3 [shape = 's32[1]{0}', space=sflag, size = 0x4, scoped, tag = 'scoped memory for tpu_custom_call.1']
    #allocation4 [shape = 's32[1]{0}', space=sflag, size = 0x4, scoped, tag = 'scoped memory for tpu_custom_call.1']
    #allocation5 [shape = 'u8[1966080]{0}', space=vmem, size = 0x1e0000, scoped, tag = 'input window, operand 1, single buffered']
    #allocation6 [shape = 's32[1]{0}', space=sflag, size = 0x4, scoped, tag = 'scoped memory for tpu_custom_call.1']
    #allocation7 [shape = 'u8[2560]{0}', space=vmem, size = 0xc00, scoped, tag = 'input window, operand 2, single buffered']
    #allocation8 [shape = 'u8[262144]{0}', space=vmem, size = 0x40000, scoped, tag = 'input window, operand 3, single buffered']
    #allocation9 [shape = 's32[1]{0}', space=sflag, size = 0x4, scoped, tag = 'scoped memory for tpu_custom_call.1']
    #allocation10 [shape = 'u8[1024]{0}', space=vmem, size = 0x400, scoped, tag = 'input window, operand 4, single buffered']
    #allocation11 [shape = 'u8[98304]{0}', space=vmem, size = 0x18000, scoped, tag = 'input window, operand 5, single buffered']
    #allocation12 [shape = 's32[1]{0}', space=sflag, size = 0x4, scoped, tag = 'scoped memory for tpu_custom_call.1']
    #allocation13 [shape = 'u8[512]{0}', space=vmem, size = 0x400, scoped, tag = 'input window, operand 6, single buffered']
    #allocation14 [shape = 'u8[1024]{0}', space=vmem, size = 0x400, scoped, tag = 'output window, operand 0, single buffered']
    %12 = vsyncpa [#allocation3], 0
    %13 = vsyncpa [#allocation6], 0
    %14 = vsyncpa [#allocation9], 0
    %15 = vsyncpa [#allocation12], 0
    %16 = vsyncpa [#allocation4], 0
    // Predicated region
    $region2: #{tpu_custom_call.1} parent=1 // pred_check
      _
    $region3: #{tpu_custom_call.1} parent=1 // pred_check_branch
      %18 = sbr.rel (0) target = $region5
    $region4: #{tpu_custom_call.1} parent=1 // pred_region
      %s20 = ssub.s32 192, 192
      %21 = vsyncadd [#allocation3], %s20
      %s23 = sshll.u32 [#allocation2], 4
      %s24 = int_to_ptr.vmem [resolvable:$true] %s23
      %26 = dma.hbm_to_vmem [thread:$0]  %s0, 192, %s24, [#allocation3]
    $region5: #{tpu_custom_call.1} parent=1 // pred_fallthru
      _
    // Predicated region
    $region6: #{tpu_custom_call.1} parent=1 // pred_check
      _
    $region7: #{tpu_custom_call.1} parent=1 // pred_check_branch
      %28 = sbr.rel (0) target = $region9
    $region8: #{tpu_custom_call.1} parent=1 // pred_region
      %s30 = ssub.s32 61440, 61440
      %31 = vsyncadd [#allocation6], %s30
      %s32 = sshll.u32 [#allocation5], 4
      %s33 = int_to_ptr.vmem [resolvable:$true] %s32
      %38 = dma.hbm_to_vmem [thread:$0]  %s1, 61440, %s33, [#allocation6], 320, 320, 20
    $region9: #{tpu_custom_call.1} parent=1 // pred_fallthru
      _
    // Predicated region
    $region10: #{tpu_custom_call.1} parent=1 // pred_check
      _
    $region11: #{tpu_custom_call.1} parent=1 // pred_check_branch
      %40 = sbr.rel (0) target = $region13
    $region12: #{tpu_custom_call.1} parent=1 // pred_region
      %s42 = ssub.s32 80, 80
      %43 = vsyncadd [#allocation6], %s42
      %s45 = sshll.u32 [#allocation7], 4
      %s46 = int_to_ptr.vmem [resolvable:$true] %s45
      %48 = dma.hbm_to_vmem [thread:$0]  %s2, 80, %s46, [#allocation6]
    $region13: #{tpu_custom_call.1} parent=1 // pred_fallthru
      _
    // Predicated region
    $region14: #{tpu_custom_call.1} parent=1 // pred_check
      _
    $region15: #{tpu_custom_call.1} parent=1 // pred_check_branch
      %50 = sbr.rel (0) target = $region17
    $region16: #{tpu_custom_call.1} parent=1 // pred_region
      %s52 = ssub.s32 8192, 8192
      %53 = vsyncadd [#allocation9], %s52
      %s54 = sshll.u32 [#allocation8], 4
      %s55 = int_to_ptr.vmem [resolvable:$true] %s54
      %60 = dma.hbm_to_vmem [thread:$0]  %s3, 8192, %s55, [#allocation9], 128, 128, 8
    $region17: #{tpu_custom_call.1} parent=1 // pred_fallthru
      _
    // Predicated region
    $region18: #{tpu_custom_call.1} parent=1 // pred_check
      _
    $region19: #{tpu_custom_call.1} parent=1 // pred_check_branch
      %62 = sbr.rel (0) target = $region21
    $region20: #{tpu_custom_call.1} parent=1 // pred_region
      %s64 = ssub.s32 32, 32
      %65 = vsyncadd [#allocation9], %s64
      %s67 = sshll.u32 [#allocation10], 4
      %s68 = int_to_ptr.vmem [resolvable:$true] %s67
      %70 = dma.hbm_to_vmem [thread:$0]  %s4, 32, %s68, [#allocation9]
    $region21: #{tpu_custom_call.1} parent=1 // pred_fallthru
      _
    // Predicated region
    $region22: #{tpu_custom_call.1} parent=1 // pred_check
      _
    $region23: #{tpu_custom_call.1} parent=1 // pred_check_branch
      %72 = sbr.rel (0) target = $region25
    $region24: #{tpu_custom_call.1} parent=1 // pred_region
      %s74 = ssub.s32 3072, 3072
      %75 = vsyncadd [#allocation12], %s74
      %s76 = sshll.u32 [#allocation11], 4
      %s77 = int_to_ptr.vmem [resolvable:$true] %s76
      %82 = dma.hbm_to_vmem [thread:$0]  %s5, 3072, %s77, [#allocation12], 64, 64, 4
    $region25: #{tpu_custom_call.1} parent=1 // pred_fallthru
      _
    // Predicated region
    $region26: #{tpu_custom_call.1} parent=1 // pred_check
      _
    $region27: #{tpu_custom_call.1} parent=1 // pred_check_branch
      %84 = sbr.rel (0) target = $region29
    $region28: #{tpu_custom_call.1} parent=1 // pred_region
      %s86 = ssub.s32 16, 16
      %87 = vsyncadd [#allocation12], %s86
      %s89 = sshll.u32 [#allocation13], 4
      %s90 = int_to_ptr.vmem [resolvable:$true] %s89
      %92 = dma.hbm_to_vmem [thread:$0]  %s6, 16, %s90, [#allocation12]
    $region29: #{tpu_custom_call.1} parent=1 // pred_fallthru
      _
    // Predicated region
    $region30: #{tpu_custom_call.1} parent=1 // pred_check
      _
    $region31: #{tpu_custom_call.1} parent=1 // pred_check_branch
      %94 = sbr.rel (0) target = $region33
    $region32: #{tpu_custom_call.1} parent=1 // pred_region
      %95 = dma.done [#allocation3], 192
    $region33: #{tpu_custom_call.1} parent=1 // pred_fallthru
      _
    // Predicated region
    $region34: #{tpu_custom_call.1} parent=1 // pred_check
      _
    $region35: #{tpu_custom_call.1} parent=1 // pred_check_branch
      %97 = sbr.rel (0) target = $region37
    $region36: #{tpu_custom_call.1} parent=1 // pred_region
      %98 = dma.done [#allocation6], 61440
    $region37: #{tpu_custom_call.1} parent=1 // pred_fallthru
      _
    // Predicated region
    $region38: #{tpu_custom_call.1} parent=1 // pred_check
      _
    $region39: #{tpu_custom_call.1} parent=1 // pred_check_branch
      %100 = sbr.rel (0) target = $region41
    $region40: #{tpu_custom_call.1} parent=1 // pred_region
      %101 = dma.done [#allocation6], 80
    $region41: #{tpu_custom_call.1} parent=1 // pred_fallthru
      _
    // Predicated region
    $region42: #{tpu_custom_call.1} parent=1 // pred_check
      _
    $region43: #{tpu_custom_call.1} parent=1 // pred_check_branch
      %103 = sbr.rel (0) target = $region45
    $region44: #{tpu_custom_call.1} parent=1 // pred_region
      %104 = dma.done [#allocation9], 8192
    $region45: #{tpu_custom_call.1} parent=1 // pred_fallthru
      _
    // Predicated region
    $region46: #{tpu_custom_call.1} parent=1 // pred_check
      _
    $region47: #{tpu_custom_call.1} parent=1 // pred_check_branch
      %106 = sbr.rel (0) target = $region49
    $region48: #{tpu_custom_call.1} parent=1 // pred_region
      %107 = dma.done [#allocation9], 32
    $region49: #{tpu_custom_call.1} parent=1 // pred_fallthru
      _
    // Predicated region
    $region50: #{tpu_custom_call.1} parent=1 // pred_check
      _
    $region51: #{tpu_custom_call.1} parent=1 // pred_check_branch
      %109 = sbr.rel (0) target = $region53
    $region52: #{tpu_custom_call.1} parent=1 // pred_region
      %110 = dma.done [#allocation12], 3072
    $region53: #{tpu_custom_call.1} parent=1 // pred_fallthru
      _
    // Predicated region
    $region54: #{tpu_custom_call.1} parent=1 // pred_check
      _
    $region55: #{tpu_custom_call.1} parent=1 // pred_check_branch
      %112 = sbr.rel (0) target = $region57
    $region56: #{tpu_custom_call.1} parent=1 // pred_region
      %113 = dma.done [#allocation12], 16
    $region57: #{tpu_custom_call.1} parent=1 // pred_fallthru
      _
    %v115 = vld [vmem:[#allocation2] sm:$0xff]
    %v116 = vld [vmem:[#allocation2 + $0x8] sm:$0xf]
    %v117 = vld [vmem:[#allocation5] sm:$0xff]
    %v118 = vld [vmem:[#allocation5 + $0x8] sm:$0xff]
    %v119 = vld [vmem:[#allocation5 + $0x10] sm:$0xf]
    %v120 = vld [vmem:[#allocation5 + $0x14] sm:$0xff]
    %v121 = vld [vmem:[#allocation5 + $0x1c] sm:$0xff]
    %v122 = vld [vmem:[#allocation5 + $0x24] sm:$0xf]
    %v123 = vld [vmem:[#allocation5 + $0x28] sm:$0xff]
    %v124 = vld [vmem:[#allocation5 + $0x30] sm:$0xff]
    %v125 = vld [vmem:[#allocation5 + $0x38] sm:$0xf]
    %v126 = vld [vmem:[#allocation5 + $0x3c] sm:$0xff]
    %v127 = vld [vmem:[#allocation5 + $0x44] sm:$0xff]
    %v128 = vld [vmem:[#allocation5 + $0x4c] sm:$0xf]
    %v129 = vld [vmem:[#allocation5 + $0x50] sm:$0xff]
    %v130 = vld [vmem:[#allocation5 + $0x58] sm:$0xff]
    %v131 = vld [vmem:[#allocation5 + $0x60] sm:$0xf]
    %v132 = vld [vmem:[#allocation5 + $0x64] sm:$0xff]
    %v133 = vld [vmem:[#allocation5 + $0x6c] sm:$0xff]
    %v134 = vld [vmem:[#allocation5 + $0x74] sm:$0xf]
    %v135 = vld [vmem:[#allocation5 + $0x78] sm:$0xff]
    %v136 = vld [vmem:[#allocation5 + $0x80] sm:$0xff]
    %v137 = vld [vmem:[#allocation5 + $0x88] sm:$0xf]
    %v138 = vld [vmem:[#allocation5 + $0x8c] sm:$0xff]
    %v139 = vld [vmem:[#allocation5 + $0x94] sm:$0xff]
    %v140 = vld [vmem:[#allocation5 + $0x9c] sm:$0xf]
    %v141 = vld [vmem:[#allocation5 + $0xa0] sm:$0xff]
    %v142 = vld [vmem:[#allocation5 + $0xa8] sm:$0xff]
    %v143 = vld [vmem:[#allocation5 + $0xb0] sm:$0xf]
    %v144 = vld [vmem:[#allocation5 + $0xb4] sm:$0xff]
    %v145 = vld [vmem:[#allocation5 + $0xbc] sm:$0xff]
    %v146 = vld [vmem:[#allocation5 + $0xc4] sm:$0xf]
    %v147 = vld [vmem:[#allocation5 + $0xc8] sm:$0xff]
    %v148 = vld [vmem:[#allocation5 + $0xd0] sm:$0xff]
    %v149 = vld [vmem:[#allocation5 + $0xd8] sm:$0xf]
    %v150 = vld [vmem:[#allocation5 + $0xdc] sm:$0xff]
    %v151 = vld [vmem:[#allocation5 + $0xe4] sm:$0xff]
    %v152 = vld [vmem:[#allocation5 + $0xec] sm:$0xf]
    %v153 = vld [vmem:[#allocation5 + $0xf0] sm:$0xff]
    %v154 = vld [vmem:[#allocation5 + $0xf8] sm:$0xff]
    %v155 = vld [vmem:[#allocation5 + $0x100] sm:$0xf]
    %v156 = vld [vmem:[#allocation5 + $0x104] sm:$0xff]
    %v157 = vld [vmem:[#allocation5 + $0x10c] sm:$0xff]
    %v158 = vld [vmem:[#allocation5 + $0x114] sm:$0xf]
    %v159 = vld [vmem:[#allocation5 + $0x118] sm:$0xff]
    %v160 = vld [vmem:[#allocation5 + $0x120] sm:$0xff]
    %v161 = vld [vmem:[#allocation5 + $0x128] sm:$0xf]
    %v162 = vld [vmem:[#allocation5 + $0x12c] sm:$0xff]
    %v163 = vld [vmem:[#allocation5 + $0x134] sm:$0xff]
    %v164 = vld [vmem:[#allocation5 + $0x13c] sm:$0xf]
    %v165 = vld [vmem:[#allocation5 + $0x140] sm:$0xff]
    %v166 = vld [vmem:[#allocation5 + $0x148] sm:$0xff]
    %v167 = vld [vmem:[#allocation5 + $0x150] sm:$0xf]
    %v168 = vld [vmem:[#allocation5 + $0x154] sm:$0xff]
    %v169 = vld [vmem:[#allocation5 + $0x15c] sm:$0xff]
    %v170 = vld [vmem:[#allocation5 + $0x164] sm:$0xf]
    %v171 = vld [vmem:[#allocation5 + $0x168] sm:$0xff]
    %v172 = vld [vmem:[#allocation5 + $0x170] sm:$0xff]
    %v173 = vld [vmem:[#allocation5 + $0x178] sm:$0xf]
    %v174 = vld [vmem:[#allocation5 + $0x17c] sm:$0xff]
    %v175 = vld [vmem:[#allocation5 + $0x184] sm:$0xff]
    %v176 = vld [vmem:[#allocation5 + $0x18c] sm:$0xf]
    %v177 = vld [vmem:[#allocation5 + $0x190] sm:$0xff]
    %v178 = vld [vmem:[#allocation5 + $0x198] sm:$0xff]
    %v179 = vld [vmem:[#allocation5 + $0x1a0] sm:$0xf]
    %v180 = vld [vmem:[#allocation5 + $0x1a4] sm:$0xff]
    %v181 = vld [vmem:[#allocation5 + $0x1ac] sm:$0xff]
    %v182 = vld [vmem:[#allocation5 + $0x1b4] sm:$0xf]
    %v183 = vld [vmem:[#allocation5 + $0x1b8] sm:$0xff]
    %v184 = vld [vmem:[#allocation5 + $0x1c0] sm:$0xff]
    %v185 = vld [vmem:[#allocation5 + $0x1c8] sm:$0xf]
    %v186 = vld [vmem:[#allocation5 + $0x1cc] sm:$0xff]
    %v187 = vld [vmem:[#allocation5 + $0x1d4] sm:$0xff]
    %v188 = vld [vmem:[#allocation5 + $0x1dc] sm:$0xf]
    %v189 = vld [vmem:[#allocation5 + $0x1e0] sm:$0xff]
    %v190 = vld [vmem:[#allocation5 + $0x1e8] sm:$0xff]
    %v191 = vld [vmem:[#allocation5 + $0x1f0] sm:$0xf]
    %v192 = vld [vmem:[#allocation5 + $0x1f4] sm:$0xff]
    %v193 = vld [vmem:[#allocation5 + $0x1fc] sm:$0xff]
    %v194 = vld [vmem:[#allocation5 + $0x204] sm:$0xf]
    %v195 = vld [vmem:[#allocation5 + $0x208] sm:$0xff]
    %v196 = vld [vmem:[#allocation5 + $0x210] sm:$0xff]
    %v197 = vld [vmem:[#allocation5 + $0x218] sm:$0xf]
    %v198 = vld [vmem:[#allocation5 + $0x21c] sm:$0xff]
    %v199 = vld [vmem:[#allocation5 + $0x224] sm:$0xff]
    %v200 = vld [vmem:[#allocation5 + $0x22c] sm:$0xf]
    %v201 = vld [vmem:[#allocation5 + $0x230] sm:$0xff]
    %v202 = vld [vmem:[#allocation5 + $0x238] sm:$0xff]
    %v203 = vld [vmem:[#allocation5 + $0x240] sm:$0xf]
    %v204 = vld [vmem:[#allocation5 + $0x244] sm:$0xff]
    %v205 = vld [vmem:[#allocation5 + $0x24c] sm:$0xff]
    %v206 = vld [vmem:[#allocation5 + $0x254] sm:$0xf]
    %v207 = vld [vmem:[#allocation5 + $0x258] sm:$0xff]
    %v208 = vld [vmem:[#allocation5 + $0x260] sm:$0xff]
    %v209 = vld [vmem:[#allocation5 + $0x268] sm:$0xf]
    %v210 = vld [vmem:[#allocation5 + $0x26c] sm:$0xff]
    %v211 = vld [vmem:[#allocation5 + $0x274] sm:$0xff]
    %v212 = vld [vmem:[#allocation5 + $0x27c] sm:$0xf]
    %v213 = vld [vmem:[#allocation5 + $0x280] sm:$0xff]
    %v214 = vld [vmem:[#allocation5 + $0x288] sm:$0xff]
    %v215 = vld [vmem:[#allocation5 + $0x290] sm:$0xf]
    %v216 = vld [vmem:[#allocation5 + $0x294] sm:$0xff]
    %v217 = vld [vmem:[#allocation5 + $0x29c] sm:$0xff]
    %v218 = vld [vmem:[#allocation5 + $0x2a4] sm:$0xf]
    %v219 = vld [vmem:[#allocation5 + $0x2a8] sm:$0xff]
    %v220 = vld [vmem:[#allocation5 + $0x2b0] sm:$0xff]
    %v221 = vld [vmem:[#allocation5 + $0x2b8] sm:$0xf]
    %v222 = vld [vmem:[#allocation5 + $0x2bc] sm:$0xff]
    %v223 = vld [vmem:[#allocation5 + $0x2c4] sm:$0xff]
    %v224 = vld [vmem:[#allocation5 + $0x2cc] sm:$0xf]
    %v225 = vld [vmem:[#allocation5 + $0x2d0] sm:$0xff]
    %v226 = vld [vmem:[#allocation5 + $0x2d8] sm:$0xff]
    %v227 = vld [vmem:[#allocation5 + $0x2e0] sm:$0xf]
    %v228 = vld [vmem:[#allocation5 + $0x2e4] sm:$0xff]
    %v229 = vld [vmem:[#allocation5 + $0x2ec] sm:$0xff]
    %v230 = vld [vmem:[#allocation5 + $0x2f4] sm:$0xf]
    %v231 = vld [vmem:[#allocation5 + $0x2f8] sm:$0xff]
    %v232 = vld [vmem:[#allocation5 + $0x300] sm:$0xff]
    %v233 = vld [vmem:[#allocation5 + $0x308] sm:$0xf]
    %v234 = vld [vmem:[#allocation5 + $0x30c] sm:$0xff]
    %v235 = vld [vmem:[#allocation5 + $0x314] sm:$0xff]
    %v236 = vld [vmem:[#allocation5 + $0x31c] sm:$0xf]
    %v237 = vld [vmem:[#allocation5 + $0x320] sm:$0xff]
    %v238 = vld [vmem:[#allocation5 + $0x328] sm:$0xff]
    %v239 = vld [vmem:[#allocation5 + $0x330] sm:$0xf]
    %v240 = vld [vmem:[#allocation5 + $0x334] sm:$0xff]
    %v241 = vld [vmem:[#allocation5 + $0x33c] sm:$0xff]
    %v242 = vld [vmem:[#allocation5 + $0x344] sm:$0xf]
    %v243 = vld [vmem:[#allocation5 + $0x348] sm:$0xff]
    %v244 = vld [vmem:[#allocation5 + $0x350] sm:$0xff]
    %v245 = vld [vmem:[#allocation5 + $0x358] sm:$0xf]
    %v246 = vld [vmem:[#allocation5 + $0x35c] sm:$0xff]
    %v247 = vld [vmem:[#allocation5 + $0x364] sm:$0xff]
    %v248 = vld [vmem:[#allocation5 + $0x36c] sm:$0xf]
    %v249 = vld [vmem:[#allocation5 + $0x370] sm:$0xff]
    %v250 = vld [vmem:[#allocation5 + $0x378] sm:$0xff]
    %v251 = vld [vmem:[#allocation5 + $0x380] sm:$0xf]
    %v252 = vld [vmem:[#allocation5 + $0x384] sm:$0xff]
    %v253 = vld [vmem:[#allocation5 + $0x38c] sm:$0xff]
    %v254 = vld [vmem:[#allocation5 + $0x394] sm:$0xf]
    %v255 = vld [vmem:[#allocation5 + $0x398] sm:$0xff]
    %v256 = vld [vmem:[#allocation5 + $0x3a0] sm:$0xff]
    %v257 = vld [vmem:[#allocation5 + $0x3a8] sm:$0xf]
    %v258 = vld [vmem:[#allocation5 + $0x3ac] sm:$0xff]
    %v259 = vld [vmem:[#allocation5 + $0x3b4] sm:$0xff]
    %v260 = vld [vmem:[#allocation5 + $0x3bc] sm:$0xf]
    %v261 = vld [vmem:[#allocation5 + $0x3c0] sm:$0xff]
    %v262 = vld [vmem:[#allocation5 + $0x3c8] sm:$0xff]
    %v263 = vld [vmem:[#allocation5 + $0x3d0] sm:$0xf]
    %v264 = vld [vmem:[#allocation5 + $0x3d4] sm:$0xff]
    %v265 = vld [vmem:[#allocation5 + $0x3dc] sm:$0xff]
    %v266 = vld [vmem:[#allocation5 + $0x3e4] sm:$0xf]
    %v267 = vld [vmem:[#allocation5 + $0x3e8] sm:$0xff]
    %v268 = vld [vmem:[#allocation5 + $0x3f0] sm:$0xff]
    %v269 = vld [vmem:[#allocation5 + $0x3f8] sm:$0xf]
    %v270 = vld [vmem:[#allocation5 + $0x3fc] sm:$0xff]
    %v271 = vld [vmem:[#allocation5 + $0x404] sm:$0xff]
    %v272 = vld [vmem:[#allocation5 + $0x40c] sm:$0xf]
    %v273 = vld [vmem:[#allocation5 + $0x410] sm:$0xff]
    %v274 = vld [vmem:[#allocation5 + $0x418] sm:$0xff]
    %v275 = vld [vmem:[#allocation5 + $0x420] sm:$0xf]
    %v276 = vld [vmem:[#allocation5 + $0x424] sm:$0xff]
    %v277 = vld [vmem:[#allocation5 + $0x42c] sm:$0xff]
    %v278 = vld [vmem:[#allocation5 + $0x434] sm:$0xf]
    %v279 = vld [vmem:[#allocation5 + $0x438] sm:$0xff]
    %v280 = vld [vmem:[#allocation5 + $0x440] sm:$0xff]
    %v281 = vld [vmem:[#allocation5 + $0x448] sm:$0xf]
    %v282 = vld [vmem:[#allocation5 + $0x44c] sm:$0xff]
    %v283 = vld [vmem:[#allocation5 + $0x454] sm:$0xff]
    %v284 = vld [vmem:[#allocation5 + $0x45c] sm:$0xf]
    %v285 = vld [vmem:[#allocation5 + $0x460] sm:$0xff]
    %v286 = vld [vmem:[#allocation5 + $0x468] sm:$0xff]
    %v287 = vld [vmem:[#allocation5 + $0x470] sm:$0xf]
    %v288 = vld [vmem:[#allocation5 + $0x474] sm:$0xff]
    %v289 = vld [vmem:[#allocation5 + $0x47c] sm:$0xff]
    %v290 = vld [vmem:[#allocation5 + $0x484] sm:$0xf]
    %v291 = vld [vmem:[#allocation5 + $0x488] sm:$0xff]
    %v292 = vld [vmem:[#allocation5 + $0x490] sm:$0xff]
    %v293 = vld [vmem:[#allocation5 + $0x498] sm:$0xf]
    %v294 = vld [vmem:[#allocation5 + $0x49c] sm:$0xff]
    %v295 = vld [vmem:[#allocation5 + $0x4a4] sm:$0xff]
    %v296 = vld [vmem:[#allocation5 + $0x4ac] sm:$0xf]
    %v297 = vld [vmem:[#allocation5 + $0x4b0] sm:$0xff]
    %v298 = vld [vmem:[#allocation5 + $0x4b8] sm:$0xff]
    %v299 = vld [vmem:[#allocation5 + $0x4c0] sm:$0xf]
    %v300 = vld [vmem:[#allocation5 + $0x4c4] sm:$0xff]
    %v301 = vld [vmem:[#allocation5 + $0x4cc] sm:$0xff]
    %v302 = vld [vmem:[#allocation5 + $0x4d4] sm:$0xf]
    %v303 = vld [vmem:[#allocation5 + $0x4d8] sm:$0xff]
    %v304 = vld [vmem:[#allocation5 + $0x4e0] sm:$0xff]
    %v305 = vld [vmem:[#allocation5 + $0x4e8] sm:$0xf]
    %v306 = vld [vmem:[#allocation5 + $0x4ec] sm:$0xff]
    %v307 = vld [vmem:[#allocation5 + $0x4f4] sm:$0xff]
    %v308 = vld [vmem:[#allocation5 + $0x4fc] sm:$0xf]
    %v309 = vld [vmem:[#allocation5 + $0x500] sm:$0xff]
    %v310 = vld [vmem:[#allocation5 + $0x508] sm:$0xff]
    %v311 = vld [vmem:[#allocation5 + $0x510] sm:$0xf]
    %v312 = vld [vmem:[#allocation5 + $0x514] sm:$0xff]
    %v313 = vld [vmem:[#allocation5 + $0x51c] sm:$0xff]
    %v314 = vld [vmem:[#allocation5 + $0x524] sm:$0xf]
    %v315 = vld [vmem:[#allocation5 + $0x528] sm:$0xff]
    %v316 = vld [vmem:[#allocation5 + $0x530] sm:$0xff]
    %v317 = vld [vmem:[#allocation5 + $0x538] sm:$0xf]
    %v318 = vld [vmem:[#allocation5 + $0x53c] sm:$0xff]
    %v319 = vld [vmem:[#allocation5 + $0x544] sm:$0xff]
    %v320 = vld [vmem:[#allocation5 + $0x54c] sm:$0xf]
    %v321 = vld [vmem:[#allocation5 + $0x550] sm:$0xff]
    %v322 = vld [vmem:[#allocation5 + $0x558] sm:$0xff]
    %v323 = vld [vmem:[#allocation5 + $0x560] sm:$0xf]
    %v324 = vld [vmem:[#allocation5 + $0x564] sm:$0xff]
    %v325 = vld [vmem:[#allocation5 + $0x56c] sm:$0xff]
    %v326 = vld [vmem:[#allocation5 + $0x574] sm:$0xf]
    %v327 = vld [vmem:[#allocation5 + $0x578] sm:$0xff]
    %v328 = vld [vmem:[#allocation5 + $0x580] sm:$0xff]
    %v329 = vld [vmem:[#allocation5 + $0x588] sm:$0xf]
    %v330 = vld [vmem:[#allocation5 + $0x58c] sm:$0xff]
    %v331 = vld [vmem:[#allocation5 + $0x594] sm:$0xff]
    %v332 = vld [vmem:[#allocation5 + $0x59c] sm:$0xf]
    %v333 = vld [vmem:[#allocation5 + $0x5a0] sm:$0xff]
    %v334 = vld [vmem:[#allocation5 + $0x5a8] sm:$0xff]
    %v335 = vld [vmem:[#allocation5 + $0x5b0] sm:$0xf]
    %v336 = vld [vmem:[#allocation5 + $0x5b4] sm:$0xff]
    %v337 = vld [vmem:[#allocation5 + $0x5bc] sm:$0xff]
    %v338 = vld [vmem:[#allocation5 + $0x5c4] sm:$0xf]
    %v339 = vld [vmem:[#allocation5 + $0x5c8] sm:$0xff]
    %v340 = vld [vmem:[#allocation5 + $0x5d0] sm:$0xff]
    %v341 = vld [vmem:[#allocation5 + $0x5d8] sm:$0xf]
    %v342 = vld [vmem:[#allocation5 + $0x5dc] sm:$0xff]
    %v343 = vld [vmem:[#allocation5 + $0x5e4] sm:$0xff]
    %v344 = vld [vmem:[#allocation5 + $0x5ec] sm:$0xf]
    %v345 = vld [vmem:[#allocation5 + $0x5f0] sm:$0xff]
    %v346 = vld [vmem:[#allocation5 + $0x5f8] sm:$0xff]
    %v347 = vld [vmem:[#allocation5 + $0x600] sm:$0xf]
    %v348 = vld [vmem:[#allocation5 + $0x604] sm:$0xff]
    %v349 = vld [vmem:[#allocation5 + $0x60c] sm:$0xff]
    %v350 = vld [vmem:[#allocation5 + $0x614] sm:$0xf]
    %v351 = vld [vmem:[#allocation5 + $0x618] sm:$0xff]
    %v352 = vld [vmem:[#allocation5 + $0x620] sm:$0xff]
    %v353 = vld [vmem:[#allocation5 + $0x628] sm:$0xf]
    %v354 = vld [vmem:[#allocation5 + $0x62c] sm:$0xff]
    %v355 = vld [vmem:[#allocation5 + $0x634] sm:$0xff]
    %v356 = vld [vmem:[#allocation5 + $0x63c] sm:$0xf]
    %v357 = vld [vmem:[#allocation5 + $0x640] sm:$0xff]
    %v358 = vld [vmem:[#allocation5 + $0x648] sm:$0xff]
    %v359 = vld [vmem:[#allocation5 + $0x650] sm:$0xf]
    %v360 = vld [vmem:[#allocation5 + $0x654] sm:$0xff]
    %v361 = vld [vmem:[#allocation5 + $0x65c] sm:$0xff]
    %v362 = vld [vmem:[#allocation5 + $0x664] sm:$0xf]
    %v363 = vld [vmem:[#allocation5 + $0x668] sm:$0xff]
    %v364 = vld [vmem:[#allocation5 + $0x670] sm:$0xff]
    %v365 = vld [vmem:[#allocation5 + $0x678] sm:$0xf]
    %v366 = vld [vmem:[#allocation5 + $0x67c] sm:$0xff]
    %v367 = vld [vmem:[#allocation5 + $0x684] sm:$0xff]
    %v368 = vld [vmem:[#allocation5 + $0x68c] sm:$0xf]
    %v369 = vld [vmem:[#allocation5 + $0x690] sm:$0xff]
    %v370 = vld [vmem:[#allocation5 + $0x698] sm:$0xff]
    %v371 = vld [vmem:[#allocation5 + $0x6a0] sm:$0xf]
    %v372 = vld [vmem:[#allocation5 + $0x6a4] sm:$0xff]
    %v373 = vld [vmem:[#allocation5 + $0x6ac] sm:$0xff]
    %v374 = vld [vmem:[#allocation5 + $0x6b4] sm:$0xf]
    %v375 = vld [vmem:[#allocation5 + $0x6b8] sm:$0xff]
    %v376 = vld [vmem:[#allocation5 + $0x6c0] sm:$0xff]
    %v377 = vld [vmem:[#allocation5 + $0x6c8] sm:$0xf]
    %v378 = vld [vmem:[#allocation5 + $0x6cc] sm:$0xff]
    %v379 = vld [vmem:[#allocation5 + $0x6d4] sm:$0xff]
    %v380 = vld [vmem:[#allocation5 + $0x6dc] sm:$0xf]
    %v381 = vld [vmem:[#allocation5 + $0x6e0] sm:$0xff]
    %v382 = vld [vmem:[#allocation5 + $0x6e8] sm:$0xff]
    %v383 = vld [vmem:[#allocation5 + $0x6f0] sm:$0xf]
    %v384 = vld [vmem:[#allocation5 + $0x6f4] sm:$0xff]
    %v385 = vld [vmem:[#allocation5 + $0x6fc] sm:$0xff]
    %v386 = vld [vmem:[#allocation5 + $0x704] sm:$0xf]
    %v387 = vld [vmem:[#allocation5 + $0x708] sm:$0xff]
    %v388 = vld [vmem:[#allocation5 + $0x710] sm:$0xff]
    %v389 = vld [vmem:[#allocation5 + $0x718] sm:$0xf]
    %v390 = vld [vmem:[#allocation5 + $0x71c] sm:$0xff]
    %v391 = vld [vmem:[#allocation5 + $0x724] sm:$0xff]
    %v392 = vld [vmem:[#allocation5 + $0x72c] sm:$0xf]
    %v393 = vld [vmem:[#allocation5 + $0x730] sm:$0xff]
    %v394 = vld [vmem:[#allocation5 + $0x738] sm:$0xff]
    %v395 = vld [vmem:[#allocation5 + $0x740] sm:$0xf]
    %v396 = vld [vmem:[#allocation5 + $0x744] sm:$0xff]
    %v397 = vld [vmem:[#allocation5 + $0x74c] sm:$0xff]
    %v398 = vld [vmem:[#allocation5 + $0x754] sm:$0xf]
    %v399 = vld [vmem:[#allocation5 + $0x758] sm:$0xff]
    %v400 = vld [vmem:[#allocation5 + $0x760] sm:$0xff]
    %v401 = vld [vmem:[#allocation5 + $0x768] sm:$0xf]
    %v402 = vld [vmem:[#allocation5 + $0x76c] sm:$0xff]
    %v403 = vld [vmem:[#allocation5 + $0x774] sm:$0xff]
    %v404 = vld [vmem:[#allocation5 + $0x77c] sm:$0xf]
    %v405 = vld [vmem:[#allocation5 + $0x780] sm:$0xff]
    %v406 = vld [vmem:[#allocation5 + $0x788] sm:$0xff]
    %v407 = vld [vmem:[#allocation5 + $0x790] sm:$0xf]
    %v408 = vld [vmem:[#allocation5 + $0x794] sm:$0xff]
    %v409 = vld [vmem:[#allocation5 + $0x79c] sm:$0xff]
    %v410 = vld [vmem:[#allocation5 + $0x7a4] sm:$0xf]
    %v411 = vld [vmem:[#allocation5 + $0x7a8] sm:$0xff]
    %v412 = vld [vmem:[#allocation5 + $0x7b0] sm:$0xff]
    %v413 = vld [vmem:[#allocation5 + $0x7b8] sm:$0xf]
    %v414 = vld [vmem:[#allocation5 + $0x7bc] sm:$0xff]
    %v415 = vld [vmem:[#allocation5 + $0x7c4] sm:$0xff]
    %v416 = vld [vmem:[#allocation5 + $0x7cc] sm:$0xf]
    %v417 = vld [vmem:[#allocation5 + $0x7d0] sm:$0xff]
    %v418 = vld [vmem:[#allocation5 + $0x7d8] sm:$0xff]
    %v419 = vld [vmem:[#allocation5 + $0x7e0] sm:$0xf]
    %v420 = vld [vmem:[#allocation5 + $0x7e4] sm:$0xff]
    %v421 = vld [vmem:[#allocation5 + $0x7ec] sm:$0xff]
    %v422 = vld [vmem:[#allocation5 + $0x7f4] sm:$0xf]
    %v423 = vld [vmem:[#allocation5 + $0x7f8] sm:$0xff]
    %v424 = vld [vmem:[#allocation5 + $0x800] sm:$0xff]
    %v425 = vld [vmem:[#allocation5 + $0x808] sm:$0xf]
    %v426 = vld [vmem:[#allocation5 + $0x80c] sm:$0xff]
    %v427 = vld [vmem:[#allocation5 + $0x814] sm:$0xff]
    %v428 = vld [vmem:[#allocation5 + $0x81c] sm:$0xf]
    %v429 = vld [vmem:[#allocation5 + $0x820] sm:$0xff]
    %v430 = vld [vmem:[#allocation5 + $0x828] sm:$0xff]
    %v431 = vld [vmem:[#allocation5 + $0x830] sm:$0xf]
    %v432 = vld [vmem:[#allocation5 + $0x834] sm:$0xff]
    %v433 = vld [vmem:[#allocation5 + $0x83c] sm:$0xff]
    %v434 = vld [vmem:[#allocation5 + $0x844] sm:$0xf]
    %v435 = vld [vmem:[#allocation5 + $0x848] sm:$0xff]
    %v436 = vld [vmem:[#allocation5 + $0x850] sm:$0xff]
    %v437 = vld [vmem:[#allocation5 + $0x858] sm:$0xf]
    %v438 = vld [vmem:[#allocation5 + $0x85c] sm:$0xff]
    %v439 = vld [vmem:[#allocation5 + $0x864] sm:$0xff]
    %v440 = vld [vmem:[#allocation5 + $0x86c] sm:$0xf]
    %v441 = vld [vmem:[#allocation5 + $0x870] sm:$0xff]
    %v442 = vld [vmem:[#allocation5 + $0x878] sm:$0xff]
    %v443 = vld [vmem:[#allocation5 + $0x880] sm:$0xf]
    %v444 = vld [vmem:[#allocation5 + $0x884] sm:$0xff]
    %v445 = vld [vmem:[#allocation5 + $0x88c] sm:$0xff]
    %v446 = vld [vmem:[#allocation5 + $0x894] sm:$0xf]
    %v447 = vld [vmem:[#allocation5 + $0x898] sm:$0xff]
    %v448 = vld [vmem:[#allocation5 + $0x8a0] sm:$0xff]
    %v449 = vld [vmem:[#allocation5 + $0x8a8] sm:$0xf]
    %v450 = vld [vmem:[#allocation5 + $0x8ac] sm:$0xff]
    %v451 = vld [vmem:[#allocation5 + $0x8b4] sm:$0xff]
    %v452 = vld [vmem:[#allocation5 + $0x8bc] sm:$0xf]
    %v453 = vld [vmem:[#allocation5 + $0x8c0] sm:$0xff]
    %v454 = vld [vmem:[#allocation5 + $0x8c8] sm:$0xff]
    %v455 = vld [vmem:[#allocation5 + $0x8d0] sm:$0xf]
    %v456 = vld [vmem:[#allocation5 + $0x8d4] sm:$0xff]
    %v457 = vld [vmem:[#allocation5 + $0x8dc] sm:$0xff]
    %v458 = vld [vmem:[#allocation5 + $0x8e4] sm:$0xf]
    %v459 = vld [vmem:[#allocation5 + $0x8e8] sm:$0xff]
    %v460 = vld [vmem:[#allocation5 + $0x8f0] sm:$0xff]
    %v461 = vld [vmem:[#allocation5 + $0x8f8] sm:$0xf]
    %v462 = vld [vmem:[#allocation5 + $0x8fc] sm:$0xff]
    %v463 = vld [vmem:[#allocation5 + $0x904] sm:$0xff]
    %v464 = vld [vmem:[#allocation5 + $0x90c] sm:$0xf]
    %v465 = vld [vmem:[#allocation5 + $0x910] sm:$0xff]
    %v466 = vld [vmem:[#allocation5 + $0x918] sm:$0xff]
    %v467 = vld [vmem:[#allocation5 + $0x920] sm:$0xf]
    %v468 = vld [vmem:[#allocation5 + $0x924] sm:$0xff]
    %v469 = vld [vmem:[#allocation5 + $0x92c] sm:$0xff]
    %v470 = vld [vmem:[#allocation5 + $0x934] sm:$0xf]
    %v471 = vld [vmem:[#allocation5 + $0x938] sm:$0xff]
    %v472 = vld [vmem:[#allocation5 + $0x940] sm:$0xff]
    %v473 = vld [vmem:[#allocation5 + $0x948] sm:$0xf]
    %v474 = vld [vmem:[#allocation5 + $0x94c] sm:$0xff]
    %v475 = vld [vmem:[#allocation5 + $0x954] sm:$0xff]
    %v476 = vld [vmem:[#allocation5 + $0x95c] sm:$0xf]
    %v477 = vld [vmem:[#allocation5 + $0x960] sm:$0xff]
    %v478 = vld [vmem:[#allocation5 + $0x968] sm:$0xff]
    %v479 = vld [vmem:[#allocation5 + $0x970] sm:$0xf]
    %v480 = vld [vmem:[#allocation5 + $0x974] sm:$0xff]
    %v481 = vld [vmem:[#allocation5 + $0x97c] sm:$0xff]
    %v482 = vld [vmem:[#allocation5 + $0x984] sm:$0xf]
    %v483 = vld [vmem:[#allocation5 + $0x988] sm:$0xff]
    %v484 = vld [vmem:[#allocation5 + $0x990] sm:$0xff]
    %v485 = vld [vmem:[#allocation5 + $0x998] sm:$0xf]
    %v486 = vld [vmem:[#allocation5 + $0x99c] sm:$0xff]
    %v487 = vld [vmem:[#allocation5 + $0x9a4] sm:$0xff]
    %v488 = vld [vmem:[#allocation5 + $0x9ac] sm:$0xf]
    %v489 = vld [vmem:[#allocation5 + $0x9b0] sm:$0xff]
    %v490 = vld [vmem:[#allocation5 + $0x9b8] sm:$0xff]
    %v491 = vld [vmem:[#allocation5 + $0x9c0] sm:$0xf]
    %v492 = vld [vmem:[#allocation5 + $0x9c4] sm:$0xff]
    %v493 = vld [vmem:[#allocation5 + $0x9cc] sm:$0xff]
    %v494 = vld [vmem:[#allocation5 + $0x9d4] sm:$0xf]
    %v495 = vld [vmem:[#allocation5 + $0x9d8] sm:$0xff]
    %v496 = vld [vmem:[#allocation5 + $0x9e0] sm:$0xff]
    %v497 = vld [vmem:[#allocation5 + $0x9e8] sm:$0xf]
    %v498 = vld [vmem:[#allocation5 + $0x9ec] sm:$0xff]
    %v499 = vld [vmem:[#allocation5 + $0x9f4] sm:$0xff]
    %v500 = vld [vmem:[#allocation5 + $0x9fc] sm:$0xf]
    %v501 = vld [vmem:[#allocation5 + $0xa00] sm:$0xff]
    %v502 = vld [vmem:[#allocation5 + $0xa08] sm:$0xff]
    %v503 = vld [vmem:[#allocation5 + $0xa10] sm:$0xf]
    %v504 = vld [vmem:[#allocation5 + $0xa14] sm:$0xff]
    %v505 = vld [vmem:[#allocation5 + $0xa1c] sm:$0xff]
    %v506 = vld [vmem:[#allocation5 + $0xa24] sm:$0xf]
    %v507 = vld [vmem:[#allocation5 + $0xa28] sm:$0xff]
    %v508 = vld [vmem:[#allocation5 + $0xa30] sm:$0xff]
    %v509 = vld [vmem:[#allocation5 + $0xa38] sm:$0xf]
    %v510 = vld [vmem:[#allocation5 + $0xa3c] sm:$0xff]
    %v511 = vld [vmem:[#allocation5 + $0xa44] sm:$0xff]
    %v512 = vld [vmem:[#allocation5 + $0xa4c] sm:$0xf]
    %v513 = vld [vmem:[#allocation5 + $0xa50] sm:$0xff]
    %v514 = vld [vmem:[#allocation5 + $0xa58] sm:$0xff]
    %v515 = vld [vmem:[#allocation5 + $0xa60] sm:$0xf]
    %v516 = vld [vmem:[#allocation5 + $0xa64] sm:$0xff]
    %v517 = vld [vmem:[#allocation5 + $0xa6c] sm:$0xff]
    %v518 = vld [vmem:[#allocation5 + $0xa74] sm:$0xf]
    %v519 = vld [vmem:[#allocation5 + $0xa78] sm:$0xff]
    %v520 = vld [vmem:[#allocation5 + $0xa80] sm:$0xff]
    %v521 = vld [vmem:[#allocation5 + $0xa88] sm:$0xf]
    %v522 = vld [vmem:[#allocation5 + $0xa8c] sm:$0xff]
    %v523 = vld [vmem:[#allocation5 + $0xa94] sm:$0xff]
    %v524 = vld [vmem:[#allocation5 + $0xa9c] sm:$0xf]
    %v525 = vld [vmem:[#allocation5 + $0xaa0] sm:$0xff]
    %v526 = vld [vmem:[#allocation5 + $0xaa8] sm:$0xff]
    %v527 = vld [vmem:[#allocation5 + $0xab0] sm:$0xf]
    %v528 = vld [vmem:[#allocation5 + $0xab4] sm:$0xff]
    %v529 = vld [vmem:[#allocation5 + $0xabc] sm:$0xff]
    %v530 = vld [vmem:[#allocation5 + $0xac4] sm:$0xf]
    %v531 = vld [vmem:[#allocation5 + $0xac8] sm:$0xff]
    %v532 = vld [vmem:[#allocation5 + $0xad0] sm:$0xff]
    %v533 = vld [vmem:[#allocation5 + $0xad8] sm:$0xf]
    %v534 = vld [vmem:[#allocation5 + $0xadc] sm:$0xff]
    %v535 = vld [vmem:[#allocation5 + $0xae4] sm:$0xff]
    %v536 = vld [vmem:[#allocation5 + $0xaec] sm:$0xf]
    %v537 = vld [vmem:[#allocation5 + $0xaf0] sm:$0xff]
    %v538 = vld [vmem:[#allocation5 + $0xaf8] sm:$0xff]
    %v539 = vld [vmem:[#allocation5 + $0xb00] sm:$0xf]
    %v540 = vld [vmem:[#allocation5 + $0xb04] sm:$0xff]
    %v541 = vld [vmem:[#allocation5 + $0xb0c] sm:$0xff]
    %v542 = vld [vmem:[#allocation5 + $0xb14] sm:$0xf]
    %v543 = vld [vmem:[#allocation5 + $0xb18] sm:$0xff]
    %v544 = vld [vmem:[#allocation5 + $0xb20] sm:$0xff]
    %v545 = vld [vmem:[#allocation5 + $0xb28] sm:$0xf]
    %v546 = vld [vmem:[#allocation5 + $0xb2c] sm:$0xff]
    %v547 = vld [vmem:[#allocation5 + $0xb34] sm:$0xff]
    %v548 = vld [vmem:[#allocation5 + $0xb3c] sm:$0xf]
    %v549 = vld [vmem:[#allocation5 + $0xb40] sm:$0xff]
    %v550 = vld [vmem:[#allocation5 + $0xb48] sm:$0xff]
    %v551 = vld [vmem:[#allocation5 + $0xb50] sm:$0xf]
    %v552 = vld [vmem:[#allocation5 + $0xb54] sm:$0xff]
    %v553 = vld [vmem:[#allocation5 + $0xb5c] sm:$0xff]
    %v554 = vld [vmem:[#allocation5 + $0xb64] sm:$0xf]
    %v555 = vld [vmem:[#allocation5 + $0xb68] sm:$0xff]
    %v556 = vld [vmem:[#allocation5 + $0xb70] sm:$0xff]
    %v557 = vld [vmem:[#allocation5 + $0xb78] sm:$0xf]
    %v558 = vld [vmem:[#allocation5 + $0xb7c] sm:$0xff]
    %v559 = vld [vmem:[#allocation5 + $0xb84] sm:$0xff]
    %v560 = vld [vmem:[#allocation5 + $0xb8c] sm:$0xf]
    %v561 = vld [vmem:[#allocation5 + $0xb90] sm:$0xff]
    %v562 = vld [vmem:[#allocation5 + $0xb98] sm:$0xff]
    %v563 = vld [vmem:[#allocation5 + $0xba0] sm:$0xf]
    %v564 = vld [vmem:[#allocation5 + $0xba4] sm:$0xff]
    %v565 = vld [vmem:[#allocation5 + $0xbac] sm:$0xff]
    %v566 = vld [vmem:[#allocation5 + $0xbb4] sm:$0xf]
    %v567 = vld [vmem:[#allocation5 + $0xbb8] sm:$0xff]
    %v568 = vld [vmem:[#allocation5 + $0xbc0] sm:$0xff]
    %v569 = vld [vmem:[#allocation5 + $0xbc8] sm:$0xf]
    %v570 = vld [vmem:[#allocation5 + $0xbcc] sm:$0xff]
    %v571 = vld [vmem:[#allocation5 + $0xbd4] sm:$0xff]
    %v572 = vld [vmem:[#allocation5 + $0xbdc] sm:$0xf]
    %v573 = vld [vmem:[#allocation5 + $0xbe0] sm:$0xff]
    %v574 = vld [vmem:[#allocation5 + $0xbe8] sm:$0xff]
    %v575 = vld [vmem:[#allocation5 + $0xbf0] sm:$0xf]
    %v576 = vld [vmem:[#allocation5 + $0xbf4] sm:$0xff]
    %v577 = vld [vmem:[#allocation5 + $0xbfc] sm:$0xff]
    %v578 = vld [vmem:[#allocation5 + $0xc04] sm:$0xf]
    %v579 = vld [vmem:[#allocation5 + $0xc08] sm:$0xff]
    %v580 = vld [vmem:[#allocation5 + $0xc10] sm:$0xff]
    %v581 = vld [vmem:[#allocation5 + $0xc18] sm:$0xf]
    %v582 = vld [vmem:[#allocation5 + $0xc1c] sm:$0xff]
    %v583 = vld [vmem:[#allocation5 + $0xc24] sm:$0xff]
    %v584 = vld [vmem:[#allocation5 + $0xc2c] sm:$0xf]
    %v585 = vld [vmem:[#allocation5 + $0xc30] sm:$0xff]
    %v586 = vld [vmem:[#allocation5 + $0xc38] sm:$0xff]
    %v587 = vld [vmem:[#allocation5 + $0xc40] sm:$0xf]
    %v588 = vld [vmem:[#allocation5 + $0xc44] sm:$0xff]
    %v589 = vld [vmem:[#allocation5 + $0xc4c] sm:$0xff]
    %v590 = vld [vmem:[#allocation5 + $0xc54] sm:$0xf]
    %v591 = vld [vmem:[#allocation5 + $0xc58] sm:$0xff]
    %v592 = vld [vmem:[#allocation5 + $0xc60] sm:$0xff]
    %v593 = vld [vmem:[#allocation5 + $0xc68] sm:$0xf]
    %v594 = vld [vmem:[#allocation5 + $0xc6c] sm:$0xff]
    %v595 = vld [vmem:[#allocation5 + $0xc74] sm:$0xff]
    %v596 = vld [vmem:[#allocation5 + $0xc7c] sm:$0xf]
    %v597 = vld [vmem:[#allocation5 + $0xc80] sm:$0xff]
    %v598 = vld [vmem:[#allocation5 + $0xc88] sm:$0xff]
    %v599 = vld [vmem:[#allocation5 + $0xc90] sm:$0xf]
    %v600 = vld [vmem:[#allocation5 + $0xc94] sm:$0xff]
    %v601 = vld [vmem:[#allocation5 + $0xc9c] sm:$0xff]
    %v602 = vld [vmem:[#allocation5 + $0xca4] sm:$0xf]
    %v603 = vld [vmem:[#allocation5 + $0xca8] sm:$0xff]
    %v604 = vld [vmem:[#allocation5 + $0xcb0] sm:$0xff]
    %v605 = vld [vmem:[#allocation5 + $0xcb8] sm:$0xf]
    %v606 = vld [vmem:[#allocation5 + $0xcbc] sm:$0xff]
    %v607 = vld [vmem:[#allocation5 + $0xcc4] sm:$0xff]
    %v608 = vld [vmem:[#allocation5 + $0xccc] sm:$0xf]
    %v609 = vld [vmem:[#allocation5 + $0xcd0] sm:$0xff]
    %v610 = vld [vmem:[#allocation5 + $0xcd8] sm:$0xff]
    %v611 = vld [vmem:[#allocation5 + $0xce0] sm:$0xf]
    %v612 = vld [vmem:[#allocation5 + $0xce4] sm:$0xff]
    %v613 = vld [vmem:[#allocation5 + $0xcec] sm:$0xff]
    %v614 = vld [vmem:[#allocation5 + $0xcf4] sm:$0xf]
    %v615 = vld [vmem:[#allocation5 + $0xcf8] sm:$0xff]
    %v616 = vld [vmem:[#allocation5 + $0xd00] sm:$0xff]
    %v617 = vld [vmem:[#allocation5 + $0xd08] sm:$0xf]
    %v618 = vld [vmem:[#allocation5 + $0xd0c] sm:$0xff]
    %v619 = vld [vmem:[#allocation5 + $0xd14] sm:$0xff]
    %v620 = vld [vmem:[#allocation5 + $0xd1c] sm:$0xf]
    %v621 = vld [vmem:[#allocation5 + $0xd20] sm:$0xff]
    %v622 = vld [vmem:[#allocation5 + $0xd28] sm:$0xff]
    %v623 = vld [vmem:[#allocation5 + $0xd30] sm:$0xf]
    %v624 = vld [vmem:[#allocation5 + $0xd34] sm:$0xff]
    %v625 = vld [vmem:[#allocation5 + $0xd3c] sm:$0xff]
    %v626 = vld [vmem:[#allocation5 + $0xd44] sm:$0xf]
    %v627 = vld [vmem:[#allocation5 + $0xd48] sm:$0xff]
    %v628 = vld [vmem:[#allocation5 + $0xd50] sm:$0xff]
    %v629 = vld [vmem:[#allocation5 + $0xd58] sm:$0xf]
    %v630 = vld [vmem:[#allocation5 + $0xd5c] sm:$0xff]
    %v631 = vld [vmem:[#allocation5 + $0xd64] sm:$0xff]
    %v632 = vld [vmem:[#allocation5 + $0xd6c] sm:$0xf]
    %v633 = vld [vmem:[#allocation5 + $0xd70] sm:$0xff]
    %v634 = vld [vmem:[#allocation5 + $0xd78] sm:$0xff]
    %v635 = vld [vmem:[#allocation5 + $0xd80] sm:$0xf]
    %v636 = vld [vmem:[#allocation5 + $0xd84] sm:$0xff]
    %v637 = vld [vmem:[#allocation5 + $0xd8c] sm:$0xff]
    %v638 = vld [vmem:[#allocation5 + $0xd94] sm:$0xf]
    %v639 = vld [vmem:[#allocation5 + $0xd98] sm:$0xff]
    %v640 = vld [vmem:[#allocation5 + $0xda0] sm:$0xff]
    %v641 = vld [vmem:[#allocation5 + $0xda8] sm:$0xf]
    %v642 = vld [vmem:[#allocation5 + $0xdac] sm:$0xff]
    %v643 = vld [vmem:[#allocation5 + $0xdb4] sm:$0xff]
    %v644 = vld [vmem:[#allocation5 + $0xdbc] sm:$0xf]
    %v645 = vld [vmem:[#allocation5 + $0xdc0] sm:$0xff]
    %v646 = vld [vmem:[#allocation5 + $0xdc8] sm:$0xff]
    %v647 = vld [vmem:[#allocation5 + $0xdd0] sm:$0xf]
    %v648 = vld [vmem:[#allocation5 + $0xdd4] sm:$0xff]
    %v649 = vld [vmem:[#allocation5 + $0xddc] sm:$0xff]
    %v650 = vld [vmem:[#allocation5 + $0xde4] sm:$0xf]
    %v651 = vld [vmem:[#allocation5 + $0xde8] sm:$0xff]
    %v652 = vld [vmem:[#allocation5 + $0xdf0] sm:$0xff]
    %v653 = vld [vmem:[#allocation5 + $0xdf8] sm:$0xf]
    %v654 = vld [vmem:[#allocation5 + $0xdfc] sm:$0xff]
    %v655 = vld [vmem:[#allocation5 + $0xe04] sm:$0xff]
    %v656 = vld [vmem:[#allocation5 + $0xe0c] sm:$0xf]
    %v657 = vld [vmem:[#allocation5 + $0xe10] sm:$0xff]
    %v658 = vld [vmem:[#allocation5 + $0xe18] sm:$0xff]
    %v659 = vld [vmem:[#allocation5 + $0xe20] sm:$0xf]
    %v660 = vld [vmem:[#allocation5 + $0xe24] sm:$0xff]
    %v661 = vld [vmem:[#allocation5 + $0xe2c] sm:$0xff]
    %v662 = vld [vmem:[#allocation5 + $0xe34] sm:$0xf]
    %v663 = vld [vmem:[#allocation5 + $0xe38] sm:$0xff]
    %v664 = vld [vmem:[#allocation5 + $0xe40] sm:$0xff]
    %v665 = vld [vmem:[#allocation5 + $0xe48] sm:$0xf]
    %v666 = vld [vmem:[#allocation5 + $0xe4c] sm:$0xff]
    %v667 = vld [vmem:[#allocation5 + $0xe54] sm:$0xff]
    %v668 = vld [vmem:[#allocation5 + $0xe5c] sm:$0xf]
    %v669 = vld [vmem:[#allocation5 + $0xe60] sm:$0xff]
    %v670 = vld [vmem:[#allocation5 + $0xe68] sm:$0xff]
    %v671 = vld [vmem:[#allocation5 + $0xe70] sm:$0xf]
    %v672 = vld [vmem:[#allocation5 + $0xe74] sm:$0xff]
    %v673 = vld [vmem:[#allocation5 + $0xe7c] sm:$0xff]
    %v674 = vld [vmem:[#allocation5 + $0xe84] sm:$0xf]
    %v675 = vld [vmem:[#allocation5 + $0xe88] sm:$0xff]
    %v676 = vld [vmem:[#allocation5 + $0xe90] sm:$0xff]
    %v677 = vld [vmem:[#allocation5 + $0xe98] sm:$0xf]
    %v678 = vld [vmem:[#allocation5 + $0xe9c] sm:$0xff]
    %v679 = vld [vmem:[#allocation5 + $0xea4] sm:$0xff]
    %v680 = vld [vmem:[#allocation5 + $0xeac] sm:$0xf]
    %v681 = vld [vmem:[#allocation5 + $0xeb0] sm:$0xff]
    %v682 = vld [vmem:[#allocation5 + $0xeb8] sm:$0xff]
    %v683 = vld [vmem:[#allocation5 + $0xec0] sm:$0xf]
    %v684 = vld [vmem:[#allocation5 + $0xec4] sm:$0xff]
    %v685 = vld [vmem:[#allocation5 + $0xecc] sm:$0xff]
    %v686 = vld [vmem:[#allocation5 + $0xed4] sm:$0xf]
    %v687 = vld [vmem:[#allocation5 + $0xed8] sm:$0xff]
    %v688 = vld [vmem:[#allocation5 + $0xee0] sm:$0xff]
    %v689 = vld [vmem:[#allocation5 + $0xee8] sm:$0xf]
    %v690 = vld [vmem:[#allocation5 + $0xeec] sm:$0xff]
    %v691 = vld [vmem:[#allocation5 + $0xef4] sm:$0xff]
    %v692 = vld [vmem:[#allocation5 + $0xefc] sm:$0xf]
    %v693 = vld [vmem:[#allocation7] sm:$0x1f]
    %v695 = vlaneseq
    %v696 = vshrl.u32 %v695, 7
    %v697 = vsub.s32 0, %v696
    %v698 = vrot.slane %v693, %v697
    %v699 = vlaneseq
    %v700 = vshrl.u32 %v699, 7
    %v701 = vsub.s32 1, %v700
    %v702 = vrot.slane %v693, %v701
    %v703 = vlaneseq
    %v704 = vshrl.u32 %v703, 7
    %v705 = vsub.s32 2, %v704
    %v706 = vrot.slane %v693, %v705
    %v707 = vlaneseq
    %v708 = vshrl.u32 %v707, 7
    %v709 = vsub.s32 3, %v708
    %v710 = vrot.slane %v693, %v709
    %v711 = vlaneseq
    %v712 = vshrl.u32 %v711, 7
    %v713 = vsub.s32 4, %v712
    %v714 = vrot.slane %v693, %v713
    %v722 = vcombine.high %v115, %v115
    %v724 = vunpack.c.l.s4 1966171168
    %v725 = vunpack.c.0.s8 %v724
    %v726 = vlaneseq
    %v727 = vshrl.u32 %v726, 7
    %v728 = vsub.s32 %v725, %v727
    %v729 = vrot.slane %v115, %v728
    %v731 = vunpack.c.l.s4 1966171168
    %v732 = vunpack.c.0.s8 %v731
    %v733 = vlaneseq
    %v734 = vshrl.u32 %v733, 7
    %v735 = vsub.s32 %v732, %v734
    %v736 = vrot.slane %v722, %v735
    %v737 = vcombine.high %v729, %v729
    %v738 = vcombine.high %v736, %v736
    %v740 = vunpack.c.l.s4 1966171168
    %v741 = vunpack.c.0.s8 %v740
    %v742 = vlaneseq
    %v743 = vshrl.u32 %v742, 7
    %v744 = vsub.s32 %v741, %v743
    %v745 = vrot.slane %v729, %v744
    %v747 = vunpack.c.l.s4 1966171168
    %v748 = vunpack.c.0.s8 %v747
    %v749 = vlaneseq
    %v750 = vshrl.u32 %v749, 7
    %v751 = vsub.s32 %v748, %v750
    %v752 = vrot.slane %v736, %v751
    %v754 = vunpack.c.l.s4 1966171168
    %v755 = vunpack.c.0.s8 %v754
    %v756 = vlaneseq
    %v757 = vshrl.u32 %v756, 7
    %v758 = vsub.s32 %v755, %v757
    %v759 = vrot.slane %v737, %v758
    %v761 = vunpack.c.l.s4 1966171168
    %v762 = vunpack.c.0.s8 %v761
    %v763 = vlaneseq
    %v764 = vshrl.u32 %v763, 7
    %v765 = vsub.s32 %v762, %v764
    %v766 = vrot.slane %v738, %v765
    %v767 = vcombine.high %v745, %v745
    %v768 = vcombine.high %v752, %v752
    %v769 = vcombine.high %v759, %v759
    %v770 = vcombine.high %v766, %v766
    %v772 = vunpack.c.l.s4 1966171168
    %v773 = vunpack.c.0.s8 %v772
    %v774 = vlaneseq
    %v775 = vshrl.u32 %v774, 7
    %v776 = vsub.s32 %v773, %v775
    %v777 = vrot.slane %v116, %v776
    %v778 = vcombine.high %v777, %v777
    %v780 = vunpack.c.l.s4 1966171168
    %v781 = vunpack.c.0.s8 %v780
    %v782 = vlaneseq
    %v783 = vshrl.u32 %v782, 7
    %v784 = vsub.s32 %v781, %v783
    %v785 = vrot.slane %v777, %v784
    %v787 = vunpack.c.l.s4 1966171168
    %v788 = vunpack.c.0.s8 %v787
    %v789 = vlaneseq
    %v790 = vshrl.u32 %v789, 7
    %v791 = vsub.s32 %v788, %v790
    %v792 = vrot.slane %v778, %v791
    %v793 = vcombine.high %v785, %v785
    %v794 = vcombine.high %v792, %v792
    %v1383 = vunpack.c.l.b16 %v117
    %v1384 = vunpack.c.h.b16 %v117
    %v1385 = vunpack.c.l.b16 %v118
    %v1386 = vunpack.c.h.b16 %v118
    %v1387 = vunpack.c.l.b16 %v119
    %v1388 = vunpack.c.l.b16 %v120
    %v1389 = vunpack.c.h.b16 %v120
    %v1390 = vunpack.c.l.b16 %v121
    %v1391 = vunpack.c.h.b16 %v121
    %v1392 = vunpack.c.l.b16 %v122
    %v1393 = vunpack.c.l.b16 %v123
    %v1394 = vunpack.c.h.b16 %v123
    %v1395 = vunpack.c.l.b16 %v124
    %v1396 = vunpack.c.h.b16 %v124
    %v1397 = vunpack.c.l.b16 %v125
    %v1398 = vunpack.c.l.b16 %v126
    %v1399 = vunpack.c.h.b16 %v126
    %v1400 = vunpack.c.l.b16 %v127
    %v1401 = vunpack.c.h.b16 %v127
    %v1402 = vunpack.c.l.b16 %v128
    %v1403 = vunpack.c.l.b16 %v129
    %v1404 = vunpack.c.h.b16 %v129
    %v1405 = vunpack.c.l.b16 %v130
    %v1406 = vunpack.c.h.b16 %v130
    %v1407 = vunpack.c.l.b16 %v131
    %v1408 = vunpack.c.l.b16 %v132
    %v1409 = vunpack.c.h.b16 %v132
    %v1410 = vunpack.c.l.b16 %v133
    %v1411 = vunpack.c.h.b16 %v133
    %v1412 = vunpack.c.l.b16 %v134
    %v1413 = vunpack.c.l.b16 %v135
    %v1414 = vunpack.c.h.b16 %v135
    %v1415 = vunpack.c.l.b16 %v136
    %v1416 = vunpack.c.h.b16 %v136
    %v1417 = vunpack.c.l.b16 %v137
    %v1418 = vunpack.c.l.b16 %v138
    %v1419 = vunpack.c.h.b16 %v138
    %v1420 = vunpack.c.l.b16 %v139
    %v1421 = vunpack.c.h.b16 %v139
    %v1422 = vunpack.c.l.b16 %v140
    %v1423 = vunpack.c.l.b16 %v141
    %v1424 = vunpack.c.h.b16 %v141
    %v1425 = vunpack.c.l.b16 %v142
    %v1426 = vunpack.c.h.b16 %v142
    %v1427 = vunpack.c.l.b16 %v143
    %v1428 = vunpack.c.l.b16 %v144
    %v1429 = vunpack.c.h.b16 %v144
    %v1430 = vunpack.c.l.b16 %v145
    %v1431 = vunpack.c.h.b16 %v145
    %v1432 = vunpack.c.l.b16 %v146
    %v1433 = vunpack.c.l.b16 %v147
    %v1434 = vunpack.c.h.b16 %v147
    %v1435 = vunpack.c.l.b16 %v148
    %v1436 = vunpack.c.h.b16 %v148
    %v1437 = vunpack.c.l.b16 %v149
    %v1438 = vunpack.c.l.b16 %v150
    %v1439 = vunpack.c.h.b16 %v150
    %v1440 = vunpack.c.l.b16 %v151
    %v1441 = vunpack.c.h.b16 %v151
    %v1442 = vunpack.c.l.b16 %v152
    %v1443 = vunpack.c.l.b16 %v153
    %v1444 = vunpack.c.h.b16 %v153
    %v1445 = vunpack.c.l.b16 %v154
    %v1446 = vunpack.c.h.b16 %v154
    %v1447 = vunpack.c.l.b16 %v155
    %v1448 = vunpack.c.l.b16 %v156
    %v1449 = vunpack.c.h.b16 %v156
    %v1450 = vunpack.c.l.b16 %v157
    %v1451 = vunpack.c.h.b16 %v157
    %v1452 = vunpack.c.l.b16 %v158
    %v1453 = vunpack.c.l.b16 %v159
    %v1454 = vunpack.c.h.b16 %v159
    %v1455 = vunpack.c.l.b16 %v160
    %v1456 = vunpack.c.h.b16 %v160
    %v1457 = vunpack.c.l.b16 %v161
    %v1458 = vunpack.c.l.b16 %v162
    %v1459 = vunpack.c.h.b16 %v162
    %v1460 = vunpack.c.l.b16 %v163
    %v1461 = vunpack.c.h.b16 %v163
    %v1462 = vunpack.c.l.b16 %v164
    %v1463 = vunpack.c.l.b16 %v165
    %v1464 = vunpack.c.h.b16 %v165
    %v1465 = vunpack.c.l.b16 %v166
    %v1466 = vunpack.c.h.b16 %v166
    %v1467 = vunpack.c.l.b16 %v167
    %v1468 = vunpack.c.l.b16 %v168
    %v1469 = vunpack.c.h.b16 %v168
    %v1470 = vunpack.c.l.b16 %v169
    %v1471 = vunpack.c.h.b16 %v169
    %v1472 = vunpack.c.l.b16 %v170
    %v1473 = vunpack.c.l.b16 %v171
    %v1474 = vunpack.c.h.b16 %v171
    %v1475 = vunpack.c.l.b16 %v172
    %v1476 = vunpack.c.h.b16 %v172
    %v1477 = vunpack.c.l.b16 %v173
    %v1478 = vunpack.c.l.b16 %v174
    %v1479 = vunpack.c.h.b16 %v174
    %v1480 = vunpack.c.l.b16 %v175
    %v1481 = vunpack.c.h.b16 %v175
    %v1482 = vunpack.c.l.b16 %v176
    %v1483 = vunpack.c.l.b16 %v177
    %v1484 = vunpack.c.h.b16 %v177
    %v1485 = vunpack.c.l.b16 %v178
    %v1486 = vunpack.c.h.b16 %v178
    %v1487 = vunpack.c.l.b16 %v179
    %v1488 = vunpack.c.l.b16 %v180
    %v1489 = vunpack.c.h.b16 %v180
    %v1490 = vunpack.c.l.b16 %v181
    %v1491 = vunpack.c.h.b16 %v181
    %v1492 = vunpack.c.l.b16 %v182
    %v1493 = vunpack.c.l.b16 %v183
    %v1494 = vunpack.c.h.b16 %v183
    %v1495 = vunpack.c.l.b16 %v184
    %v1496 = vunpack.c.h.b16 %v184
    %v1497 = vunpack.c.l.b16 %v185
    %v1498 = vunpack.c.l.b16 %v186
    %v1499 = vunpack.c.h.b16 %v186
    %v1500 = vunpack.c.l.b16 %v187
    %v1501 = vunpack.c.h.b16 %v187
    %v1502 = vunpack.c.l.b16 %v188
    %v1503 = vunpack.c.l.b16 %v189
    %v1504 = vunpack.c.h.b16 %v189
    %v1505 = vunpack.c.l.b16 %v190
    %v1506 = vunpack.c.h.b16 %v190
    %v1507 = vunpack.c.l.b16 %v191
    %v1508 = vunpack.c.l.b16 %v192
    %v1509 = vunpack.c.h.b16 %v192
    %v1510 = vunpack.c.l.b16 %v193
    %v1511 = vunpack.c.h.b16 %v193
    %v1512 = vunpack.c.l.b16 %v194
    %v1513 = vunpack.c.l.b16 %v195
    %v1514 = vunpack.c.h.b16 %v195
    %v1515 = vunpack.c.l.b16 %v196
    %v1516 = vunpack.c.h.b16 %v196
    %v1517 = vunpack.c.l.b16 %v197
    %v1518 = vunpack.c.l.b16 %v198
    %v1519 = vunpack.c.h.b16 %v198
    %v1520 = vunpack.c.l.b16 %v199
    %v1521 = vunpack.c.h.b16 %v199
    %v1522 = vunpack.c.l.b16 %v200
    %v1523 = vunpack.c.l.b16 %v201
    %v1524 = vunpack.c.h.b16 %v201
    %v1525 = vunpack.c.l.b16 %v202
    %v1526 = vunpack.c.h.b16 %v202
    %v1527 = vunpack.c.l.b16 %v203
    %v1528 = vunpack.c.l.b16 %v204
    %v1529 = vunpack.c.h.b16 %v204
    %v1530 = vunpack.c.l.b16 %v205
    %v1531 = vunpack.c.h.b16 %v205
    %v1532 = vunpack.c.l.b16 %v206
    %v1533 = vunpack.c.l.b16 %v207
    %v1534 = vunpack.c.h.b16 %v207
    %v1535 = vunpack.c.l.b16 %v208
    %v1536 = vunpack.c.h.b16 %v208
    %v1537 = vunpack.c.l.b16 %v209
    %v1538 = vunpack.c.l.b16 %v210
    %v1539 = vunpack.c.h.b16 %v210
    %v1540 = vunpack.c.l.b16 %v211
    %v1541 = vunpack.c.h.b16 %v211
    %v1542 = vunpack.c.l.b16 %v212
    %v1543 = vunpack.c.l.b16 %v213
    %v1544 = vunpack.c.h.b16 %v213
    %v1545 = vunpack.c.l.b16 %v214
    %v1546 = vunpack.c.h.b16 %v214
    %v1547 = vunpack.c.l.b16 %v215
    %v1548 = vunpack.c.l.b16 %v216
    %v1549 = vunpack.c.h.b16 %v216
    %v1550 = vunpack.c.l.b16 %v217
    %v1551 = vunpack.c.h.b16 %v217
    %v1552 = vunpack.c.l.b16 %v218
    %v1553 = vunpack.c.l.b16 %v219
    %v1554 = vunpack.c.h.b16 %v219
    %v1555 = vunpack.c.l.b16 %v220
    %v1556 = vunpack.c.h.b16 %v220
    %v1557 = vunpack.c.l.b16 %v221
    %v1558 = vunpack.c.l.b16 %v222
    %v1559 = vunpack.c.h.b16 %v222
    %v1560 = vunpack.c.l.b16 %v223
    %v1561 = vunpack.c.h.b16 %v223
    %v1562 = vunpack.c.l.b16 %v224
    %v1563 = vunpack.c.l.b16 %v225
    %v1564 = vunpack.c.h.b16 %v225
    %v1565 = vunpack.c.l.b16 %v226
    %v1566 = vunpack.c.h.b16 %v226
    %v1567 = vunpack.c.l.b16 %v227
    %v1568 = vunpack.c.l.b16 %v228
    %v1569 = vunpack.c.h.b16 %v228
    %v1570 = vunpack.c.l.b16 %v229
    %v1571 = vunpack.c.h.b16 %v229
    %v1572 = vunpack.c.l.b16 %v230
    %v1573 = vunpack.c.l.b16 %v231
    %v1574 = vunpack.c.h.b16 %v231
    %v1575 = vunpack.c.l.b16 %v232
    %v1576 = vunpack.c.h.b16 %v232
    %v1577 = vunpack.c.l.b16 %v233
    %v1578 = vunpack.c.l.b16 %v234
    %v1579 = vunpack.c.h.b16 %v234
    %v1580 = vunpack.c.l.b16 %v235
    %v1581 = vunpack.c.h.b16 %v235
    %v1582 = vunpack.c.l.b16 %v236
    %v1583 = vunpack.c.l.b16 %v237
    %v1584 = vunpack.c.h.b16 %v237
    %v1585 = vunpack.c.l.b16 %v238
    %v1586 = vunpack.c.h.b16 %v238
    %v1587 = vunpack.c.l.b16 %v239
    %v1588 = vunpack.c.l.b16 %v240
    %v1589 = vunpack.c.h.b16 %v240
    %v1590 = vunpack.c.l.b16 %v241
    %v1591 = vunpack.c.h.b16 %v241
    %v1592 = vunpack.c.l.b16 %v242
    %v1593 = vunpack.c.l.b16 %v243
    %v1594 = vunpack.c.h.b16 %v243
    %v1595 = vunpack.c.l.b16 %v244
    %v1596 = vunpack.c.h.b16 %v244
    %v1597 = vunpack.c.l.b16 %v245
    %v1598 = vunpack.c.l.b16 %v246
    %v1599 = vunpack.c.h.b16 %v246
    %v1600 = vunpack.c.l.b16 %v247
    %v1601 = vunpack.c.h.b16 %v247
    %v1602 = vunpack.c.l.b16 %v248
    %v1603 = vunpack.c.l.b16 %v249
    %v1604 = vunpack.c.h.b16 %v249
    %v1605 = vunpack.c.l.b16 %v250
    %v1606 = vunpack.c.h.b16 %v250
    %v1607 = vunpack.c.l.b16 %v251
    %v1608 = vunpack.c.l.b16 %v252
    %v1609 = vunpack.c.h.b16 %v252
    %v1610 = vunpack.c.l.b16 %v253
    %v1611 = vunpack.c.h.b16 %v253
    %v1612 = vunpack.c.l.b16 %v254
    %v1613 = vunpack.c.l.b16 %v255
    %v1614 = vunpack.c.h.b16 %v255
    %v1615 = vunpack.c.l.b16 %v256
    %v1616 = vunpack.c.h.b16 %v256
    %v1617 = vunpack.c.l.b16 %v257
    %v1618 = vunpack.c.l.b16 %v258
    %v1619 = vunpack.c.h.b16 %v258
    %v1620 = vunpack.c.l.b16 %v259
    %v1621 = vunpack.c.h.b16 %v259
    %v1622 = vunpack.c.l.b16 %v260
    %v1623 = vunpack.c.l.b16 %v261
    %v1624 = vunpack.c.h.b16 %v261
    %v1625 = vunpack.c.l.b16 %v262
    %v1626 = vunpack.c.h.b16 %v262
    %v1627 = vunpack.c.l.b16 %v263
    %v1628 = vunpack.c.l.b16 %v264
    %v1629 = vunpack.c.h.b16 %v264
    %v1630 = vunpack.c.l.b16 %v265
    %v1631 = vunpack.c.h.b16 %v265
    %v1632 = vunpack.c.l.b16 %v266
    %v1633 = vunpack.c.l.b16 %v267
    %v1634 = vunpack.c.h.b16 %v267
    %v1635 = vunpack.c.l.b16 %v268
    %v1636 = vunpack.c.h.b16 %v268
    %v1637 = vunpack.c.l.b16 %v269
    %v1638 = vunpack.c.l.b16 %v270
    %v1639 = vunpack.c.h.b16 %v270
    %v1640 = vunpack.c.l.b16 %v271
    %v1641 = vunpack.c.h.b16 %v271
    %v1642 = vunpack.c.l.b16 %v272
    %v1643 = vunpack.c.l.b16 %v273
    %v1644 = vunpack.c.h.b16 %v273
    %v1645 = vunpack.c.l.b16 %v274
    %v1646 = vunpack.c.h.b16 %v274
    %v1647 = vunpack.c.l.b16 %v275
    %v1648 = vunpack.c.l.b16 %v276
    %v1649 = vunpack.c.h.b16 %v276
    %v1650 = vunpack.c.l.b16 %v277
    %v1651 = vunpack.c.h.b16 %v277
    %v1652 = vunpack.c.l.b16 %v278
    %v1653 = vunpack.c.l.b16 %v279
    %v1654 = vunpack.c.h.b16 %v279
    %v1655 = vunpack.c.l.b16 %v280
    %v1656 = vunpack.c.h.b16 %v280
    %v1657 = vunpack.c.l.b16 %v281
    %v1658 = vunpack.c.l.b16 %v282
    %v1659 = vunpack.c.h.b16 %v282
    %v1660 = vunpack.c.l.b16 %v283
    %v1661 = vunpack.c.h.b16 %v283
    %v1662 = vunpack.c.l.b16 %v284
    %v1663 = vunpack.c.l.b16 %v285
    %v1664 = vunpack.c.h.b16 %v285
    %v1665 = vunpack.c.l.b16 %v286
    %v1666 = vunpack.c.h.b16 %v286
    %v1667 = vunpack.c.l.b16 %v287
    %v1668 = vunpack.c.l.b16 %v288
    %v1669 = vunpack.c.h.b16 %v288
    %v1670 = vunpack.c.l.b16 %v289
    %v1671 = vunpack.c.h.b16 %v289
    %v1672 = vunpack.c.l.b16 %v290
    %v1673 = vunpack.c.l.b16 %v291
    %v1674 = vunpack.c.h.b16 %v291
    %v1675 = vunpack.c.l.b16 %v292
    %v1676 = vunpack.c.h.b16 %v292
    %v1677 = vunpack.c.l.b16 %v293
    %v1678 = vunpack.c.l.b16 %v294
    %v1679 = vunpack.c.h.b16 %v294
    %v1680 = vunpack.c.l.b16 %v295
    %v1681 = vunpack.c.h.b16 %v295
    %v1682 = vunpack.c.l.b16 %v296
    %v1683 = vunpack.c.l.b16 %v297
    %v1684 = vunpack.c.h.b16 %v297
    %v1685 = vunpack.c.l.b16 %v298
    %v1686 = vunpack.c.h.b16 %v298
    %v1687 = vunpack.c.l.b16 %v299
    %v1688 = vunpack.c.l.b16 %v300
    %v1689 = vunpack.c.h.b16 %v300
    %v1690 = vunpack.c.l.b16 %v301
    %v1691 = vunpack.c.h.b16 %v301
    %v1692 = vunpack.c.l.b16 %v302
    %v1693 = vunpack.c.l.b16 %v303
    %v1694 = vunpack.c.h.b16 %v303
    %v1695 = vunpack.c.l.b16 %v304
    %v1696 = vunpack.c.h.b16 %v304
    %v1697 = vunpack.c.l.b16 %v305
    %v1698 = vunpack.c.l.b16 %v306
    %v1699 = vunpack.c.h.b16 %v306
    %v1700 = vunpack.c.l.b16 %v307
    %v1701 = vunpack.c.h.b16 %v307
    %v1702 = vunpack.c.l.b16 %v308
    %v1703 = vunpack.c.l.b16 %v309
    %v1704 = vunpack.c.h.b16 %v309
    %v1705 = vunpack.c.l.b16 %v310
    %v1706 = vunpack.c.h.b16 %v310
    %v1707 = vunpack.c.l.b16 %v311
    %v1708 = vunpack.c.l.b16 %v312
    %v1709 = vunpack.c.h.b16 %v312
    %v1710 = vunpack.c.l.b16 %v313
    %v1711 = vunpack.c.h.b16 %v313
    %v1712 = vunpack.c.l.b16 %v314
    %v1713 = vunpack.c.l.b16 %v315
    %v1714 = vunpack.c.h.b16 %v315
    %v1715 = vunpack.c.l.b16 %v316
    %v1716 = vunpack.c.h.b16 %v316
    %v1717 = vunpack.c.l.b16 %v317
    %v1718 = vunpack.c.l.b16 %v318
    %v1719 = vunpack.c.h.b16 %v318
    %v1720 = vunpack.c.l.b16 %v319
    %v1721 = vunpack.c.h.b16 %v319
    %v1722 = vunpack.c.l.b16 %v320
    %v1723 = vunpack.c.l.b16 %v321
    %v1724 = vunpack.c.h.b16 %v321
    %v1725 = vunpack.c.l.b16 %v322
    %v1726 = vunpack.c.h.b16 %v322
    %v1727 = vunpack.c.l.b16 %v323
    %v1728 = vunpack.c.l.b16 %v324
    %v1729 = vunpack.c.h.b16 %v324
    %v1730 = vunpack.c.l.b16 %v325
    %v1731 = vunpack.c.h.b16 %v325
    %v1732 = vunpack.c.l.b16 %v326
    %v1733 = vunpack.c.l.b16 %v327
    %v1734 = vunpack.c.h.b16 %v327
    %v1735 = vunpack.c.l.b16 %v328
    %v1736 = vunpack.c.h.b16 %v328
    %v1737 = vunpack.c.l.b16 %v329
    %v1738 = vunpack.c.l.b16 %v330
    %v1739 = vunpack.c.h.b16 %v330
    %v1740 = vunpack.c.l.b16 %v331
    %v1741 = vunpack.c.h.b16 %v331
    %v1742 = vunpack.c.l.b16 %v332
    %v1743 = vunpack.c.l.b16 %v333
    %v1744 = vunpack.c.h.b16 %v333
    %v1745 = vunpack.c.l.b16 %v334
    %v1746 = vunpack.c.h.b16 %v334
    %v1747 = vunpack.c.l.b16 %v335
    %v1748 = vunpack.c.l.b16 %v336
    %v1749 = vunpack.c.h.b16 %v336
    %v1750 = vunpack.c.l.b16 %v337
    %v1751 = vunpack.c.h.b16 %v337
    %v1752 = vunpack.c.l.b16 %v338
    %v1753 = vunpack.c.l.b16 %v339
    %v1754 = vunpack.c.h.b16 %v339
    %v1755 = vunpack.c.l.b16 %v340
    %v1756 = vunpack.c.h.b16 %v340
    %v1757 = vunpack.c.l.b16 %v341
    %v1758 = vunpack.c.l.b16 %v342
    %v1759 = vunpack.c.h.b16 %v342
    %v1760 = vunpack.c.l.b16 %v343
    %v1761 = vunpack.c.h.b16 %v343
    %v1762 = vunpack.c.l.b16 %v344
    %v1763 = vunpack.c.l.b16 %v345
    %v1764 = vunpack.c.h.b16 %v345
    %v1765 = vunpack.c.l.b16 %v346
    %v1766 = vunpack.c.h.b16 %v346
    %v1767 = vunpack.c.l.b16 %v347
    %v1768 = vunpack.c.l.b16 %v348
    %v1769 = vunpack.c.h.b16 %v348
    %v1770 = vunpack.c.l.b16 %v349
    %v1771 = vunpack.c.h.b16 %v349
    %v1772 = vunpack.c.l.b16 %v350
    %v1773 = vunpack.c.l.b16 %v351
    %v1774 = vunpack.c.h.b16 %v351
    %v1775 = vunpack.c.l.b16 %v352
    %v1776 = vunpack.c.h.b16 %v352
    %v1777 = vunpack.c.l.b16 %v353
    %v1778 = vunpack.c.l.b16 %v354
    %v1779 = vunpack.c.h.b16 %v354
    %v1780 = vunpack.c.l.b16 %v355
    %v1781 = vunpack.c.h.b16 %v355
    %v1782 = vunpack.c.l.b16 %v356
    %v1783 = vunpack.c.l.b16 %v357
    %v1784 = vunpack.c.h.b16 %v357
    %v1785 = vunpack.c.l.b16 %v358
    %v1786 = vunpack.c.h.b16 %v358
    %v1787 = vunpack.c.l.b16 %v359
    %v1788 = vunpack.c.l.b16 %v360
    %v1789 = vunpack.c.h.b16 %v360
    %v1790 = vunpack.c.l.b16 %v361
    %v1791 = vunpack.c.h.b16 %v361
    %v1792 = vunpack.c.l.b16 %v362
    %v1793 = vunpack.c.l.b16 %v363
    %v1794 = vunpack.c.h.b16 %v363
    %v1795 = vunpack.c.l.b16 %v364
    %v1796 = vunpack.c.h.b16 %v364
    %v1797 = vunpack.c.l.b16 %v365
    %v1798 = vunpack.c.l.b16 %v366
    %v1799 = vunpack.c.h.b16 %v366
    %v1800 = vunpack.c.l.b16 %v367
    %v1801 = vunpack.c.h.b16 %v367
    %v1802 = vunpack.c.l.b16 %v368
    %v1803 = vunpack.c.l.b16 %v369
    %v1804 = vunpack.c.h.b16 %v369
    %v1805 = vunpack.c.l.b16 %v370
    %v1806 = vunpack.c.h.b16 %v370
    %v1807 = vunpack.c.l.b16 %v371
    %v1808 = vunpack.c.l.b16 %v372
    %v1809 = vunpack.c.h.b16 %v372
    %v1810 = vunpack.c.l.b16 %v373
    %v1811 = vunpack.c.h.b16 %v373
    %v1812 = vunpack.c.l.b16 %v374
    %v1813 = vunpack.c.l.b16 %v375
    %v1814 = vunpack.c.h.b16 %v375
    %v1815 = vunpack.c.l.b16 %v376
    %v1816 = vunpack.c.h.b16 %v376
    %v1817 = vunpack.c.l.b16 %v377
    %v1818 = vunpack.c.l.b16 %v378
    %v1819 = vunpack.c.h.b16 %v378
    %v1820 = vunpack.c.l.b16 %v379
    %v1821 = vunpack.c.h.b16 %v379
    %v1822 = vunpack.c.l.b16 %v380
    %v1823 = vunpack.c.l.b16 %v381
    %v1824 = vunpack.c.h.b16 %v381
    %v1825 = vunpack.c.l.b16 %v382
    %v1826 = vunpack.c.h.b16 %v382
    %v1827 = vunpack.c.l.b16 %v383
    %v1828 = vunpack.c.l.b16 %v384
    %v1829 = vunpack.c.h.b16 %v384
    %v1830 = vunpack.c.l.b16 %v385
    %v1831 = vunpack.c.h.b16 %v385
    %v1832 = vunpack.c.l.b16 %v386
    %v1833 = vunpack.c.l.b16 %v387
    %v1834 = vunpack.c.h.b16 %v387
    %v1835 = vunpack.c.l.b16 %v388
    %v1836 = vunpack.c.h.b16 %v388
    %v1837 = vunpack.c.l.b16 %v389
    %v1838 = vunpack.c.l.b16 %v390
    %v1839 = vunpack.c.h.b16 %v390
    %v1840 = vunpack.c.l.b16 %v391
    %v1841 = vunpack.c.h.b16 %v391
    %v1842 = vunpack.c.l.b16 %v392
    %v1843 = vunpack.c.l.b16 %v393
    %v1844 = vunpack.c.h.b16 %v393
    %v1845 = vunpack.c.l.b16 %v394
    %v1846 = vunpack.c.h.b16 %v394
    %v1847 = vunpack.c.l.b16 %v395
    %v1848 = vunpack.c.l.b16 %v396
    %v1849 = vunpack.c.h.b16 %v396
    %v1850 = vunpack.c.l.b16 %v397
    %v1851 = vunpack.c.h.b16 %v397
    %v1852 = vunpack.c.l.b16 %v398
    %v1853 = vunpack.c.l.b16 %v399
    %v1854 = vunpack.c.h.b16 %v399
    %v1855 = vunpack.c.l.b16 %v400
    %v1856 = vunpack.c.h.b16 %v400
    %v1857 = vunpack.c.l.b16 %v401
    %v1858 = vunpack.c.l.b16 %v402
    %v1859 = vunpack.c.h.b16 %v402
    %v1860 = vunpack.c.l.b16 %v403
    %v1861 = vunpack.c.h.b16 %v403
    %v1862 = vunpack.c.l.b16 %v404
    %v1863 = vunpack.c.l.b16 %v405
    %v1864 = vunpack.c.h.b16 %v405
    %v1865 = vunpack.c.l.b16 %v406
    %v1866 = vunpack.c.h.b16 %v406
    %v1867 = vunpack.c.l.b16 %v407
    %v1868 = vunpack.c.l.b16 %v408
    %v1869 = vunpack.c.h.b16 %v408
    %v1870 = vunpack.c.l.b16 %v409
    %v1871 = vunpack.c.h.b16 %v409
    %v1872 = vunpack.c.l.b16 %v410
    %v1873 = vunpack.c.l.b16 %v411
    %v1874 = vunpack.c.h.b16 %v411
    %v1875 = vunpack.c.l.b16 %v412
    %v1876 = vunpack.c.h.b16 %v412
    %v1877 = vunpack.c.l.b16 %v413
    %v1878 = vunpack.c.l.b16 %v414
    %v1879 = vunpack.c.h.b16 %v414
    %v1880 = vunpack.c.l.b16 %v415
    %v1881 = vunpack.c.h.b16 %v415
    %v1882 = vunpack.c.l.b16 %v416
    %v1883 = vunpack.c.l.b16 %v417
    %v1884 = vunpack.c.h.b16 %v417
    %v1885 = vunpack.c.l.b16 %v418
    %v1886 = vunpack.c.h.b16 %v418
    %v1887 = vunpack.c.l.b16 %v419
    %v1888 = vunpack.c.l.b16 %v420
    %v1889 = vunpack.c.h.b16 %v420
    %v1890 = vunpack.c.l.b16 %v421
    %v1891 = vunpack.c.h.b16 %v421
    %v1892 = vunpack.c.l.b16 %v422
    %v1893 = vunpack.c.l.b16 %v423
    %v1894 = vunpack.c.h.b16 %v423
    %v1895 = vunpack.c.l.b16 %v424
    %v1896 = vunpack.c.h.b16 %v424
    %v1897 = vunpack.c.l.b16 %v425
    %v1898 = vunpack.c.l.b16 %v426
    %v1899 = vunpack.c.h.b16 %v426
    %v1900 = vunpack.c.l.b16 %v427
    %v1901 = vunpack.c.h.b16 %v427
    %v1902 = vunpack.c.l.b16 %v428
    %v1903 = vunpack.c.l.b16 %v429
    %v1904 = vunpack.c.h.b16 %v429
    %v1905 = vunpack.c.l.b16 %v430
    %v1906 = vunpack.c.h.b16 %v430
    %v1907 = vunpack.c.l.b16 %v431
    %v1908 = vunpack.c.l.b16 %v432
    %v1909 = vunpack.c.h.b16 %v432
    %v1910 = vunpack.c.l.b16 %v433
    %v1911 = vunpack.c.h.b16 %v433
    %v1912 = vunpack.c.l.b16 %v434
    %v1913 = vunpack.c.l.b16 %v435
    %v1914 = vunpack.c.h.b16 %v435
    %v1915 = vunpack.c.l.b16 %v436
    %v1916 = vunpack.c.h.b16 %v436
    %v1917 = vunpack.c.l.b16 %v437
    %v1918 = vunpack.c.l.b16 %v438
    %v1919 = vunpack.c.h.b16 %v438
    %v1920 = vunpack.c.l.b16 %v439
    %v1921 = vunpack.c.h.b16 %v439
    %v1922 = vunpack.c.l.b16 %v440
    %v1923 = vunpack.c.l.b16 %v441
    %v1924 = vunpack.c.h.b16 %v441
    %v1925 = vunpack.c.l.b16 %v442
    %v1926 = vunpack.c.h.b16 %v442
    %v1927 = vunpack.c.l.b16 %v443
    %v1928 = vunpack.c.l.b16 %v444
    %v1929 = vunpack.c.h.b16 %v444
    %v1930 = vunpack.c.l.b16 %v445
    %v1931 = vunpack.c.h.b16 %v445
    %v1932 = vunpack.c.l.b16 %v446
    %v1933 = vunpack.c.l.b16 %v447
    %v1934 = vunpack.c.h.b16 %v447
    %v1935 = vunpack.c.l.b16 %v448
    %v1936 = vunpack.c.h.b16 %v448
    %v1937 = vunpack.c.l.b16 %v449
    %v1938 = vunpack.c.l.b16 %v450
    %v1939 = vunpack.c.h.b16 %v450
    %v1940 = vunpack.c.l.b16 %v451
    %v1941 = vunpack.c.h.b16 %v451
    %v1942 = vunpack.c.l.b16 %v452
    %v1943 = vunpack.c.l.b16 %v453
    %v1944 = vunpack.c.h.b16 %v453
    %v1945 = vunpack.c.l.b16 %v454
    %v1946 = vunpack.c.h.b16 %v454
    %v1947 = vunpack.c.l.b16 %v455
    %v1948 = vunpack.c.l.b16 %v456
    %v1949 = vunpack.c.h.b16 %v456
    %v1950 = vunpack.c.l.b16 %v457
    %v1951 = vunpack.c.h.b16 %v457
    %v1952 = vunpack.c.l.b16 %v458
    %v1953 = vunpack.c.l.b16 %v459
    %v1954 = vunpack.c.h.b16 %v459
    %v1955 = vunpack.c.l.b16 %v460
    %v1956 = vunpack.c.h.b16 %v460
    %v1957 = vunpack.c.l.b16 %v461
    %v1958 = vunpack.c.l.b16 %v462
    %v1959 = vunpack.c.h.b16 %v462
    %v1960 = vunpack.c.l.b16 %v463
    %v1961 = vunpack.c.h.b16 %v463
    %v1962 = vunpack.c.l.b16 %v464
    %v1963 = vunpack.c.l.b16 %v465
    %v1964 = vunpack.c.h.b16 %v465
    %v1965 = vunpack.c.l.b16 %v466
    %v1966 = vunpack.c.h.b16 %v466
    %v1967 = vunpack.c.l.b16 %v467
    %v1968 = vunpack.c.l.b16 %v468
    %v1969 = vunpack.c.h.b16 %v468
    %v1970 = vunpack.c.l.b16 %v469
    %v1971 = vunpack.c.h.b16 %v469
    %v1972 = vunpack.c.l.b16 %v470
    %v1973 = vunpack.c.l.b16 %v471
    %v1974 = vunpack.c.h.b16 %v471
    %v1975 = vunpack.c.l.b16 %v472
    %v1976 = vunpack.c.h.b16 %v472
    %v1977 = vunpack.c.l.b16 %v473
    %v1978 = vunpack.c.l.b16 %v474
    %v1979 = vunpack.c.h.b16 %v474
    %v1980 = vunpack.c.l.b16 %v475
    %v1981 = vunpack.c.h.b16 %v475
    %v1982 = vunpack.c.l.b16 %v476
    %v1983 = vunpack.c.l.b16 %v477
    %v1984 = vunpack.c.h.b16 %v477
    %v1985 = vunpack.c.l.b16 %v478
    %v1986 = vunpack.c.h.b16 %v478
    %v1987 = vunpack.c.l.b16 %v479
    %v1988 = vunpack.c.l.b16 %v480
    %v1989 = vunpack.c.h.b16 %v480
    %v1990 = vunpack.c.l.b16 %v481
    %v1991 = vunpack.c.h.b16 %v481
    %v1992 = vunpack.c.l.b16 %v482
    %v1993 = vunpack.c.l.b16 %v483
    %v1994 = vunpack.c.h.b16 %v483
    %v1995 = vunpack.c.l.b16 %v484
    %v1996 = vunpack.c.h.b16 %v484
    %v1997 = vunpack.c.l.b16 %v485
    %v1998 = vunpack.c.l.b16 %v486
    %v1999 = vunpack.c.h.b16 %v486
    %v2000 = vunpack.c.l.b16 %v487
    %v2001 = vunpack.c.h.b16 %v487
    %v2002 = vunpack.c.l.b16 %v488
    %v2003 = vunpack.c.l.b16 %v489
    %v2004 = vunpack.c.h.b16 %v489
    %v2005 = vunpack.c.l.b16 %v490
    %v2006 = vunpack.c.h.b16 %v490
    %v2007 = vunpack.c.l.b16 %v491
    %v2008 = vunpack.c.l.b16 %v492
    %v2009 = vunpack.c.h.b16 %v492
    %v2010 = vunpack.c.l.b16 %v493
    %v2011 = vunpack.c.h.b16 %v493
    %v2012 = vunpack.c.l.b16 %v494
    %v2013 = vunpack.c.l.b16 %v495
    %v2014 = vunpack.c.h.b16 %v495
    %v2015 = vunpack.c.l.b16 %v496
    %v2016 = vunpack.c.h.b16 %v496
    %v2017 = vunpack.c.l.b16 %v497
    %v2018 = vunpack.c.l.b16 %v498
    %v2019 = vunpack.c.h.b16 %v498
    %v2020 = vunpack.c.l.b16 %v499
    %v2021 = vunpack.c.h.b16 %v499
    %v2022 = vunpack.c.l.b16 %v500
    %v2023 = vunpack.c.l.b16 %v501
    %v2024 = vunpack.c.h.b16 %v501
    %v2025 = vunpack.c.l.b16 %v502
    %v2026 = vunpack.c.h.b16 %v502
    %v2027 = vunpack.c.l.b16 %v503
    %v2028 = vunpack.c.l.b16 %v504
    %v2029 = vunpack.c.h.b16 %v504
    %v2030 = vunpack.c.l.b16 %v505
    %v2031 = vunpack.c.h.b16 %v505
    %v2032 = vunpack.c.l.b16 %v506
    %v2033 = vunpack.c.l.b16 %v507
    %v2034 = vunpack.c.h.b16 %v507
    %v2035 = vunpack.c.l.b16 %v508
    %v2036 = vunpack.c.h.b16 %v508
    %v2037 = vunpack.c.l.b16 %v509
    %v2038 = vunpack.c.l.b16 %v510
    %v2039 = vunpack.c.h.b16 %v510
    %v2040 = vunpack.c.l.b16 %v511
    %v2041 = vunpack.c.h.b16 %v511
    %v2042 = vunpack.c.l.b16 %v512
    %v2043 = vunpack.c.l.b16 %v513
    %v2044 = vunpack.c.h.b16 %v513
    %v2045 = vunpack.c.l.b16 %v514
    %v2046 = vunpack.c.h.b16 %v514
    %v2047 = vunpack.c.l.b16 %v515
    %v2048 = vunpack.c.l.b16 %v516
    %v2049 = vunpack.c.h.b16 %v516
    %v2050 = vunpack.c.l.b16 %v517
    %v2051 = vunpack.c.h.b16 %v517
    %v2052 = vunpack.c.l.b16 %v518
    %v2053 = vunpack.c.l.b16 %v519
    %v2054 = vunpack.c.h.b16 %v519
    %v2055 = vunpack.c.l.b16 %v520
    %v2056 = vunpack.c.h.b16 %v520
    %v2057 = vunpack.c.l.b16 %v521
    %v2058 = vunpack.c.l.b16 %v522
    %v2059 = vunpack.c.h.b16 %v522
    %v2060 = vunpack.c.l.b16 %v523
    %v2061 = vunpack.c.h.b16 %v523
    %v2062 = vunpack.c.l.b16 %v524
    %v2063 = vunpack.c.l.b16 %v525
    %v2064 = vunpack.c.h.b16 %v525
    %v2065 = vunpack.c.l.b16 %v526
    %v2066 = vunpack.c.h.b16 %v526
    %v2067 = vunpack.c.l.b16 %v527
    %v2068 = vunpack.c.l.b16 %v528
    %v2069 = vunpack.c.h.b16 %v528
    %v2070 = vunpack.c.l.b16 %v529
    %v2071 = vunpack.c.h.b16 %v529
    %v2072 = vunpack.c.l.b16 %v530
    %v2073 = vunpack.c.l.b16 %v531
    %v2074 = vunpack.c.h.b16 %v531
    %v2075 = vunpack.c.l.b16 %v532
    %v2076 = vunpack.c.h.b16 %v532
    %v2077 = vunpack.c.l.b16 %v533
    %v2078 = vunpack.c.l.b16 %v534
    %v2079 = vunpack.c.h.b16 %v534
    %v2080 = vunpack.c.l.b16 %v535
    %v2081 = vunpack.c.h.b16 %v535
    %v2082 = vunpack.c.l.b16 %v536
    %v2083 = vunpack.c.l.b16 %v537
    %v2084 = vunpack.c.h.b16 %v537
    %v2085 = vunpack.c.l.b16 %v538
    %v2086 = vunpack.c.h.b16 %v538
    %v2087 = vunpack.c.l.b16 %v539
    %v2088 = vunpack.c.l.b16 %v540
    %v2089 = vunpack.c.h.b16 %v540
    %v2090 = vunpack.c.l.b16 %v541
    %v2091 = vunpack.c.h.b16 %v541
    %v2092 = vunpack.c.l.b16 %v542
    %v2093 = vunpack.c.l.b16 %v543
    %v2094 = vunpack.c.h.b16 %v543
    %v2095 = vunpack.c.l.b16 %v544
    %v2096 = vunpack.c.h.b16 %v544
    %v2097 = vunpack.c.l.b16 %v545
    %v2098 = vunpack.c.l.b16 %v546
    %v2099 = vunpack.c.h.b16 %v546
    %v2100 = vunpack.c.l.b16 %v547
    %v2101 = vunpack.c.h.b16 %v547
    %v2102 = vunpack.c.l.b16 %v548
    %v2103 = vunpack.c.l.b16 %v549
    %v2104 = vunpack.c.h.b16 %v549
    %v2105 = vunpack.c.l.b16 %v550
    %v2106 = vunpack.c.h.b16 %v550
    %v2107 = vunpack.c.l.b16 %v551
    %v2108 = vunpack.c.l.b16 %v552
    %v2109 = vunpack.c.h.b16 %v552
    %v2110 = vunpack.c.l.b16 %v553
    %v2111 = vunpack.c.h.b16 %v553
    %v2112 = vunpack.c.l.b16 %v554
    %v2113 = vunpack.c.l.b16 %v555
    %v2114 = vunpack.c.h.b16 %v555
    %v2115 = vunpack.c.l.b16 %v556
    %v2116 = vunpack.c.h.b16 %v556
    %v2117 = vunpack.c.l.b16 %v557
    %v2118 = vunpack.c.l.b16 %v558
    %v2119 = vunpack.c.h.b16 %v558
    %v2120 = vunpack.c.l.b16 %v559
    %v2121 = vunpack.c.h.b16 %v559
    %v2122 = vunpack.c.l.b16 %v560
    %v2123 = vunpack.c.l.b16 %v561
    %v2124 = vunpack.c.h.b16 %v561
    %v2125 = vunpack.c.l.b16 %v562
    %v2126 = vunpack.c.h.b16 %v562
    %v2127 = vunpack.c.l.b16 %v563
    %v2128 = vunpack.c.l.b16 %v564
    %v2129 = vunpack.c.h.b16 %v564
    %v2130 = vunpack.c.l.b16 %v565
    %v2131 = vunpack.c.h.b16 %v565
    %v2132 = vunpack.c.l.b16 %v566
    %v2133 = vunpack.c.l.b16 %v567
    %v2134 = vunpack.c.h.b16 %v567
    %v2135 = vunpack.c.l.b16 %v568
    %v2136 = vunpack.c.h.b16 %v568
    %v2137 = vunpack.c.l.b16 %v569
    %v2138 = vunpack.c.l.b16 %v570
    %v2139 = vunpack.c.h.b16 %v570
    %v2140 = vunpack.c.l.b16 %v571
    %v2141 = vunpack.c.h.b16 %v571
    %v2142 = vunpack.c.l.b16 %v572
    %v2143 = vunpack.c.l.b16 %v573
    %v2144 = vunpack.c.h.b16 %v573
    %v2145 = vunpack.c.l.b16 %v574
    %v2146 = vunpack.c.h.b16 %v574
    %v2147 = vunpack.c.l.b16 %v575
    %v2148 = vunpack.c.l.b16 %v576
    %v2149 = vunpack.c.h.b16 %v576
    %v2150 = vunpack.c.l.b16 %v577
    %v2151 = vunpack.c.h.b16 %v577
    %v2152 = vunpack.c.l.b16 %v578
    %v2153 = vunpack.c.l.b16 %v579
    %v2154 = vunpack.c.h.b16 %v579
    %v2155 = vunpack.c.l.b16 %v580
    %v2156 = vunpack.c.h.b16 %v580
    %v2157 = vunpack.c.l.b16 %v581
    %v2158 = vunpack.c.l.b16 %v582
    %v2159 = vunpack.c.h.b16 %v582
    %v2160 = vunpack.c.l.b16 %v583
    %v2161 = vunpack.c.h.b16 %v583
    %v2162 = vunpack.c.l.b16 %v584
    %v2163 = vunpack.c.l.b16 %v585
    %v2164 = vunpack.c.h.b16 %v585
    %v2165 = vunpack.c.l.b16 %v586
    %v2166 = vunpack.c.h.b16 %v586
    %v2167 = vunpack.c.l.b16 %v587
    %v2168 = vunpack.c.l.b16 %v588
    %v2169 = vunpack.c.h.b16 %v588
    %v2170 = vunpack.c.l.b16 %v589
    %v2171 = vunpack.c.h.b16 %v589
    %v2172 = vunpack.c.l.b16 %v590
    %v2173 = vunpack.c.l.b16 %v591
    %v2174 = vunpack.c.h.b16 %v591
    %v2175 = vunpack.c.l.b16 %v592
    %v2176 = vunpack.c.h.b16 %v592
    %v2177 = vunpack.c.l.b16 %v593
    %v2178 = vunpack.c.l.b16 %v594
    %v2179 = vunpack.c.h.b16 %v594
    %v2180 = vunpack.c.l.b16 %v595
    %v2181 = vunpack.c.h.b16 %v595
    %v2182 = vunpack.c.l.b16 %v596
    %v2183 = vunpack.c.l.b16 %v597
    %v2184 = vunpack.c.h.b16 %v597
    %v2185 = vunpack.c.l.b16 %v598
    %v2186 = vunpack.c.h.b16 %v598
    %v2187 = vunpack.c.l.b16 %v599
    %v2188 = vunpack.c.l.b16 %v600
    %v2189 = vunpack.c.h.b16 %v600
    %v2190 = vunpack.c.l.b16 %v601
    %v2191 = vunpack.c.h.b16 %v601
    %v2192 = vunpack.c.l.b16 %v602
    %v2193 = vunpack.c.l.b16 %v603
    %v2194 = vunpack.c.h.b16 %v603
    %v2195 = vunpack.c.l.b16 %v604
    %v2196 = vunpack.c.h.b16 %v604
    %v2197 = vunpack.c.l.b16 %v605
    %v2198 = vunpack.c.l.b16 %v606
    %v2199 = vunpack.c.h.b16 %v606
    %v2200 = vunpack.c.l.b16 %v607
    %v2201 = vunpack.c.h.b16 %v607
    %v2202 = vunpack.c.l.b16 %v608
    %v2203 = vunpack.c.l.b16 %v609
    %v2204 = vunpack.c.h.b16 %v609
    %v2205 = vunpack.c.l.b16 %v610
    %v2206 = vunpack.c.h.b16 %v610
    %v2207 = vunpack.c.l.b16 %v611
    %v2208 = vunpack.c.l.b16 %v612
    %v2209 = vunpack.c.h.b16 %v612
    %v2210 = vunpack.c.l.b16 %v613
    %v2211 = vunpack.c.h.b16 %v613
    %v2212 = vunpack.c.l.b16 %v614
    %v2213 = vunpack.c.l.b16 %v615
    %v2214 = vunpack.c.h.b16 %v615
    %v2215 = vunpack.c.l.b16 %v616
    %v2216 = vunpack.c.h.b16 %v616
    %v2217 = vunpack.c.l.b16 %v617
    %v2218 = vunpack.c.l.b16 %v618
    %v2219 = vunpack.c.h.b16 %v618
    %v2220 = vunpack.c.l.b16 %v619
    %v2221 = vunpack.c.h.b16 %v619
    %v2222 = vunpack.c.l.b16 %v620
    %v2223 = vunpack.c.l.b16 %v621
    %v2224 = vunpack.c.h.b16 %v621
    %v2225 = vunpack.c.l.b16 %v622
    %v2226 = vunpack.c.h.b16 %v622
    %v2227 = vunpack.c.l.b16 %v623
    %v2228 = vunpack.c.l.b16 %v624
    %v2229 = vunpack.c.h.b16 %v624
    %v2230 = vunpack.c.l.b16 %v625
    %v2231 = vunpack.c.h.b16 %v625
    %v2232 = vunpack.c.l.b16 %v626
    %v2233 = vunpack.c.l.b16 %v627
    %v2234 = vunpack.c.h.b16 %v627
    %v2235 = vunpack.c.l.b16 %v628
    %v2236 = vunpack.c.h.b16 %v628
    %v2237 = vunpack.c.l.b16 %v629
    %v2238 = vunpack.c.l.b16 %v630
    %v2239 = vunpack.c.h.b16 %v630
    %v2240 = vunpack.c.l.b16 %v631
    %v2241 = vunpack.c.h.b16 %v631
    %v2242 = vunpack.c.l.b16 %v632
    %v2243 = vunpack.c.l.b16 %v633
    %v2244 = vunpack.c.h.b16 %v633
    %v2245 = vunpack.c.l.b16 %v634
    %v2246 = vunpack.c.h.b16 %v634
    %v2247 = vunpack.c.l.b16 %v635
    %v2248 = vunpack.c.l.b16 %v636
    %v2249 = vunpack.c.h.b16 %v636
    %v2250 = vunpack.c.l.b16 %v637
    %v2251 = vunpack.c.h.b16 %v637
    %v2252 = vunpack.c.l.b16 %v638
    %v2253 = vunpack.c.l.b16 %v639
    %v2254 = vunpack.c.h.b16 %v639
    %v2255 = vunpack.c.l.b16 %v640
    %v2256 = vunpack.c.h.b16 %v640
    %v2257 = vunpack.c.l.b16 %v641
    %v2258 = vunpack.c.l.b16 %v642
    %v2259 = vunpack.c.h.b16 %v642
    %v2260 = vunpack.c.l.b16 %v643
    %v2261 = vunpack.c.h.b16 %v643
    %v2262 = vunpack.c.l.b16 %v644
    %v2263 = vunpack.c.l.b16 %v645
    %v2264 = vunpack.c.h.b16 %v645
    %v2265 = vunpack.c.l.b16 %v646
    %v2266 = vunpack.c.h.b16 %v646
    %v2267 = vunpack.c.l.b16 %v647
    %v2268 = vunpack.c.l.b16 %v648
    %v2269 = vunpack.c.h.b16 %v648
    %v2270 = vunpack.c.l.b16 %v649
    %v2271 = vunpack.c.h.b16 %v649
    %v2272 = vunpack.c.l.b16 %v650
    %v2273 = vunpack.c.l.b16 %v651
    %v2274 = vunpack.c.h.b16 %v651
    %v2275 = vunpack.c.l.b16 %v652
    %v2276 = vunpack.c.h.b16 %v652
    %v2277 = vunpack.c.l.b16 %v653
    %v2278 = vunpack.c.l.b16 %v654
    %v2279 = vunpack.c.h.b16 %v654
    %v2280 = vunpack.c.l.b16 %v655
    %v2281 = vunpack.c.h.b16 %v655
    %v2282 = vunpack.c.l.b16 %v656
    %v2283 = vunpack.c.l.b16 %v657
    %v2284 = vunpack.c.h.b16 %v657
    %v2285 = vunpack.c.l.b16 %v658
    %v2286 = vunpack.c.h.b16 %v658
    %v2287 = vunpack.c.l.b16 %v659
    %v2288 = vunpack.c.l.b16 %v660
    %v2289 = vunpack.c.h.b16 %v660
    %v2290 = vunpack.c.l.b16 %v661
    %v2291 = vunpack.c.h.b16 %v661
    %v2292 = vunpack.c.l.b16 %v662
    %v2293 = vunpack.c.l.b16 %v663
    %v2294 = vunpack.c.h.b16 %v663
    %v2295 = vunpack.c.l.b16 %v664
    %v2296 = vunpack.c.h.b16 %v664
    %v2297 = vunpack.c.l.b16 %v665
    %v2298 = vunpack.c.l.b16 %v666
    %v2299 = vunpack.c.h.b16 %v666
    %v2300 = vunpack.c.l.b16 %v667
    %v2301 = vunpack.c.h.b16 %v667
    %v2302 = vunpack.c.l.b16 %v668
    %v2303 = vunpack.c.l.b16 %v669
    %v2304 = vunpack.c.h.b16 %v669
    %v2305 = vunpack.c.l.b16 %v670
    %v2306 = vunpack.c.h.b16 %v670
    %v2307 = vunpack.c.l.b16 %v671
    %v2308 = vunpack.c.l.b16 %v672
    %v2309 = vunpack.c.h.b16 %v672
    %v2310 = vunpack.c.l.b16 %v673
    %v2311 = vunpack.c.h.b16 %v673
    %v2312 = vunpack.c.l.b16 %v674
    %v2313 = vunpack.c.l.b16 %v675
    %v2314 = vunpack.c.h.b16 %v675
    %v2315 = vunpack.c.l.b16 %v676
    %v2316 = vunpack.c.h.b16 %v676
    %v2317 = vunpack.c.l.b16 %v677
    %v2318 = vunpack.c.l.b16 %v678
    %v2319 = vunpack.c.h.b16 %v678
    %v2320 = vunpack.c.l.b16 %v679
    %v2321 = vunpack.c.h.b16 %v679
    %v2322 = vunpack.c.l.b16 %v680
    %v2323 = vunpack.c.l.b16 %v681
    %v2324 = vunpack.c.h.b16 %v681
    %v2325 = vunpack.c.l.b16 %v682
    %v2326 = vunpack.c.h.b16 %v682
    %v2327 = vunpack.c.l.b16 %v683
    %v2328 = vunpack.c.l.b16 %v684
    %v2329 = vunpack.c.h.b16 %v684
    %v2330 = vunpack.c.l.b16 %v685
    %v2331 = vunpack.c.h.b16 %v685
    %v2332 = vunpack.c.l.b16 %v686
    %v2333 = vunpack.c.l.b16 %v687
    %v2334 = vunpack.c.h.b16 %v687
    %v2335 = vunpack.c.l.b16 %v688
    %v2336 = vunpack.c.h.b16 %v688
    %v2337 = vunpack.c.l.b16 %v689
    %v2338 = vunpack.c.l.b16 %v690
    %v2339 = vunpack.c.h.b16 %v690
    %v2340 = vunpack.c.l.b16 %v691
    %v2341 = vunpack.c.h.b16 %v691
    %v2342 = vunpack.c.l.b16 %v692
    %v2343 = vpack.c.b16 %v1388, %v1383
    %v2344 = vpack.c.b16 %v1389, %v1384
    %v2345 = vpack.c.b16 %v1390, %v1385
    %v2346 = vpack.c.b16 %v1391, %v1386
    %v2347 = vpack.c.b16 %v1392, %v1387
    %v2348 = vpack.c.b16 %v1398, %v1393
    %v2349 = vpack.c.b16 %v1399, %v1394
    %v2350 = vpack.c.b16 %v1400, %v1395
    %v2351 = vpack.c.b16 %v1401, %v1396
    %v2352 = vpack.c.b16 %v1402, %v1397
    %v2353 = vpack.c.b16 %v1408, %v1403
    %v2354 = vpack.c.b16 %v1409, %v1404
    %v2355 = vpack.c.b16 %v1410, %v1405
    %v2356 = vpack.c.b16 %v1411, %v1406
    %v2357 = vpack.c.b16 %v1412, %v1407
    %v2358 = vpack.c.b16 %v1418, %v1413
    %v2359 = vpack.c.b16 %v1419, %v1414
    %v2360 = vpack.c.b16 %v1420, %v1415
    %v2361 = vpack.c.b16 %v1421, %v1416
    %v2362 = vpack.c.b16 %v1422, %v1417
    %v2363 = vpack.c.b16 %v1428, %v1423
    %v2364 = vpack.c.b16 %v1429, %v1424
    %v2365 = vpack.c.b16 %v1430, %v1425
    %v2366 = vpack.c.b16 %v1431, %v1426
    %v2367 = vpack.c.b16 %v1432, %v1427
    %v2368 = vpack.c.b16 %v1438, %v1433
    %v2369 = vpack.c.b16 %v1439, %v1434
    %v2370 = vpack.c.b16 %v1440, %v1435
    %v2371 = vpack.c.b16 %v1441, %v1436
    %v2372 = vpack.c.b16 %v1442, %v1437
    %v2373 = vpack.c.b16 %v1448, %v1443
    %v2374 = vpack.c.b16 %v1449, %v1444
    %v2375 = vpack.c.b16 %v1450, %v1445
    %v2376 = vpack.c.b16 %v1451, %v1446
    %v2377 = vpack.c.b16 %v1452, %v1447
    %v2378 = vpack.c.b16 %v1458, %v1453
    %v2379 = vpack.c.b16 %v1459, %v1454
    %v2380 = vpack.c.b16 %v1460, %v1455
    %v2381 = vpack.c.b16 %v1461, %v1456
    %v2382 = vpack.c.b16 %v1462, %v1457
    %v2383 = vpack.c.b16 %v1468, %v1463
    %v2384 = vpack.c.b16 %v1469, %v1464
    %v2385 = vpack.c.b16 %v1470, %v1465
    %v2386 = vpack.c.b16 %v1471, %v1466
    %v2387 = vpack.c.b16 %v1472, %v1467
    %v2388 = vpack.c.b16 %v1478, %v1473
    %v2389 = vpack.c.b16 %v1479, %v1474
    %v2390 = vpack.c.b16 %v1480, %v1475
    %v2391 = vpack.c.b16 %v1481, %v1476
    %v2392 = vpack.c.b16 %v1482, %v1477
    %v2393 = vpack.c.b16 %v1488, %v1483
    %v2394 = vpack.c.b16 %v1489, %v1484
    %v2395 = vpack.c.b16 %v1490, %v1485
    %v2396 = vpack.c.b16 %v1491, %v1486
    %v2397 = vpack.c.b16 %v1492, %v1487
    %v2398 = vpack.c.b16 %v1498, %v1493
    %v2399 = vpack.c.b16 %v1499, %v1494
    %v2400 = vpack.c.b16 %v1500, %v1495
    %v2401 = vpack.c.b16 %v1501, %v1496
    %v2402 = vpack.c.b16 %v1502, %v1497
    %v2403 = vpack.c.b16 %v1508, %v1503
    %v2404 = vpack.c.b16 %v1509, %v1504
    %v2405 = vpack.c.b16 %v1510, %v1505
    %v2406 = vpack.c.b16 %v1511, %v1506
    %v2407 = vpack.c.b16 %v1512, %v1507
    %v2408 = vpack.c.b16 %v1518, %v1513
    %v2409 = vpack.c.b16 %v1519, %v1514
    %v2410 = vpack.c.b16 %v1520, %v1515
    %v2411 = vpack.c.b16 %v1521, %v1516
    %v2412 = vpack.c.b16 %v1522, %v1517
    %v2413 = vpack.c.b16 %v1528, %v1523
    %v2414 = vpack.c.b16 %v1529, %v1524
    %v2415 = vpack.c.b16 %v1530, %v1525
    %v2416 = vpack.c.b16 %v1531, %v1526
    %v2417 = vpack.c.b16 %v1532, %v1527
    %v2418 = vpack.c.b16 %v1538, %v1533
    %v2419 = vpack.c.b16 %v1539, %v1534
    %v2420 = vpack.c.b16 %v1540, %v1535
    %v2421 = vpack.c.b16 %v1541, %v1536
    %v2422 = vpack.c.b16 %v1542, %v1537
    %v2423 = vpack.c.b16 %v1548, %v1543
    %v2424 = vpack.c.b16 %v1549, %v1544
    %v2425 = vpack.c.b16 %v1550, %v1545
    %v2426 = vpack.c.b16 %v1551, %v1546
    %v2427 = vpack.c.b16 %v1552, %v1547
    %v2428 = vpack.c.b16 %v1558, %v1553
    %v2429 = vpack.c.b16 %v1559, %v1554
    %v2430 = vpack.c.b16 %v1560, %v1555
    %v2431 = vpack.c.b16 %v1561, %v1556
    %v2432 = vpack.c.b16 %v1562, %v1557
    %v2433 = vpack.c.b16 %v1568, %v1563
    %v2434 = vpack.c.b16 %v1569, %v1564
    %v2435 = vpack.c.b16 %v1570, %v1565
    %v2436 = vpack.c.b16 %v1571, %v1566
    %v2437 = vpack.c.b16 %v1572, %v1567
    %v2438 = vpack.c.b16 %v1578, %v1573
    %v2439 = vpack.c.b16 %v1579, %v1574
    %v2440 = vpack.c.b16 %v1580, %v1575
    %v2441 = vpack.c.b16 %v1581, %v1576
    %v2442 = vpack.c.b16 %v1582, %v1577
    %v2443 = vpack.c.b16 %v1588, %v1583
    %v2444 = vpack.c.b16 %v1589, %v1584
    %v2445 = vpack.c.b16 %v1590, %v1585
    %v2446 = vpack.c.b16 %v1591, %v1586
    %v2447 = vpack.c.b16 %v1592, %v1587
    %v2448 = vpack.c.b16 %v1598, %v1593
    %v2449 = vpack.c.b16 %v1599, %v1594
    %v2450 = vpack.c.b16 %v1600, %v1595
    %v2451 = vpack.c.b16 %v1601, %v1596
    %v2452 = vpack.c.b16 %v1602, %v1597
    %v2453 = vpack.c.b16 %v1608, %v1603
    %v2454 = vpack.c.b16 %v1609, %v1604
    %v2455 = vpack.c.b16 %v1610, %v1605
    %v2456 = vpack.c.b16 %v1611, %v1606
    %v2457 = vpack.c.b16 %v1612, %v1607
    %v2458 = vpack.c.b16 %v1618, %v1613
    %v2459 = vpack.c.b16 %v1619, %v1614
    %v2460 = vpack.c.b16 %v1620, %v1615
    %v2461 = vpack.c.b16 %v1621, %v1616
    %v2462 = vpack.c.b16 %v1622, %v1617
    %v2463 = vpack.c.b16 %v1628, %v1623
    %v2464 = vpack.c.b16 %v1629, %v1624
    %v2465 = vpack.c.b16 %v1630, %v1625
    %v2466 = vpack.c.b16 %v1631, %v1626
    %v2467 = vpack.c.b16 %v1632, %v1627
    %v2468 = vpack.c.b16 %v1638, %v1633
    %v2469 = vpack.c.b16 %v1639, %v1634
    %v2470 = vpack.c.b16 %v1640, %v1635
    %v2471 = vpack.c.b16 %v1641, %v1636
    %v2472 = vpack.c.b16 %v1642, %v1637
    %v2473 = vpack.c.b16 %v1648, %v1643
    %v2474 = vpack.c.b16 %v1649, %v1644
    %v2475 = vpack.c.b16 %v1650, %v1645
    %v2476 = vpack.c.b16 %v1651, %v1646
    %v2477 = vpack.c.b16 %v1652, %v1647
    %v2478 = vpack.c.b16 %v1658, %v1653
    %v2479 = vpack.c.b16 %v1659, %v1654
    %v2480 = vpack.c.b16 %v1660, %v1655
    %v2481 = vpack.c.b16 %v1661, %v1656
    %v2482 = vpack.c.b16 %v1662, %v1657
    %v2483 = vpack.c.b16 %v1668, %v1663
    %v2484 = vpack.c.b16 %v1669, %v1664
    %v2485 = vpack.c.b16 %v1670, %v1665
    %v2486 = vpack.c.b16 %v1671, %v1666
    %v2487 = vpack.c.b16 %v1672, %v1667
    %v2488 = vpack.c.b16 %v1678, %v1673
    %v2489 = vpack.c.b16 %v1679, %v1674
    %v2490 = vpack.c.b16 %v1680, %v1675
    %v2491 = vpack.c.b16 %v1681, %v1676
    %v2492 = vpack.c.b16 %v1682, %v1677
    %v2493 = vpack.c.b16 %v1688, %v1683
    %v2494 = vpack.c.b16 %v1689, %v1684
    %v2495 = vpack.c.b16 %v1690, %v1685
    %v2496 = vpack.c.b16 %v1691, %v1686
    %v2497 = vpack.c.b16 %v1692, %v1687
    %v2498 = vpack.c.b16 %v1698, %v1693
    %v2499 = vpack.c.b16 %v1699, %v1694
    %v2500 = vpack.c.b16 %v1700, %v1695
    %v2501 = vpack.c.b16 %v1701, %v1696
    %v2502 = vpack.c.b16 %v1702, %v1697
    %v2503 = vpack.c.b16 %v1708, %v1703
    %v2504 = vpack.c.b16 %v1709, %v1704
    %v2505 = vpack.c.b16 %v1710, %v1705
    %v2506 = vpack.c.b16 %v1711, %v1706
    %v2507 = vpack.c.b16 %v1712, %v1707
    %v2508 = vpack.c.b16 %v1718, %v1713
    %v2509 = vpack.c.b16 %v1719, %v1714
    %v2510 = vpack.c.b16 %v1720, %v1715
    %v2511 = vpack.c.b16 %v1721, %v1716
    %v2512 = vpack.c.b16 %v1722, %v1717
    %v2513 = vpack.c.b16 %v1728, %v1723
    %v2514 = vpack.c.b16 %v1729, %v1724
    %v2515 = vpack.c.b16 %v1730, %v1725
    %v2516 = vpack.c.b16 %v1731, %v1726
    %v2517 = vpack.c.b16 %v1732, %v1727
    %v2518 = vpack.c.b16 %v1738, %v1733
    %v2519 = vpack.c.b16 %v1739, %v1734
    %v2520 = vpack.c.b16 %v1740, %v1735
    %v2521 = vpack.c.b16 %v1741, %v1736
    %v2522 = vpack.c.b16 %v1742, %v1737
    %v2523 = vpack.c.b16 %v1748, %v1743
    %v2524 = vpack.c.b16 %v1749, %v1744
    %v2525 = vpack.c.b16 %v1750, %v1745
    %v2526 = vpack.c.b16 %v1751, %v1746
    %v2527 = vpack.c.b16 %v1752, %v1747
    %v2528 = vpack.c.b16 %v1758, %v1753
    %v2529 = vpack.c.b16 %v1759, %v1754
    %v2530 = vpack.c.b16 %v1760, %v1755
    %v2531 = vpack.c.b16 %v1761, %v1756
    %v2532 = vpack.c.b16 %v1762, %v1757
    %v2533 = vpack.c.b16 %v1768, %v1763
    %v2534 = vpack.c.b16 %v1769, %v1764
    %v2535 = vpack.c.b16 %v1770, %v1765
    %v2536 = vpack.c.b16 %v1771, %v1766
    %v2537 = vpack.c.b16 %v1772, %v1767
    %v2538 = vpack.c.b16 %v1778, %v1773
    %v2539 = vpack.c.b16 %v1779, %v1774
    %v2540 = vpack.c.b16 %v1780, %v1775
    %v2541 = vpack.c.b16 %v1781, %v1776
    %v2542 = vpack.c.b16 %v1782, %v1777
    %v2543 = vpack.c.b16 %v1788, %v1783
    %v2544 = vpack.c.b16 %v1789, %v1784
    %v2545 = vpack.c.b16 %v1790, %v1785
    %v2546 = vpack.c.b16 %v1791, %v1786
    %v2547 = vpack.c.b16 %v1792, %v1787
    %v2548 = vpack.c.b16 %v1798, %v1793
    %v2549 = vpack.c.b16 %v1799, %v1794
    %v2550 = vpack.c.b16 %v1800, %v1795
    %v2551 = vpack.c.b16 %v1801, %v1796
    %v2552 = vpack.c.b16 %v1802, %v1797
    %v2553 = vpack.c.b16 %v1808, %v1803
    %v2554 = vpack.c.b16 %v1809, %v1804
    %v2555 = vpack.c.b16 %v1810, %v1805
    %v2556 = vpack.c.b16 %v1811, %v1806
    %v2557 = vpack.c.b16 %v1812, %v1807
    %v2558 = vpack.c.b16 %v1818, %v1813
    %v2559 = vpack.c.b16 %v1819, %v1814
    %v2560 = vpack.c.b16 %v1820, %v1815
    %v2561 = vpack.c.b16 %v1821, %v1816
    %v2562 = vpack.c.b16 %v1822, %v1817
    %v2563 = vpack.c.b16 %v1828, %v1823
    %v2564 = vpack.c.b16 %v1829, %v1824
    %v2565 = vpack.c.b16 %v1830, %v1825
    %v2566 = vpack.c.b16 %v1831, %v1826
    %v2567 = vpack.c.b16 %v1832, %v1827
    %v2568 = vpack.c.b16 %v1838, %v1833
    %v2569 = vpack.c.b16 %v1839, %v1834
    %v2570 = vpack.c.b16 %v1840, %v1835
    %v2571 = vpack.c.b16 %v1841, %v1836
    %v2572 = vpack.c.b16 %v1842, %v1837
    %v2573 = vpack.c.b16 %v1848, %v1843
    %v2574 = vpack.c.b16 %v1849, %v1844
    %v2575 = vpack.c.b16 %v1850, %v1845
    %v2576 = vpack.c.b16 %v1851, %v1846
    %v2577 = vpack.c.b16 %v1852, %v1847
    %v2578 = vpack.c.b16 %v1858, %v1853
    %v2579 = vpack.c.b16 %v1859, %v1854
    %v2580 = vpack.c.b16 %v1860, %v1855
    %v2581 = vpack.c.b16 %v1861, %v1856
    %v2582 = vpack.c.b16 %v1862, %v1857
    %v2583 = vpack.c.b16 %v1868, %v1863
    %v2584 = vpack.c.b16 %v1869, %v1864
    %v2585 = vpack.c.b16 %v1870, %v1865
    %v2586 = vpack.c.b16 %v1871, %v1866
    %v2587 = vpack.c.b16 %v1872, %v1867
    %v2588 = vpack.c.b16 %v1878, %v1873
    %v2589 = vpack.c.b16 %v1879, %v1874
    %v2590 = vpack.c.b16 %v1880, %v1875
    %v2591 = vpack.c.b16 %v1881, %v1876
    %v2592 = vpack.c.b16 %v1882, %v1877
    %v2593 = vpack.c.b16 %v1888, %v1883
    %v2594 = vpack.c.b16 %v1889, %v1884
    %v2595 = vpack.c.b16 %v1890, %v1885
    %v2596 = vpack.c.b16 %v1891, %v1886
    %v2597 = vpack.c.b16 %v1892, %v1887
    %v2598 = vpack.c.b16 %v1898, %v1893
    %v2599 = vpack.c.b16 %v1899, %v1894
    %v2600 = vpack.c.b16 %v1900, %v1895
    %v2601 = vpack.c.b16 %v1901, %v1896
    %v2602 = vpack.c.b16 %v1902, %v1897
    %v2603 = vpack.c.b16 %v1908, %v1903
    %v2604 = vpack.c.b16 %v1909, %v1904
    %v2605 = vpack.c.b16 %v1910, %v1905
    %v2606 = vpack.c.b16 %v1911, %v1906
    %v2607 = vpack.c.b16 %v1912, %v1907
    %v2608 = vpack.c.b16 %v1918, %v1913
    %v2609 = vpack.c.b16 %v1919, %v1914
    %v2610 = vpack.c.b16 %v1920, %v1915
    %v2611 = vpack.c.b16 %v1921, %v1916
    %v2612 = vpack.c.b16 %v1922, %v1917
    %v2613 = vpack.c.b16 %v1928, %v1923
    %v2614 = vpack.c.b16 %v1929, %v1924
    %v2615 = vpack.c.b16 %v1930, %v1925
    %v2616 = vpack.c.b16 %v1931, %v1926
    %v2617 = vpack.c.b16 %v1932, %v1927
    %v2618 = vpack.c.b16 %v1938, %v1933
    %v2619 = vpack.c.b16 %v1939, %v1934
    %v2620 = vpack.c.b16 %v1940, %v1935
    %v2621 = vpack.c.b16 %v1941, %v1936
    %v2622 = vpack.c.b16 %v1942, %v1937
    %v2623 = vpack.c.b16 %v1948, %v1943
    %v2624 = vpack.c.b16 %v1949, %v1944
    %v2625 = vpack.c.b16 %v1950, %v1945
    %v2626 = vpack.c.b16 %v1951, %v1946
    %v2627 = vpack.c.b16 %v1952, %v1947
    %v2628 = vpack.c.b16 %v1958, %v1953
    %v2629 = vpack.c.b16 %v1959, %v1954
    %v2630 = vpack.c.b16 %v1960, %v1955
    %v2631 = vpack.c.b16 %v1961, %v1956
    %v2632 = vpack.c.b16 %v1962, %v1957
    %v2633 = vpack.c.b16 %v1968, %v1963
    %v2634 = vpack.c.b16 %v1969, %v1964
    %v2635 = vpack.c.b16 %v1970, %v1965
    %v2636 = vpack.c.b16 %v1971, %v1966
    %v2637 = vpack.c.b16 %v1972, %v1967
    %v2638 = vpack.c.b16 %v1978, %v1973
    %v2639 = vpack.c.b16 %v1979, %v1974
    %v2640 = vpack.c.b16 %v1980, %v1975
    %v2641 = vpack.c.b16 %v1981, %v1976
    %v2642 = vpack.c.b16 %v1982, %v1977
    %v2643 = vpack.c.b16 %v1988, %v1983
    %v2644 = vpack.c.b16 %v1989, %v1984
    %v2645 = vpack.c.b16 %v1990, %v1985
    %v2646 = vpack.c.b16 %v1991, %v1986
    %v2647 = vpack.c.b16 %v1992, %v1987
    %v2648 = vpack.c.b16 %v1998, %v1993
    %v2649 = vpack.c.b16 %v1999, %v1994
    %v2650 = vpack.c.b16 %v2000, %v1995
    %v2651 = vpack.c.b16 %v2001, %v1996
    %v2652 = vpack.c.b16 %v2002, %v1997
    %v2653 = vpack.c.b16 %v2008, %v2003
    %v2654 = vpack.c.b16 %v2009, %v2004
    %v2655 = vpack.c.b16 %v2010, %v2005
    %v2656 = vpack.c.b16 %v2011, %v2006
    %v2657 = vpack.c.b16 %v2012, %v2007
    %v2658 = vpack.c.b16 %v2018, %v2013
    %v2659 = vpack.c.b16 %v2019, %v2014
    %v2660 = vpack.c.b16 %v2020, %v2015
    %v2661 = vpack.c.b16 %v2021, %v2016
    %v2662 = vpack.c.b16 %v2022, %v2017
    %v2663 = vpack.c.b16 %v2028, %v2023
    %v2664 = vpack.c.b16 %v2029, %v2024
    %v2665 = vpack.c.b16 %v2030, %v2025
    %v2666 = vpack.c.b16 %v2031, %v2026
    %v2667 = vpack.c.b16 %v2032, %v2027
    %v2668 = vpack.c.b16 %v2038, %v2033
    %v2669 = vpack.c.b16 %v2039, %v2034
    %v2670 = vpack.c.b16 %v2040, %v2035
    %v2671 = vpack.c.b16 %v2041, %v2036
    %v2672 = vpack.c.b16 %v2042, %v2037
    %v2673 = vpack.c.b16 %v2048, %v2043
    %v2674 = vpack.c.b16 %v2049, %v2044
    %v2675 = vpack.c.b16 %v2050, %v2045
    %v2676 = vpack.c.b16 %v2051, %v2046
    %v2677 = vpack.c.b16 %v2052, %v2047
    %v2678 = vpack.c.b16 %v2058, %v2053
    %v2679 = vpack.c.b16 %v2059, %v2054
    %v2680 = vpack.c.b16 %v2060, %v2055
    %v2681 = vpack.c.b16 %v2061, %v2056
    %v2682 = vpack.c.b16 %v2062, %v2057
    %v2683 = vpack.c.b16 %v2068, %v2063
    %v2684 = vpack.c.b16 %v2069, %v2064
    %v2685 = vpack.c.b16 %v2070, %v2065
    %v2686 = vpack.c.b16 %v2071, %v2066
    %v2687 = vpack.c.b16 %v2072, %v2067
    %v2688 = vpack.c.b16 %v2078, %v2073
    %v2689 = vpack.c.b16 %v2079, %v2074
    %v2690 = vpack.c.b16 %v2080, %v2075
    %v2691 = vpack.c.b16 %v2081, %v2076
    %v2692 = vpack.c.b16 %v2082, %v2077
    %v2693 = vpack.c.b16 %v2088, %v2083
    %v2694 = vpack.c.b16 %v2089, %v2084
    %v2695 = vpack.c.b16 %v2090, %v2085
    %v2696 = vpack.c.b16 %v2091, %v2086
    %v2697 = vpack.c.b16 %v2092, %v2087
    %v2698 = vpack.c.b16 %v2098, %v2093
    %v2699 = vpack.c.b16 %v2099, %v2094
    %v2700 = vpack.c.b16 %v2100, %v2095
    %v2701 = vpack.c.b16 %v2101, %v2096
    %v2702 = vpack.c.b16 %v2102, %v2097
    %v2703 = vpack.c.b16 %v2108, %v2103
    %v2704 = vpack.c.b16 %v2109, %v2104
    %v2705 = vpack.c.b16 %v2110, %v2105
    %v2706 = vpack.c.b16 %v2111, %v2106
    %v2707 = vpack.c.b16 %v2112, %v2107
    %v2708 = vpack.c.b16 %v2118, %v2113
    %v2709 = vpack.c.b16 %v2119, %v2114
    %v2710 = vpack.c.b16 %v2120, %v2115
    %v2711 = vpack.c.b16 %v2121, %v2116
    %v2712 = vpack.c.b16 %v2122, %v2117
    %v2713 = vpack.c.b16 %v2128, %v2123
    %v2714 = vpack.c.b16 %v2129, %v2124
    %v2715 = vpack.c.b16 %v2130, %v2125
    %v2716 = vpack.c.b16 %v2131, %v2126
    %v2717 = vpack.c.b16 %v2132, %v2127
    %v2718 = vpack.c.b16 %v2138, %v2133
    %v2719 = vpack.c.b16 %v2139, %v2134
    %v2720 = vpack.c.b16 %v2140, %v2135
    %v2721 = vpack.c.b16 %v2141, %v2136
    %v2722 = vpack.c.b16 %v2142, %v2137
    %v2723 = vpack.c.b16 %v2148, %v2143
    %v2724 = vpack.c.b16 %v2149, %v2144
    %v2725 = vpack.c.b16 %v2150, %v2145
    %v2726 = vpack.c.b16 %v2151, %v2146
    %v2727 = vpack.c.b16 %v2152, %v2147
    %v2728 = vpack.c.b16 %v2158, %v2153
    %v2729 = vpack.c.b16 %v2159, %v2154
    %v2730 = vpack.c.b16 %v2160, %v2155
    %v2731 = vpack.c.b16 %v2161, %v2156
    %v2732 = vpack.c.b16 %v2162, %v2157
    %v2733 = vpack.c.b16 %v2168, %v2163
    %v2734 = vpack.c.b16 %v2169, %v2164
    %v2735 = vpack.c.b16 %v2170, %v2165
    %v2736 = vpack.c.b16 %v2171, %v2166
    %v2737 = vpack.c.b16 %v2172, %v2167
    %v2738 = vpack.c.b16 %v2178, %v2173
    %v2739 = vpack.c.b16 %v2179, %v2174
    %v2740 = vpack.c.b16 %v2180, %v2175
    %v2741 = vpack.c.b16 %v2181, %v2176
    %v2742 = vpack.c.b16 %v2182, %v2177
    %v2743 = vpack.c.b16 %v2188, %v2183
    %v2744 = vpack.c.b16 %v2189, %v2184
    %v2745 = vpack.c.b16 %v2190, %v2185
    %v2746 = vpack.c.b16 %v2191, %v2186
    %v2747 = vpack.c.b16 %v2192, %v2187
    %v2748 = vpack.c.b16 %v2198, %v2193
    %v2749 = vpack.c.b16 %v2199, %v2194
    %v2750 = vpack.c.b16 %v2200, %v2195
    %v2751 = vpack.c.b16 %v2201, %v2196
    %v2752 = vpack.c.b16 %v2202, %v2197
    %v2753 = vpack.c.b16 %v2208, %v2203
    %v2754 = vpack.c.b16 %v2209, %v2204
    %v2755 = vpack.c.b16 %v2210, %v2205
    %v2756 = vpack.c.b16 %v2211, %v2206
    %v2757 = vpack.c.b16 %v2212, %v2207
    %v2758 = vpack.c.b16 %v2218, %v2213
    %v2759 = vpack.c.b16 %v2219, %v2214
    %v2760 = vpack.c.b16 %v2220, %v2215
    %v2761 = vpack.c.b16 %v2221, %v2216
    %v2762 = vpack.c.b16 %v2222, %v2217
    %v2763 = vpack.c.b16 %v2228, %v2223
    %v2764 = vpack.c.b16 %v2229, %v2224
    %v2765 = vpack.c.b16 %v2230, %v2225
    %v2766 = vpack.c.b16 %v2231, %v2226
    %v2767 = vpack.c.b16 %v2232, %v2227
    %v2768 = vpack.c.b16 %v2238, %v2233
    %v2769 = vpack.c.b16 %v2239, %v2234
    %v2770 = vpack.c.b16 %v2240, %v2235
    %v2771 = vpack.c.b16 %v2241, %v2236
    %v2772 = vpack.c.b16 %v2242, %v2237
    %v2773 = vpack.c.b16 %v2248, %v2243
    %v2774 = vpack.c.b16 %v2249, %v2244
    %v2775 = vpack.c.b16 %v2250, %v2245
    %v2776 = vpack.c.b16 %v2251, %v2246
    %v2777 = vpack.c.b16 %v2252, %v2247
    %v2778 = vpack.c.b16 %v2258, %v2253
    %v2779 = vpack.c.b16 %v2259, %v2254
    %v2780 = vpack.c.b16 %v2260, %v2255
    %v2781 = vpack.c.b16 %v2261, %v2256
    %v2782 = vpack.c.b16 %v2262, %v2257
    %v2783 = vpack.c.b16 %v2268, %v2263
    %v2784 = vpack.c.b16 %v2269, %v2264
    %v2785 = vpack.c.b16 %v2270, %v2265
    %v2786 = vpack.c.b16 %v2271, %v2266
    %v2787 = vpack.c.b16 %v2272, %v2267
    %v2788 = vpack.c.b16 %v2278, %v2273
    %v2789 = vpack.c.b16 %v2279, %v2274
    %v2790 = vpack.c.b16 %v2280, %v2275
    %v2791 = vpack.c.b16 %v2281, %v2276
    %v2792 = vpack.c.b16 %v2282, %v2277
    %v2793 = vpack.c.b16 %v2288, %v2283
    %v2794 = vpack.c.b16 %v2289, %v2284
    %v2795 = vpack.c.b16 %v2290, %v2285
    %v2796 = vpack.c.b16 %v2291, %v2286
    %v2797 = vpack.c.b16 %v2292, %v2287
    %v2798 = vpack.c.b16 %v2298, %v2293
    %v2799 = vpack.c.b16 %v2299, %v2294
    %v2800 = vpack.c.b16 %v2300, %v2295
    %v2801 = vpack.c.b16 %v2301, %v2296
    %v2802 = vpack.c.b16 %v2302, %v2297
    %v2803 = vpack.c.b16 %v2308, %v2303
    %v2804 = vpack.c.b16 %v2309, %v2304
    %v2805 = vpack.c.b16 %v2310, %v2305
    %v2806 = vpack.c.b16 %v2311, %v2306
    %v2807 = vpack.c.b16 %v2312, %v2307
    %v2808 = vpack.c.b16 %v2318, %v2313
    %v2809 = vpack.c.b16 %v2319, %v2314
    %v2810 = vpack.c.b16 %v2320, %v2315
    %v2811 = vpack.c.b16 %v2321, %v2316
    %v2812 = vpack.c.b16 %v2322, %v2317
    %v2813 = vpack.c.b16 %v2328, %v2323
    %v2814 = vpack.c.b16 %v2329, %v2324
    %v2815 = vpack.c.b16 %v2330, %v2325
    %v2816 = vpack.c.b16 %v2331, %v2326
    %v2817 = vpack.c.b16 %v2332, %v2327
    %v2818 = vpack.c.b16 %v2338, %v2333
    %v2819 = vpack.c.b16 %v2339, %v2334
    %v2820 = vpack.c.b16 %v2340, %v2335
    %v2821 = vpack.c.b16 %v2341, %v2336
    %v2822 = vpack.c.b16 %v2342, %v2337
    %3303 = vmatprep.subr.bf16.mxu0 %v2379
    %3304 = vmatpush1.bf16.msra.mxu0 %v2378
    %3305 = vmatprep.subr.bf16.mxu0 %v2374
    %3306 = vmatpush1.bf16.msra.mxu0 %v2373
    %3307 = vmatprep.subr.bf16.mxu0 %v2369
    %3308 = vmatpush1.bf16.msra.mxu0 %v2368
    %3309 = vmatprep.subr.bf16.mxu0 %v2364
    %3310 = vmatpush1.bf16.msra.mxu0 %v2363
    %3311 = vmatprep.subr.bf16.mxu0 %v2359
    %3312 = vmatpush1.bf16.msra.mxu0 %v2358
    %3313 = vmatprep.subr.bf16.mxu0 %v2354
    %3314 = vmatpush1.bf16.msra.mxu0 %v2353
    %3315 = vmatprep.subr.bf16.mxu0 %v2349
    %3316 = vmatpush1.bf16.msra.mxu0 %v2348
    %3317 = vmatprep.subr.bf16.mxu0 %v2344
    %3318 = vmatpush1.bf16.msra.mxu0 %v2343
    %3319 = vmatprep.subr.bf16.mxu0 %v2419
    %3320 = vmatpush2.bf16.msra.mxu0 %v2418
    %3321 = vmatprep.subr.bf16.mxu0 %v2414
    %3322 = vmatpush2.bf16.msra.mxu0 %v2413
    %3323 = vmatprep.subr.bf16.mxu0 %v2409
    %3324 = vmatpush2.bf16.msra.mxu0 %v2408
    %3325 = vmatprep.subr.bf16.mxu0 %v2404
    %3326 = vmatpush2.bf16.msra.mxu0 %v2403
    %3327 = vmatprep.subr.bf16.mxu0 %v2399
    %3328 = vmatpush2.bf16.msra.mxu0 %v2398
    %3329 = vmatprep.subr.bf16.mxu0 %v2394
    %3330 = vmatpush2.bf16.msra.mxu0 %v2393
    %3331 = vmatprep.subr.bf16.mxu0 %v2389
    %3332 = vmatpush2.bf16.msra.mxu0 %v2388
    %3333 = vmatprep.subr.bf16.mxu0 %v2384
    %3334 = vmatpush2.bf16.msra.mxu0 %v2383
    %3335 = vmatprep.mubr.bf16.mxu0 %v759
    %3336 = vmatmul.mubr.bf16.gmra.mxu0 %v745
    %v3337 = vpop.f32.mrf.mxu0
    %v3338 = vadd.f32 %v698, %v3337
    %v3339 = vpop.f32.mrf.mxu0
    %v3340 = vadd.f32 %v702, %v3339
    %v3341 = vpop.f32.mrf.mxu0
    %v3342 = vpop.f32.mrf.mxu0
    %3343 = vdwg.mxu0
    %3344 = vmatprep.subr.bf16.mxu0 %v2459
    %3345 = vmatpush1.bf16.msra.mxu0 %v2458
    %3346 = vmatprep.subr.bf16.mxu0 %v2454
    %3347 = vmatpush1.bf16.msra.mxu0 %v2453
    %3348 = vmatprep.subr.bf16.mxu0 %v2449
    %3349 = vmatpush1.bf16.msra.mxu0 %v2448
    %3350 = vmatprep.subr.bf16.mxu0 %v2444
    %3351 = vmatpush1.bf16.msra.mxu0 %v2443
    %3352 = vmatprep.subr.bf16.mxu0 %v2439
    %3353 = vmatpush1.bf16.msra.mxu0 %v2438
    %3354 = vmatprep.subr.bf16.mxu0 %v2434
    %3355 = vmatpush1.bf16.msra.mxu0 %v2433
    %3356 = vmatprep.subr.bf16.mxu0 %v2429
    %3357 = vmatpush1.bf16.msra.mxu0 %v2428
    %3358 = vmatprep.subr.bf16.mxu0 %v2424
    %3359 = vmatpush1.bf16.msra.mxu0 %v2423
    %3360 = vmatprep.subr.bf16.mxu0 %v2499
    %3361 = vmatpush2.bf16.msra.mxu0 %v2498
    %3362 = vmatprep.subr.bf16.mxu0 %v2494
    %3363 = vmatpush2.bf16.msra.mxu0 %v2493
    %3364 = vmatprep.subr.bf16.mxu0 %v2489
    %3365 = vmatpush2.bf16.msra.mxu0 %v2488
    %3366 = vmatprep.subr.bf16.mxu0 %v2484
    %3367 = vmatpush2.bf16.msra.mxu0 %v2483
    %3368 = vmatprep.subr.bf16.mxu0 %v2479
    %3369 = vmatpush2.bf16.msra.mxu0 %v2478
    %3370 = vmatprep.subr.bf16.mxu0 %v2474
    %3371 = vmatpush2.bf16.msra.mxu0 %v2473
    %3372 = vmatprep.subr.bf16.mxu0 %v2469
    %3373 = vmatpush2.bf16.msra.mxu0 %v2468
    %3374 = vmatprep.subr.bf16.mxu0 %v2464
    %3375 = vmatpush2.bf16.msra.mxu0 %v2463
    %3376 = vmatprep.mubr.bf16.mxu0 %v769
    %3377 = vmatmul.mubr.bf16.gmra.mxu0 %v767
    %v3378 = vpop.f32.mrf.mxu0
    %v3379 = vadd.f32 %v3338, %v3378
    %v3380 = vpop.f32.mrf.mxu0
    %v3381 = vadd.f32 %v3340, %v3380
    %v3382 = vpop.f32.mrf.mxu0
    %v3383 = vpop.f32.mrf.mxu0
    %3384 = vdwg.mxu0
    %3385 = vmatprep.subr.bf16.mxu0 %v2539
    %3386 = vmatpush1.bf16.msra.mxu0 %v2538
    %3387 = vmatprep.subr.bf16.mxu0 %v2534
    %3388 = vmatpush1.bf16.msra.mxu0 %v2533
    %3389 = vmatprep.subr.bf16.mxu0 %v2529
    %3390 = vmatpush1.bf16.msra.mxu0 %v2528
    %3391 = vmatprep.subr.bf16.mxu0 %v2524
    %3392 = vmatpush1.bf16.msra.mxu0 %v2523
    %3393 = vmatprep.subr.bf16.mxu0 %v2519
    %3394 = vmatpush1.bf16.msra.mxu0 %v2518
    %3395 = vmatprep.subr.bf16.mxu0 %v2514
    %3396 = vmatpush1.bf16.msra.mxu0 %v2513
    %3397 = vmatprep.subr.bf16.mxu0 %v2509
    %3398 = vmatpush1.bf16.msra.mxu0 %v2508
    %3399 = vmatprep.subr.bf16.mxu0 %v2504
    %3400 = vmatpush1.bf16.msra.mxu0 %v2503
    %3401 = vmatprep.subr.bf16.mxu0 %v2579
    %3402 = vmatpush2.bf16.msra.mxu0 %v2578
    %3403 = vmatprep.subr.bf16.mxu0 %v2574
    %3404 = vmatpush2.bf16.msra.mxu0 %v2573
    %3405 = vmatprep.subr.bf16.mxu0 %v2569
    %3406 = vmatpush2.bf16.msra.mxu0 %v2568
    %3407 = vmatprep.subr.bf16.mxu0 %v2564
    %3408 = vmatpush2.bf16.msra.mxu0 %v2563
    %3409 = vmatprep.subr.bf16.mxu0 %v2559
    %3410 = vmatpush2.bf16.msra.mxu0 %v2558
    %3411 = vmatprep.subr.bf16.mxu0 %v2554
    %3412 = vmatpush2.bf16.msra.mxu0 %v2553
    %3413 = vmatprep.subr.bf16.mxu0 %v2549
    %3414 = vmatpush2.bf16.msra.mxu0 %v2548
    %3415 = vmatprep.subr.bf16.mxu0 %v2544
    %3416 = vmatpush2.bf16.msra.mxu0 %v2543
    %3417 = vmatprep.mubr.bf16.mxu0 %v766
    %3418 = vmatmul.mubr.bf16.gmra.mxu0 %v752
    %v3419 = vpop.f32.mrf.mxu0
    %v3420 = vadd.f32 %v3379, %v3419
    %v3421 = vpop.f32.mrf.mxu0
    %v3422 = vadd.f32 %v3381, %v3421
    %v3423 = vpop.f32.mrf.mxu0
    %v3424 = vpop.f32.mrf.mxu0
    %3425 = vdwg.mxu0
    %3426 = vmatprep.subr.bf16.mxu0 %v2619
    %3427 = vmatpush1.bf16.msra.mxu0 %v2618
    %3428 = vmatprep.subr.bf16.mxu0 %v2614
    %3429 = vmatpush1.bf16.msra.mxu0 %v2613
    %3430 = vmatprep.subr.bf16.mxu0 %v2609
    %3431 = vmatpush1.bf16.msra.mxu0 %v2608
    %3432 = vmatprep.subr.bf16.mxu0 %v2604
    %3433 = vmatpush1.bf16.msra.mxu0 %v2603
    %3434 = vmatprep.subr.bf16.mxu0 %v2599
    %3435 = vmatpush1.bf16.msra.mxu0 %v2598
    %3436 = vmatprep.subr.bf16.mxu0 %v2594
    %3437 = vmatpush1.bf16.msra.mxu0 %v2593
    %3438 = vmatprep.subr.bf16.mxu0 %v2589
    %3439 = vmatpush1.bf16.msra.mxu0 %v2588
    %3440 = vmatprep.subr.bf16.mxu0 %v2584
    %3441 = vmatpush1.bf16.msra.mxu0 %v2583
    %3442 = vmatprep.subr.bf16.mxu0 %v2659
    %3443 = vmatpush2.bf16.msra.mxu0 %v2658
    %3444 = vmatprep.subr.bf16.mxu0 %v2654
    %3445 = vmatpush2.bf16.msra.mxu0 %v2653
    %3446 = vmatprep.subr.bf16.mxu0 %v2649
    %3447 = vmatpush2.bf16.msra.mxu0 %v2648
    %3448 = vmatprep.subr.bf16.mxu0 %v2644
    %3449 = vmatpush2.bf16.msra.mxu0 %v2643
    %3450 = vmatprep.subr.bf16.mxu0 %v2639
    %3451 = vmatpush2.bf16.msra.mxu0 %v2638
    %3452 = vmatprep.subr.bf16.mxu0 %v2634
    %3453 = vmatpush2.bf16.msra.mxu0 %v2633
    %3454 = vmatprep.subr.bf16.mxu0 %v2629
    %3455 = vmatpush2.bf16.msra.mxu0 %v2628
    %3456 = vmatprep.subr.bf16.mxu0 %v2624
    %3457 = vmatpush2.bf16.msra.mxu0 %v2623
    %3458 = vmatprep.mubr.bf16.mxu0 %v770
    %3459 = vmatmul.mubr.bf16.gmra.mxu0 %v768
    %v3460 = vpop.f32.mrf.mxu0
    %v3461 = vadd.f32 %v3420, %v3460
    %v3462 = vpop.f32.mrf.mxu0
    %v3463 = vadd.f32 %v3422, %v3462
    %v3464 = vpop.f32.mrf.mxu0
    %v3465 = vpop.f32.mrf.mxu0
    %3466 = vdwg.mxu0
    %3467 = vmatprep.subr.bf16.mxu0 %v2699
    %3468 = vmatpush1.bf16.msra.mxu0 %v2698
    %3469 = vmatprep.subr.bf16.mxu0 %v2694
    %3470 = vmatpush1.bf16.msra.mxu0 %v2693
    %3471 = vmatprep.subr.bf16.mxu0 %v2689
    %3472 = vmatpush1.bf16.msra.mxu0 %v2688
    %3473 = vmatprep.subr.bf16.mxu0 %v2684
    %3474 = vmatpush1.bf16.msra.mxu0 %v2683
    %3475 = vmatprep.subr.bf16.mxu0 %v2679
    %3476 = vmatpush1.bf16.msra.mxu0 %v2678
    %3477 = vmatprep.subr.bf16.mxu0 %v2674
    %3478 = vmatpush1.bf16.msra.mxu0 %v2673
    %3479 = vmatprep.subr.bf16.mxu0 %v2669
    %3480 = vmatpush1.bf16.msra.mxu0 %v2668
    %3481 = vmatprep.subr.bf16.mxu0 %v2664
    %3482 = vmatpush1.bf16.msra.mxu0 %v2663
    %3483 = vmatprep.subr.bf16.mxu0 %v2739
    %3484 = vmatpush2.bf16.msra.mxu0 %v2738
    %3485 = vmatprep.subr.bf16.mxu0 %v2734
    %3486 = vmatpush2.bf16.msra.mxu0 %v2733
    %3487 = vmatprep.subr.bf16.mxu0 %v2729
    %3488 = vmatpush2.bf16.msra.mxu0 %v2728
    %3489 = vmatprep.subr.bf16.mxu0 %v2724
    %3490 = vmatpush2.bf16.msra.mxu0 %v2723
    %3491 = vmatprep.subr.bf16.mxu0 %v2719
    %3492 = vmatpush2.bf16.msra.mxu0 %v2718
    %3493 = vmatprep.subr.bf16.mxu0 %v2714
    %3494 = vmatpush2.bf16.msra.mxu0 %v2713
    %3495 = vmatprep.subr.bf16.mxu0 %v2709
    %3496 = vmatpush2.bf16.msra.mxu0 %v2708
    %3497 = vmatprep.subr.bf16.mxu0 %v2704
    %3498 = vmatpush2.bf16.msra.mxu0 %v2703
    %3499 = vmatprep.mubr.bf16.mxu0 %v792
    %3500 = vmatmul.mubr.bf16.gmra.mxu0 %v785
    %v3501 = vpop.f32.mrf.mxu0
    %v3502 = vadd.f32 %v3461, %v3501
    %v3503 = vpop.f32.mrf.mxu0
    %v3504 = vadd.f32 %v3463, %v3503
    %v3505 = vpop.f32.mrf.mxu0
    %v3506 = vpop.f32.mrf.mxu0
    %3507 = vdwg.mxu0
    %3508 = vmatprep.subr.bf16.mxu0 %v2779
    %3509 = vmatpush1.bf16.msra.mxu0 %v2778
    %3510 = vmatprep.subr.bf16.mxu0 %v2774
    %3511 = vmatpush1.bf16.msra.mxu0 %v2773
    %3512 = vmatprep.subr.bf16.mxu0 %v2769
    %3513 = vmatpush1.bf16.msra.mxu0 %v2768
    %3514 = vmatprep.subr.bf16.mxu0 %v2764
    %3515 = vmatpush1.bf16.msra.mxu0 %v2763
    %3516 = vmatprep.subr.bf16.mxu0 %v2759
    %3517 = vmatpush1.bf16.msra.mxu0 %v2758
    %3518 = vmatprep.subr.bf16.mxu0 %v2754
    %3519 = vmatpush1.bf16.msra.mxu0 %v2753
    %3520 = vmatprep.subr.bf16.mxu0 %v2749
    %3521 = vmatpush1.bf16.msra.mxu0 %v2748
    %3522 = vmatprep.subr.bf16.mxu0 %v2744
    %3523 = vmatpush1.bf16.msra.mxu0 %v2743
    %3524 = vmatprep.subr.bf16.mxu0 %v2819
    %3525 = vmatpush2.bf16.msra.mxu0 %v2818
    %3526 = vmatprep.subr.bf16.mxu0 %v2814
    %3527 = vmatpush2.bf16.msra.mxu0 %v2813
    %3528 = vmatprep.subr.bf16.mxu0 %v2809
    %3529 = vmatpush2.bf16.msra.mxu0 %v2808
    %3530 = vmatprep.subr.bf16.mxu0 %v2804
    %3531 = vmatpush2.bf16.msra.mxu0 %v2803
    %3532 = vmatprep.subr.bf16.mxu0 %v2799
    %3533 = vmatpush2.bf16.msra.mxu0 %v2798
    %3534 = vmatprep.subr.bf16.mxu0 %v2794
    %3535 = vmatpush2.bf16.msra.mxu0 %v2793
    %3536 = vmatprep.subr.bf16.mxu0 %v2789
    %3537 = vmatpush2.bf16.msra.mxu0 %v2788
    %3538 = vmatprep.subr.bf16.mxu0 %v2784
    %3539 = vmatpush2.bf16.msra.mxu0 %v2783
    %3540 = vmatprep.mubr.bf16.mxu0 %v794
    %3541 = vmatmul.mubr.bf16.gmra.mxu0 %v793
    %v3542 = vpop.f32.mrf.mxu0
    %v3543 = vadd.f32 %v3502, %v3542
    %v3544 = vpop.f32.mrf.mxu0
    %v3545 = vadd.f32 %v3504, %v3544
    %v3546 = vpop.f32.mrf.mxu0
    %v3547 = vpop.f32.mrf.mxu0
    %3548 = vdwg.mxu0
    %3549 = vmatprep.subr.bf16.mxu0 %v2381
    %3550 = vmatpush1.bf16.msra.mxu0 %v2380
    %3551 = vmatprep.subr.bf16.mxu0 %v2376
    %3552 = vmatpush1.bf16.msra.mxu0 %v2375
    %3553 = vmatprep.subr.bf16.mxu0 %v2371
    %3554 = vmatpush1.bf16.msra.mxu0 %v2370
    %3555 = vmatprep.subr.bf16.mxu0 %v2366
    %3556 = vmatpush1.bf16.msra.mxu0 %v2365
    %3557 = vmatprep.subr.bf16.mxu0 %v2361
    %3558 = vmatpush1.bf16.msra.mxu0 %v2360
    %3559 = vmatprep.subr.bf16.mxu0 %v2356
    %3560 = vmatpush1.bf16.msra.mxu0 %v2355
    %3561 = vmatprep.subr.bf16.mxu0 %v2351
    %3562 = vmatpush1.bf16.msra.mxu0 %v2350
    %3563 = vmatprep.subr.bf16.mxu0 %v2346
    %3564 = vmatpush1.bf16.msra.mxu0 %v2345
    %3565 = vmatprep.subr.bf16.mxu0 %v2421
    %3566 = vmatpush2.bf16.msra.mxu0 %v2420
    %3567 = vmatprep.subr.bf16.mxu0 %v2416
    %3568 = vmatpush2.bf16.msra.mxu0 %v2415
    %3569 = vmatprep.subr.bf16.mxu0 %v2411
    %3570 = vmatpush2.bf16.msra.mxu0 %v2410
    %3571 = vmatprep.subr.bf16.mxu0 %v2406
    %3572 = vmatpush2.bf16.msra.mxu0 %v2405
    %3573 = vmatprep.subr.bf16.mxu0 %v2401
    %3574 = vmatpush2.bf16.msra.mxu0 %v2400
    %3575 = vmatprep.subr.bf16.mxu0 %v2396
    %3576 = vmatpush2.bf16.msra.mxu0 %v2395
    %3577 = vmatprep.subr.bf16.mxu0 %v2391
    %3578 = vmatpush2.bf16.msra.mxu0 %v2390
    %3579 = vmatprep.subr.bf16.mxu0 %v2386
    %3580 = vmatpush2.bf16.msra.mxu0 %v2385
    %3581 = vmatprep.mubr.bf16.mxu0 %v759
    %3582 = vmatmul.mubr.bf16.gmra.mxu0 %v745
    %v3583 = vpop.f32.mrf.mxu0
    %v3584 = vadd.f32 %v706, %v3583
    %v3585 = vpop.f32.mrf.mxu0
    %v3586 = vadd.f32 %v710, %v3585
    %v3587 = vpop.f32.mrf.mxu0
    %v3588 = vpop.f32.mrf.mxu0
    %3589 = vdwg.mxu0
    %3590 = vmatprep.subr.bf16.mxu0 %v2461
    %3591 = vmatpush1.bf16.msra.mxu0 %v2460
    %3592 = vmatprep.subr.bf16.mxu0 %v2456
    %3593 = vmatpush1.bf16.msra.mxu0 %v2455
    %3594 = vmatprep.subr.bf16.mxu0 %v2451
    %3595 = vmatpush1.bf16.msra.mxu0 %v2450
    %3596 = vmatprep.subr.bf16.mxu0 %v2446
    %3597 = vmatpush1.bf16.msra.mxu0 %v2445
    %3598 = vmatprep.subr.bf16.mxu0 %v2441
    %3599 = vmatpush1.bf16.msra.mxu0 %v2440
    %3600 = vmatprep.subr.bf16.mxu0 %v2436
    %3601 = vmatpush1.bf16.msra.mxu0 %v2435
    %3602 = vmatprep.subr.bf16.mxu0 %v2431
    %3603 = vmatpush1.bf16.msra.mxu0 %v2430
    %3604 = vmatprep.subr.bf16.mxu0 %v2426
    %3605 = vmatpush1.bf16.msra.mxu0 %v2425
    %3606 = vmatprep.subr.bf16.mxu0 %v2501
    %3607 = vmatpush2.bf16.msra.mxu0 %v2500
    %3608 = vmatprep.subr.bf16.mxu0 %v2496
    %3609 = vmatpush2.bf16.msra.mxu0 %v2495
    %3610 = vmatprep.subr.bf16.mxu0 %v2491
    %3611 = vmatpush2.bf16.msra.mxu0 %v2490
    %3612 = vmatprep.subr.bf16.mxu0 %v2486
    %3613 = vmatpush2.bf16.msra.mxu0 %v2485
    %3614 = vmatprep.subr.bf16.mxu0 %v2481
    %3615 = vmatpush2.bf16.msra.mxu0 %v2480
    %3616 = vmatprep.subr.bf16.mxu0 %v2476
    %3617 = vmatpush2.bf16.msra.mxu0 %v2475
    %3618 = vmatprep.subr.bf16.mxu0 %v2471
    %3619 = vmatpush2.bf16.msra.mxu0 %v2470
    %3620 = vmatprep.subr.bf16.mxu0 %v2466
    %3621 = vmatpush2.bf16.msra.mxu0 %v2465
    %3622 = vmatprep.mubr.bf16.mxu0 %v769
    %3623 = vmatmul.mubr.bf16.gmra.mxu0 %v767
    %v3624 = vpop.f32.mrf.mxu0
    %v3625 = vadd.f32 %v3584, %v3624
    %v3626 = vpop.f32.mrf.mxu0
    %v3627 = vadd.f32 %v3586, %v3626
    %v3628 = vpop.f32.mrf.mxu0
    %v3629 = vpop.f32.mrf.mxu0
    %3630 = vdwg.mxu0
    %3631 = vmatprep.subr.bf16.mxu0 %v2541
    %3632 = vmatpush1.bf16.msra.mxu0 %v2540
    %3633 = vmatprep.subr.bf16.mxu0 %v2536
    %3634 = vmatpush1.bf16.msra.mxu0 %v2535
    %3635 = vmatprep.subr.bf16.mxu0 %v2531
    %3636 = vmatpush1.bf16.msra.mxu0 %v2530
    %3637 = vmatprep.subr.bf16.mxu0 %v2526
    %3638 = vmatpush1.bf16.msra.mxu0 %v2525
    %3639 = vmatprep.subr.bf16.mxu0 %v2521
    %3640 = vmatpush1.bf16.msra.mxu0 %v2520
    %3641 = vmatprep.subr.bf16.mxu0 %v2516
    %3642 = vmatpush1.bf16.msra.mxu0 %v2515
    %3643 = vmatprep.subr.bf16.mxu0 %v2511
    %3644 = vmatpush1.bf16.msra.mxu0 %v2510
    %3645 = vmatprep.subr.bf16.mxu0 %v2506
    %3646 = vmatpush1.bf16.msra.mxu0 %v2505
    %3647 = vmatprep.subr.bf16.mxu0 %v2581
    %3648 = vmatpush2.bf16.msra.mxu0 %v2580
    %3649 = vmatprep.subr.bf16.mxu0 %v2576
    %3650 = vmatpush2.bf16.msra.mxu0 %v2575
    %3651 = vmatprep.subr.bf16.mxu0 %v2571
    %3652 = vmatpush2.bf16.msra.mxu0 %v2570
    %3653 = vmatprep.subr.bf16.mxu0 %v2566
    %3654 = vmatpush2.bf16.msra.mxu0 %v2565
    %3655 = vmatprep.subr.bf16.mxu0 %v2561
    %3656 = vmatpush2.bf16.msra.mxu0 %v2560
    %3657 = vmatprep.subr.bf16.mxu0 %v2556
    %3658 = vmatpush2.bf16.msra.mxu0 %v2555
    %3659 = vmatprep.subr.bf16.mxu0 %v2551
    %3660 = vmatpush2.bf16.msra.mxu0 %v2550
    %3661 = vmatprep.subr.bf16.mxu0 %v2546
    %3662 = vmatpush2.bf16.msra.mxu0 %v2545
    %3663 = vmatprep.mubr.bf16.mxu0 %v766
    %3664 = vmatmul.mubr.bf16.gmra.mxu0 %v752
    %v3665 = vpop.f32.mrf.mxu0
    %v3666 = vadd.f32 %v3625, %v3665
    %v3667 = vpop.f32.mrf.mxu0
    %v3668 = vadd.f32 %v3627, %v3667
    %v3669 = vpop.f32.mrf.mxu0
    %v3670 = vpop.f32.mrf.mxu0
    %3671 = vdwg.mxu0
    %3672 = vmatprep.subr.bf16.mxu0 %v2621
    %3673 = vmatpush1.bf16.msra.mxu0 %v2620
    %3674 = vmatprep.subr.bf16.mxu0 %v2616
    %3675 = vmatpush1.bf16.msra.mxu0 %v2615
    %3676 = vmatprep.subr.bf16.mxu0 %v2611
    %3677 = vmatpush1.bf16.msra.mxu0 %v2610
    %3678 = vmatprep.subr.bf16.mxu0 %v2606
    %3679 = vmatpush1.bf16.msra.mxu0 %v2605
    %3680 = vmatprep.subr.bf16.mxu0 %v2601
    %3681 = vmatpush1.bf16.msra.mxu0 %v2600
    %3682 = vmatprep.subr.bf16.mxu0 %v2596
    %3683 = vmatpush1.bf16.msra.mxu0 %v2595
    %3684 = vmatprep.subr.bf16.mxu0 %v2591
    %3685 = vmatpush1.bf16.msra.mxu0 %v2590
    %3686 = vmatprep.subr.bf16.mxu0 %v2586
    %3687 = vmatpush1.bf16.msra.mxu0 %v2585
    %3688 = vmatprep.subr.bf16.mxu0 %v2661
    %3689 = vmatpush2.bf16.msra.mxu0 %v2660
    %3690 = vmatprep.subr.bf16.mxu0 %v2656
    %3691 = vmatpush2.bf16.msra.mxu0 %v2655
    %3692 = vmatprep.subr.bf16.mxu0 %v2651
    %3693 = vmatpush2.bf16.msra.mxu0 %v2650
    %3694 = vmatprep.subr.bf16.mxu0 %v2646
    %3695 = vmatpush2.bf16.msra.mxu0 %v2645
    %3696 = vmatprep.subr.bf16.mxu0 %v2641
    %3697 = vmatpush2.bf16.msra.mxu0 %v2640
    %3698 = vmatprep.subr.bf16.mxu0 %v2636
    %3699 = vmatpush2.bf16.msra.mxu0 %v2635
    %3700 = vmatprep.subr.bf16.mxu0 %v2631
    %3701 = vmatpush2.bf16.msra.mxu0 %v2630
    %3702 = vmatprep.subr.bf16.mxu0 %v2626
    %3703 = vmatpush2.bf16.msra.mxu0 %v2625
    %3704 = vmatprep.mubr.bf16.mxu0 %v770
    %3705 = vmatmul.mubr.bf16.gmra.mxu0 %v768
    %v3706 = vpop.f32.mrf.mxu0
    %v3707 = vadd.f32 %v3666, %v3706
    %v3708 = vpop.f32.mrf.mxu0
    %v3709 = vadd.f32 %v3668, %v3708
    %v3710 = vpop.f32.mrf.mxu0
    %v3711 = vpop.f32.mrf.mxu0
    %3712 = vdwg.mxu0
    %3713 = vmatprep.subr.bf16.mxu0 %v2701
    %3714 = vmatpush1.bf16.msra.mxu0 %v2700
    %3715 = vmatprep.subr.bf16.mxu0 %v2696
    %3716 = vmatpush1.bf16.msra.mxu0 %v2695
    %3717 = vmatprep.subr.bf16.mxu0 %v2691
    %3718 = vmatpush1.bf16.msra.mxu0 %v2690
    %3719 = vmatprep.subr.bf16.mxu0 %v2686
    %3720 = vmatpush1.bf16.msra.mxu0 %v2685
    %3721 = vmatprep.subr.bf16.mxu0 %v2681
    %3722 = vmatpush1.bf16.msra.mxu0 %v2680
    %3723 = vmatprep.subr.bf16.mxu0 %v2676
    %3724 = vmatpush1.bf16.msra.mxu0 %v2675
    %3725 = vmatprep.subr.bf16.mxu0 %v2671
    %3726 = vmatpush1.bf16.msra.mxu0 %v2670
    %3727 = vmatprep.subr.bf16.mxu0 %v2666
    %3728 = vmatpush1.bf16.msra.mxu0 %v2665
    %3729 = vmatprep.subr.bf16.mxu0 %v2741
    %3730 = vmatpush2.bf16.msra.mxu0 %v2740
    %3731 = vmatprep.subr.bf16.mxu0 %v2736
    %3732 = vmatpush2.bf16.msra.mxu0 %v2735
    %3733 = vmatprep.subr.bf16.mxu0 %v2731
    %3734 = vmatpush2.bf16.msra.mxu0 %v2730
    %3735 = vmatprep.subr.bf16.mxu0 %v2726
    %3736 = vmatpush2.bf16.msra.mxu0 %v2725
    %3737 = vmatprep.subr.bf16.mxu0 %v2721
    %3738 = vmatpush2.bf16.msra.mxu0 %v2720
    %3739 = vmatprep.subr.bf16.mxu0 %v2716
    %3740 = vmatpush2.bf16.msra.mxu0 %v2715
    %3741 = vmatprep.subr.bf16.mxu0 %v2711
    %3742 = vmatpush2.bf16.msra.mxu0 %v2710
    %3743 = vmatprep.subr.bf16.mxu0 %v2706
    %3744 = vmatpush2.bf16.msra.mxu0 %v2705
    %3745 = vmatprep.mubr.bf16.mxu0 %v792
    %3746 = vmatmul.mubr.bf16.gmra.mxu0 %v785
    %v3747 = vpop.f32.mrf.mxu0
    %v3748 = vadd.f32 %v3707, %v3747
    %v3749 = vpop.f32.mrf.mxu0
    %v3750 = vadd.f32 %v3709, %v3749
    %v3751 = vpop.f32.mrf.mxu0
    %v3752 = vpop.f32.mrf.mxu0
    %3753 = vdwg.mxu0
    %3754 = vmatprep.subr.bf16.mxu0 %v2781
    %3755 = vmatpush1.bf16.msra.mxu0 %v2780
    %3756 = vmatprep.subr.bf16.mxu0 %v2776
    %3757 = vmatpush1.bf16.msra.mxu0 %v2775
    %3758 = vmatprep.subr.bf16.mxu0 %v2771
    %3759 = vmatpush1.bf16.msra.mxu0 %v2770
    %3760 = vmatprep.subr.bf16.mxu0 %v2766
    %3761 = vmatpush1.bf16.msra.mxu0 %v2765
    %3762 = vmatprep.subr.bf16.mxu0 %v2761
    %3763 = vmatpush1.bf16.msra.mxu0 %v2760
    %3764 = vmatprep.subr.bf16.mxu0 %v2756
    %3765 = vmatpush1.bf16.msra.mxu0 %v2755
    %3766 = vmatprep.subr.bf16.mxu0 %v2751
    %3767 = vmatpush1.bf16.msra.mxu0 %v2750
    %3768 = vmatprep.subr.bf16.mxu0 %v2746
    %3769 = vmatpush1.bf16.msra.mxu0 %v2745
    %3770 = vmatprep.subr.bf16.mxu0 %v2821
    %3771 = vmatpush2.bf16.msra.mxu0 %v2820
    %3772 = vmatprep.subr.bf16.mxu0 %v2816
    %3773 = vmatpush2.bf16.msra.mxu0 %v2815
    %3774 = vmatprep.subr.bf16.mxu0 %v2811
    %3775 = vmatpush2.bf16.msra.mxu0 %v2810
    %3776 = vmatprep.subr.bf16.mxu0 %v2806
    %3777 = vmatpush2.bf16.msra.mxu0 %v2805
    %3778 = vmatprep.subr.bf16.mxu0 %v2801
    %3779 = vmatpush2.bf16.msra.mxu0 %v2800
    %3780 = vmatprep.subr.bf16.mxu0 %v2796
    %3781 = vmatpush2.bf16.msra.mxu0 %v2795
    %3782 = vmatprep.subr.bf16.mxu0 %v2791
    %3783 = vmatpush2.bf16.msra.mxu0 %v2790
    %3784 = vmatprep.subr.bf16.mxu0 %v2786
    %3785 = vmatpush2.bf16.msra.mxu0 %v2785
    %3786 = vmatprep.mubr.bf16.mxu0 %v794
    %3787 = vmatmul.mubr.bf16.gmra.mxu0 %v793
    %v3788 = vpop.f32.mrf.mxu0
    %v3789 = vadd.f32 %v3748, %v3788
    %v3790 = vpop.f32.mrf.mxu0
    %v3791 = vadd.f32 %v3750, %v3790
    %v3792 = vpop.f32.mrf.mxu0
    %v3793 = vpop.f32.mrf.mxu0
    %3794 = vdwg.mxu0
    %3795 = vmatprep.subr.bf16.mxu0 0
    %3796 = vmatpush1.bf16.msra.mxu0 %v2382
    %3797 = vmatprep.subr.bf16.mxu0 0
    %3798 = vmatpush1.bf16.msra.mxu0 %v2377
    %3799 = vmatprep.subr.bf16.mxu0 0
    %3800 = vmatpush1.bf16.msra.mxu0 %v2372
    %3801 = vmatprep.subr.bf16.mxu0 0
    %3802 = vmatpush1.bf16.msra.mxu0 %v2367
    %3803 = vmatprep.subr.bf16.mxu0 0
    %3804 = vmatpush1.bf16.msra.mxu0 %v2362
    %3805 = vmatprep.subr.bf16.mxu0 0
    %3806 = vmatpush1.bf16.msra.mxu0 %v2357
    %3807 = vmatprep.subr.bf16.mxu0 0
    %3808 = vmatpush1.bf16.msra.mxu0 %v2352
    %3809 = vmatprep.subr.bf16.mxu0 0
    %3810 = vmatpush1.bf16.msra.mxu0 %v2347
    %3811 = vmatprep.subr.bf16.mxu0 0
    %3812 = vmatpush2.bf16.msra.mxu0 %v2422
    %3813 = vmatprep.subr.bf16.mxu0 0
    %3814 = vmatpush2.bf16.msra.mxu0 %v2417
    %3815 = vmatprep.subr.bf16.mxu0 0
    %3816 = vmatpush2.bf16.msra.mxu0 %v2412
    %3817 = vmatprep.subr.bf16.mxu0 0
    %3818 = vmatpush2.bf16.msra.mxu0 %v2407
    %3819 = vmatprep.subr.bf16.mxu0 0
    %3820 = vmatpush2.bf16.msra.mxu0 %v2402
    %3821 = vmatprep.subr.bf16.mxu0 0
    %3822 = vmatpush2.bf16.msra.mxu0 %v2397
    %3823 = vmatprep.subr.bf16.mxu0 0
    %3824 = vmatpush2.bf16.msra.mxu0 %v2392
    %3825 = vmatprep.subr.bf16.mxu0 0
    %3826 = vmatpush2.bf16.msra.mxu0 %v2387
    %3827 = vmatprep.mubr.bf16.mxu0 %v759
    %3828 = vmatmul.mubr.bf16.gmra.mxu0 %v745
    %v3829 = vpop.f32.mrf.mxu0
    %v3830 = vadd.f32 %v714, %v3829
    %v3831 = vpop.f32.mrf.mxu0
    %v3832 = vpop.f32.mrf.mxu0
    %v3833 = vpop.f32.mrf.mxu0
    %3834 = vdwg.mxu0
    %3835 = vmatprep.subr.bf16.mxu0 0
    %3836 = vmatpush1.bf16.msra.mxu0 %v2462
    %3837 = vmatprep.subr.bf16.mxu0 0
    %3838 = vmatpush1.bf16.msra.mxu0 %v2457
    %3839 = vmatprep.subr.bf16.mxu0 0
    %3840 = vmatpush1.bf16.msra.mxu0 %v2452
    %3841 = vmatprep.subr.bf16.mxu0 0
    %3842 = vmatpush1.bf16.msra.mxu0 %v2447
    %3843 = vmatprep.subr.bf16.mxu0 0
    %3844 = vmatpush1.bf16.msra.mxu0 %v2442
    %3845 = vmatprep.subr.bf16.mxu0 0
    %3846 = vmatpush1.bf16.msra.mxu0 %v2437
    %3847 = vmatprep.subr.bf16.mxu0 0
    %3848 = vmatpush1.bf16.msra.mxu0 %v2432
    %3849 = vmatprep.subr.bf16.mxu0 0
    %3850 = vmatpush1.bf16.msra.mxu0 %v2427
    %3851 = vmatprep.subr.bf16.mxu0 0
    %3852 = vmatpush2.bf16.msra.mxu0 %v2502
    %3853 = vmatprep.subr.bf16.mxu0 0
    %3854 = vmatpush2.bf16.msra.mxu0 %v2497
    %3855 = vmatprep.subr.bf16.mxu0 0
    %3856 = vmatpush2.bf16.msra.mxu0 %v2492
    %3857 = vmatprep.subr.bf16.mxu0 0
    %3858 = vmatpush2.bf16.msra.mxu0 %v2487
    %3859 = vmatprep.subr.bf16.mxu0 0
    %3860 = vmatpush2.bf16.msra.mxu0 %v2482
    %3861 = vmatprep.subr.bf16.mxu0 0
    %3862 = vmatpush2.bf16.msra.mxu0 %v2477
    %3863 = vmatprep.subr.bf16.mxu0 0
    %3864 = vmatpush2.bf16.msra.mxu0 %v2472
    %3865 = vmatprep.subr.bf16.mxu0 0
    %3866 = vmatpush2.bf16.msra.mxu0 %v2467
    %3867 = vmatprep.mubr.bf16.mxu0 %v769
    %3868 = vmatmul.mubr.bf16.gmra.mxu0 %v767
    %v3869 = vpop.f32.mrf.mxu0
    %v3870 = vadd.f32 %v3830, %v3869
    %v3871 = vpop.f32.mrf.mxu0
    %v3872 = vpop.f32.mrf.mxu0
    %v3873 = vpop.f32.mrf.mxu0
    %3874 = vdwg.mxu0
    %3875 = vmatprep.subr.bf16.mxu0 0
    %3876 = vmatpush1.bf16.msra.mxu0 %v2542
    %3877 = vmatprep.subr.bf16.mxu0 0
    %3878 = vmatpush1.bf16.msra.mxu0 %v2537
    %3879 = vmatprep.subr.bf16.mxu0 0
    %3880 = vmatpush1.bf16.msra.mxu0 %v2532
    %3881 = vmatprep.subr.bf16.mxu0 0
    %3882 = vmatpush1.bf16.msra.mxu0 %v2527
    %3883 = vmatprep.subr.bf16.mxu0 0
    %3884 = vmatpush1.bf16.msra.mxu0 %v2522
    %3885 = vmatprep.subr.bf16.mxu0 0
    %3886 = vmatpush1.bf16.msra.mxu0 %v2517
    %3887 = vmatprep.subr.bf16.mxu0 0
    %3888 = vmatpush1.bf16.msra.mxu0 %v2512
    %3889 = vmatprep.subr.bf16.mxu0 0
    %3890 = vmatpush1.bf16.msra.mxu0 %v2507
    %3891 = vmatprep.subr.bf16.mxu0 0
    %3892 = vmatpush2.bf16.msra.mxu0 %v2582
    %3893 = vmatprep.subr.bf16.mxu0 0
    %3894 = vmatpush2.bf16.msra.mxu0 %v2577
    %3895 = vmatprep.subr.bf16.mxu0 0
    %3896 = vmatpush2.bf16.msra.mxu0 %v2572
    %3897 = vmatprep.subr.bf16.mxu0 0
    %3898 = vmatpush2.bf16.msra.mxu0 %v2567
    %3899 = vmatprep.subr.bf16.mxu0 0
    %3900 = vmatpush2.bf16.msra.mxu0 %v2562
    %3901 = vmatprep.subr.bf16.mxu0 0
    %3902 = vmatpush2.bf16.msra.mxu0 %v2557
    %3903 = vmatprep.subr.bf16.mxu0 0
    %3904 = vmatpush2.bf16.msra.mxu0 %v2552
    %3905 = vmatprep.subr.bf16.mxu0 0
    %3906 = vmatpush2.bf16.msra.mxu0 %v2547
    %3907 = vmatprep.mubr.bf16.mxu0 %v766
    %3908 = vmatmul.mubr.bf16.gmra.mxu0 %v752
    %v3909 = vpop.f32.mrf.mxu0
    %v3910 = vadd.f32 %v3870, %v3909
    %v3911 = vpop.f32.mrf.mxu0
    %v3912 = vpop.f32.mrf.mxu0
    %v3913 = vpop.f32.mrf.mxu0
    %3914 = vdwg.mxu0
    %3915 = vmatprep.subr.bf16.mxu0 0
    %3916 = vmatpush1.bf16.msra.mxu0 %v2622
    %3917 = vmatprep.subr.bf16.mxu0 0
    %3918 = vmatpush1.bf16.msra.mxu0 %v2617
    %3919 = vmatprep.subr.bf16.mxu0 0
    %3920 = vmatpush1.bf16.msra.mxu0 %v2612
    %3921 = vmatprep.subr.bf16.mxu0 0
    %3922 = vmatpush1.bf16.msra.mxu0 %v2607
    %3923 = vmatprep.subr.bf16.mxu0 0
    %3924 = vmatpush1.bf16.msra.mxu0 %v2602
    %3925 = vmatprep.subr.bf16.mxu0 0
    %3926 = vmatpush1.bf16.msra.mxu0 %v2597
    %3927 = vmatprep.subr.bf16.mxu0 0
    %3928 = vmatpush1.bf16.msra.mxu0 %v2592
    %3929 = vmatprep.subr.bf16.mxu0 0
    %3930 = vmatpush1.bf16.msra.mxu0 %v2587
    %3931 = vmatprep.subr.bf16.mxu0 0
    %3932 = vmatpush2.bf16.msra.mxu0 %v2662
    %3933 = vmatprep.subr.bf16.mxu0 0
    %3934 = vmatpush2.bf16.msra.mxu0 %v2657
    %3935 = vmatprep.subr.bf16.mxu0 0
    %3936 = vmatpush2.bf16.msra.mxu0 %v2652
    %3937 = vmatprep.subr.bf16.mxu0 0
    %3938 = vmatpush2.bf16.msra.mxu0 %v2647
    %3939 = vmatprep.subr.bf16.mxu0 0
    %3940 = vmatpush2.bf16.msra.mxu0 %v2642
    %3941 = vmatprep.subr.bf16.mxu0 0
    %3942 = vmatpush2.bf16.msra.mxu0 %v2637
    %3943 = vmatprep.subr.bf16.mxu0 0
    %3944 = vmatpush2.bf16.msra.mxu0 %v2632
    %3945 = vmatprep.subr.bf16.mxu0 0
    %3946 = vmatpush2.bf16.msra.mxu0 %v2627
    %3947 = vmatprep.mubr.bf16.mxu0 %v770
    %3948 = vmatmul.mubr.bf16.gmra.mxu0 %v768
    %v3949 = vpop.f32.mrf.mxu0
    %v3950 = vadd.f32 %v3910, %v3949
    %v3951 = vpop.f32.mrf.mxu0
    %v3952 = vpop.f32.mrf.mxu0
    %v3953 = vpop.f32.mrf.mxu0
    %3954 = vdwg.mxu0
    %3955 = vmatprep.subr.bf16.mxu0 0
    %3956 = vmatpush1.bf16.msra.mxu0 %v2702
    %3957 = vmatprep.subr.bf16.mxu0 0
    %3958 = vmatpush1.bf16.msra.mxu0 %v2697
    %3959 = vmatprep.subr.bf16.mxu0 0
    %3960 = vmatpush1.bf16.msra.mxu0 %v2692
    %3961 = vmatprep.subr.bf16.mxu0 0
    %3962 = vmatpush1.bf16.msra.mxu0 %v2687
    %3963 = vmatprep.subr.bf16.mxu0 0
    %3964 = vmatpush1.bf16.msra.mxu0 %v2682
    %3965 = vmatprep.subr.bf16.mxu0 0
    %3966 = vmatpush1.bf16.msra.mxu0 %v2677
    %3967 = vmatprep.subr.bf16.mxu0 0
    %3968 = vmatpush1.bf16.msra.mxu0 %v2672
    %3969 = vmatprep.subr.bf16.mxu0 0
    %3970 = vmatpush1.bf16.msra.mxu0 %v2667
    %3971 = vmatprep.subr.bf16.mxu0 0
    %3972 = vmatpush2.bf16.msra.mxu0 %v2742
    %3973 = vmatprep.subr.bf16.mxu0 0
    %3974 = vmatpush2.bf16.msra.mxu0 %v2737
    %3975 = vmatprep.subr.bf16.mxu0 0
    %3976 = vmatpush2.bf16.msra.mxu0 %v2732
    %3977 = vmatprep.subr.bf16.mxu0 0
    %3978 = vmatpush2.bf16.msra.mxu0 %v2727
    %3979 = vmatprep.subr.bf16.mxu0 0
    %3980 = vmatpush2.bf16.msra.mxu0 %v2722
    %3981 = vmatprep.subr.bf16.mxu0 0
    %3982 = vmatpush2.bf16.msra.mxu0 %v2717
    %3983 = vmatprep.subr.bf16.mxu0 0
    %3984 = vmatpush2.bf16.msra.mxu0 %v2712
    %3985 = vmatprep.subr.bf16.mxu0 0
    %3986 = vmatpush2.bf16.msra.mxu0 %v2707
    %3987 = vmatprep.mubr.bf16.mxu0 %v792
    %3988 = vmatmul.mubr.bf16.gmra.mxu0 %v785
    %v3989 = vpop.f32.mrf.mxu0
    %v3990 = vadd.f32 %v3950, %v3989
    %v3991 = vpop.f32.mrf.mxu0
    %v3992 = vpop.f32.mrf.mxu0
    %v3993 = vpop.f32.mrf.mxu0
    %3994 = vdwg.mxu0
    %3995 = vmatprep.subr.bf16.mxu0 0
    %3996 = vmatpush1.bf16.msra.mxu0 %v2782
    %3997 = vmatprep.subr.bf16.mxu0 0
    %3998 = vmatpush1.bf16.msra.mxu0 %v2777
    %3999 = vmatprep.subr.bf16.mxu0 0
    %4000 = vmatpush1.bf16.msra.mxu0 %v2772
    %4001 = vmatprep.subr.bf16.mxu0 0
    %4002 = vmatpush1.bf16.msra.mxu0 %v2767
    %4003 = vmatprep.subr.bf16.mxu0 0
    %4004 = vmatpush1.bf16.msra.mxu0 %v2762
    %4005 = vmatprep.subr.bf16.mxu0 0
    %4006 = vmatpush1.bf16.msra.mxu0 %v2757
    %4007 = vmatprep.subr.bf16.mxu0 0
    %4008 = vmatpush1.bf16.msra.mxu0 %v2752
    %4009 = vmatprep.subr.bf16.mxu0 0
    %4010 = vmatpush1.bf16.msra.mxu0 %v2747
    %4011 = vmatprep.subr.bf16.mxu0 0
    %4012 = vmatpush2.bf16.msra.mxu0 %v2822
    %4013 = vmatprep.subr.bf16.mxu0 0
    %4014 = vmatpush2.bf16.msra.mxu0 %v2817
    %4015 = vmatprep.subr.bf16.mxu0 0
    %4016 = vmatpush2.bf16.msra.mxu0 %v2812
    %4017 = vmatprep.subr.bf16.mxu0 0
    %4018 = vmatpush2.bf16.msra.mxu0 %v2807
    %4019 = vmatprep.subr.bf16.mxu0 0
    %4020 = vmatpush2.bf16.msra.mxu0 %v2802
    %4021 = vmatprep.subr.bf16.mxu0 0
    %4022 = vmatpush2.bf16.msra.mxu0 %v2797
    %4023 = vmatprep.subr.bf16.mxu0 0
    %4024 = vmatpush2.bf16.msra.mxu0 %v2792
    %4025 = vmatprep.subr.bf16.mxu0 0
    %4026 = vmatpush2.bf16.msra.mxu0 %v2787
    %4027 = vmatprep.mubr.bf16.mxu0 %v794
    %4028 = vmatmul.mubr.bf16.gmra.mxu0 %v793
    %v4029 = vpop.f32.mrf.mxu0
    %v4030 = vadd.f32 %v3990, %v4029
    %v4031 = vpop.f32.mrf.mxu0
    %v4032 = vpop.f32.mrf.mxu0
    %v4033 = vpop.f32.mrf.mxu0
    %4034 = vdwg.mxu0
    %v4035 = vmax.f32 %v3543, 0.0
    %v4036 = vmax.f32 %v3545, 0.0
    %v4037 = vmax.f32 %v3789, 0.0
    %v4038 = vmax.f32 %v3791, 0.0
    %v4039 = vmax.f32 %v4030, 0.0
    %v4040 = vpack.c.bf16 %v4035, %v4035
    %v4041 = vpack.c.bf16 %v4036, %v4036
    %v4042 = vpack.c.bf16 %v4037, %v4037
    %v4043 = vpack.c.bf16 %v4038, %v4038
    %v4044 = vpack.c.bf16 %v4039, %v4039
    %v4045 = vld [vmem:[#allocation8] sm:$0xff]
    %v4046 = vld [vmem:[#allocation8 + $0x8] sm:$0xff]
    %v4047 = vld [vmem:[#allocation8 + $0x10] sm:$0xff]
    %v4048 = vld [vmem:[#allocation8 + $0x18] sm:$0xff]
    %v4049 = vld [vmem:[#allocation8 + $0x20] sm:$0xff]
    %v4050 = vld [vmem:[#allocation8 + $0x28] sm:$0xff]
    %v4051 = vld [vmem:[#allocation8 + $0x30] sm:$0xff]
    %v4052 = vld [vmem:[#allocation8 + $0x38] sm:$0xff]
    %v4053 = vld [vmem:[#allocation8 + $0x40] sm:$0xff]
    %v4054 = vld [vmem:[#allocation8 + $0x48] sm:$0xff]
    %v4055 = vld [vmem:[#allocation8 + $0x50] sm:$0xff]
    %v4056 = vld [vmem:[#allocation8 + $0x58] sm:$0xff]
    %v4057 = vld [vmem:[#allocation8 + $0x60] sm:$0xff]
    %v4058 = vld [vmem:[#allocation8 + $0x68] sm:$0xff]
    %v4059 = vld [vmem:[#allocation8 + $0x70] sm:$0xff]
    %v4060 = vld [vmem:[#allocation8 + $0x78] sm:$0xff]
    %v4061 = vld [vmem:[#allocation8 + $0x80] sm:$0xff]
    %v4062 = vld [vmem:[#allocation8 + $0x88] sm:$0xff]
    %v4063 = vld [vmem:[#allocation8 + $0x90] sm:$0xff]
    %v4064 = vld [vmem:[#allocation8 + $0x98] sm:$0xff]
    %v4065 = vld [vmem:[#allocation8 + $0xa0] sm:$0xff]
    %v4066 = vld [vmem:[#allocation8 + $0xa8] sm:$0xff]
    %v4067 = vld [vmem:[#allocation8 + $0xb0] sm:$0xff]
    %v4068 = vld [vmem:[#allocation8 + $0xb8] sm:$0xff]
    %v4069 = vld [vmem:[#allocation8 + $0xc0] sm:$0xff]
    %v4070 = vld [vmem:[#allocation8 + $0xc8] sm:$0xff]
    %v4071 = vld [vmem:[#allocation8 + $0xd0] sm:$0xff]
    %v4072 = vld [vmem:[#allocation8 + $0xd8] sm:$0xff]
    %v4073 = vld [vmem:[#allocation8 + $0xe0] sm:$0xff]
    %v4074 = vld [vmem:[#allocation8 + $0xe8] sm:$0xff]
    %v4075 = vld [vmem:[#allocation8 + $0xf0] sm:$0xff]
    %v4076 = vld [vmem:[#allocation8 + $0xf8] sm:$0xff]
    %v4077 = vld [vmem:[#allocation8 + $0x100] sm:$0xff]
    %v4078 = vld [vmem:[#allocation8 + $0x108] sm:$0xff]
    %v4079 = vld [vmem:[#allocation8 + $0x110] sm:$0xff]
    %v4080 = vld [vmem:[#allocation8 + $0x118] sm:$0xff]
    %v4081 = vld [vmem:[#allocation8 + $0x120] sm:$0xff]
    %v4082 = vld [vmem:[#allocation8 + $0x128] sm:$0xff]
    %v4083 = vld [vmem:[#allocation8 + $0x130] sm:$0xff]
    %v4084 = vld [vmem:[#allocation8 + $0x138] sm:$0xff]
    %v4085 = vld [vmem:[#allocation8 + $0x140] sm:$0xff]
    %v4086 = vld [vmem:[#allocation8 + $0x148] sm:$0xff]
    %v4087 = vld [vmem:[#allocation8 + $0x150] sm:$0xff]
    %v4088 = vld [vmem:[#allocation8 + $0x158] sm:$0xff]
    %v4089 = vld [vmem:[#allocation8 + $0x160] sm:$0xff]
    %v4090 = vld [vmem:[#allocation8 + $0x168] sm:$0xff]
    %v4091 = vld [vmem:[#allocation8 + $0x170] sm:$0xff]
    %v4092 = vld [vmem:[#allocation8 + $0x178] sm:$0xff]
    %v4093 = vld [vmem:[#allocation8 + $0x180] sm:$0xff]
    %v4094 = vld [vmem:[#allocation8 + $0x188] sm:$0xff]
    %v4095 = vld [vmem:[#allocation8 + $0x190] sm:$0xff]
    %v4096 = vld [vmem:[#allocation8 + $0x198] sm:$0xff]
    %v4097 = vld [vmem:[#allocation8 + $0x1a0] sm:$0xff]
    %v4098 = vld [vmem:[#allocation8 + $0x1a8] sm:$0xff]
    %v4099 = vld [vmem:[#allocation8 + $0x1b0] sm:$0xff]
    %v4100 = vld [vmem:[#allocation8 + $0x1b8] sm:$0xff]
    %v4101 = vld [vmem:[#allocation8 + $0x1c0] sm:$0xff]
    %v4102 = vld [vmem:[#allocation8 + $0x1c8] sm:$0xff]
    %v4103 = vld [vmem:[#allocation8 + $0x1d0] sm:$0xff]
    %v4104 = vld [vmem:[#allocation8 + $0x1d8] sm:$0xff]
    %v4105 = vld [vmem:[#allocation8 + $0x1e0] sm:$0xff]
    %v4106 = vld [vmem:[#allocation8 + $0x1e8] sm:$0xff]
    %v4107 = vld [vmem:[#allocation8 + $0x1f0] sm:$0xff]
    %v4108 = vld [vmem:[#allocation8 + $0x1f8] sm:$0xff]
    %v4109 = vld [vmem:[#allocation10] sm:$0x3]
    %v4111 = vlaneseq
    %v4112 = vshrl.u32 %v4111, 7
    %v4113 = vsub.s32 0, %v4112
    %v4114 = vrot.slane %v4109, %v4113
    %v4115 = vlaneseq
    %v4116 = vshrl.u32 %v4115, 7
    %v4117 = vsub.s32 1, %v4116
    %v4118 = vrot.slane %v4109, %v4117
    %v4185 = vunpack.c.l.b16 %v4045
    %v4186 = vunpack.c.h.b16 %v4045
    %v4187 = vunpack.c.l.b16 %v4046
    %v4188 = vunpack.c.h.b16 %v4046
    %v4189 = vunpack.c.l.b16 %v4047
    %v4190 = vunpack.c.h.b16 %v4047
    %v4191 = vunpack.c.l.b16 %v4048
    %v4192 = vunpack.c.h.b16 %v4048
    %v4193 = vunpack.c.l.b16 %v4049
    %v4194 = vunpack.c.h.b16 %v4049
    %v4195 = vunpack.c.l.b16 %v4050
    %v4196 = vunpack.c.h.b16 %v4050
    %v4197 = vunpack.c.l.b16 %v4051
    %v4198 = vunpack.c.h.b16 %v4051
    %v4199 = vunpack.c.l.b16 %v4052
    %v4200 = vunpack.c.h.b16 %v4052
    %v4201 = vunpack.c.l.b16 %v4053
    %v4202 = vunpack.c.h.b16 %v4053
    %v4203 = vunpack.c.l.b16 %v4054
    %v4204 = vunpack.c.h.b16 %v4054
    %v4205 = vunpack.c.l.b16 %v4055
    %v4206 = vunpack.c.h.b16 %v4055
    %v4207 = vunpack.c.l.b16 %v4056
    %v4208 = vunpack.c.h.b16 %v4056
    %v4209 = vunpack.c.l.b16 %v4057
    %v4210 = vunpack.c.h.b16 %v4057
    %v4211 = vunpack.c.l.b16 %v4058
    %v4212 = vunpack.c.h.b16 %v4058
    %v4213 = vunpack.c.l.b16 %v4059
    %v4214 = vunpack.c.h.b16 %v4059
    %v4215 = vunpack.c.l.b16 %v4060
    %v4216 = vunpack.c.h.b16 %v4060
    %v4217 = vunpack.c.l.b16 %v4061
    %v4218 = vunpack.c.h.b16 %v4061
    %v4219 = vunpack.c.l.b16 %v4062
    %v4220 = vunpack.c.h.b16 %v4062
    %v4221 = vunpack.c.l.b16 %v4063
    %v4222 = vunpack.c.h.b16 %v4063
    %v4223 = vunpack.c.l.b16 %v4064
    %v4224 = vunpack.c.h.b16 %v4064
    %v4225 = vunpack.c.l.b16 %v4065
    %v4226 = vunpack.c.h.b16 %v4065
    %v4227 = vunpack.c.l.b16 %v4066
    %v4228 = vunpack.c.h.b16 %v4066
    %v4229 = vunpack.c.l.b16 %v4067
    %v4230 = vunpack.c.h.b16 %v4067
    %v4231 = vunpack.c.l.b16 %v4068
    %v4232 = vunpack.c.h.b16 %v4068
    %v4233 = vunpack.c.l.b16 %v4069
    %v4234 = vunpack.c.h.b16 %v4069
    %v4235 = vunpack.c.l.b16 %v4070
    %v4236 = vunpack.c.h.b16 %v4070
    %v4237 = vunpack.c.l.b16 %v4071
    %v4238 = vunpack.c.h.b16 %v4071
    %v4239 = vunpack.c.l.b16 %v4072
    %v4240 = vunpack.c.h.b16 %v4072
    %v4241 = vunpack.c.l.b16 %v4073
    %v4242 = vunpack.c.h.b16 %v4073
    %v4243 = vunpack.c.l.b16 %v4074
    %v4244 = vunpack.c.h.b16 %v4074
    %v4245 = vunpack.c.l.b16 %v4075
    %v4246 = vunpack.c.h.b16 %v4075
    %v4247 = vunpack.c.l.b16 %v4076
    %v4248 = vunpack.c.h.b16 %v4076
    %v4249 = vunpack.c.l.b16 %v4077
    %v4250 = vunpack.c.h.b16 %v4077
    %v4251 = vunpack.c.l.b16 %v4078
    %v4252 = vunpack.c.h.b16 %v4078
    %v4253 = vunpack.c.l.b16 %v4079
    %v4254 = vunpack.c.h.b16 %v4079
    %v4255 = vunpack.c.l.b16 %v4080
    %v4256 = vunpack.c.h.b16 %v4080
    %v4257 = vunpack.c.l.b16 %v4081
    %v4258 = vunpack.c.h.b16 %v4081
    %v4259 = vunpack.c.l.b16 %v4082
    %v4260 = vunpack.c.h.b16 %v4082
    %v4261 = vunpack.c.l.b16 %v4083
    %v4262 = vunpack.c.h.b16 %v4083
    %v4263 = vunpack.c.l.b16 %v4084
    %v4264 = vunpack.c.h.b16 %v4084
    %v4265 = vunpack.c.l.b16 %v4085
    %v4266 = vunpack.c.h.b16 %v4085
    %v4267 = vunpack.c.l.b16 %v4086
    %v4268 = vunpack.c.h.b16 %v4086
    %v4269 = vunpack.c.l.b16 %v4087
    %v4270 = vunpack.c.h.b16 %v4087
    %v4271 = vunpack.c.l.b16 %v4088
    %v4272 = vunpack.c.h.b16 %v4088
    %v4273 = vunpack.c.l.b16 %v4089
    %v4274 = vunpack.c.h.b16 %v4089
    %v4275 = vunpack.c.l.b16 %v4090
    %v4276 = vunpack.c.h.b16 %v4090
    %v4277 = vunpack.c.l.b16 %v4091
    %v4278 = vunpack.c.h.b16 %v4091
    %v4279 = vunpack.c.l.b16 %v4092
    %v4280 = vunpack.c.h.b16 %v4092
    %v4281 = vunpack.c.l.b16 %v4093
    %v4282 = vunpack.c.h.b16 %v4093
    %v4283 = vunpack.c.l.b16 %v4094
    %v4284 = vunpack.c.h.b16 %v4094
    %v4285 = vunpack.c.l.b16 %v4095
    %v4286 = vunpack.c.h.b16 %v4095
    %v4287 = vunpack.c.l.b16 %v4096
    %v4288 = vunpack.c.h.b16 %v4096
    %v4289 = vunpack.c.l.b16 %v4097
    %v4290 = vunpack.c.h.b16 %v4097
    %v4291 = vunpack.c.l.b16 %v4098
    %v4292 = vunpack.c.h.b16 %v4098
    %v4293 = vunpack.c.l.b16 %v4099
    %v4294 = vunpack.c.h.b16 %v4099
    %v4295 = vunpack.c.l.b16 %v4100
    %v4296 = vunpack.c.h.b16 %v4100
    %v4297 = vunpack.c.l.b16 %v4101
    %v4298 = vunpack.c.h.b16 %v4101
    %v4299 = vunpack.c.l.b16 %v4102
    %v4300 = vunpack.c.h.b16 %v4102
    %v4301 = vunpack.c.l.b16 %v4103
    %v4302 = vunpack.c.h.b16 %v4103
    %v4303 = vunpack.c.l.b16 %v4104
    %v4304 = vunpack.c.h.b16 %v4104
    %v4305 = vunpack.c.l.b16 %v4105
    %v4306 = vunpack.c.h.b16 %v4105
    %v4307 = vunpack.c.l.b16 %v4106
    %v4308 = vunpack.c.h.b16 %v4106
    %v4309 = vunpack.c.l.b16 %v4107
    %v4310 = vunpack.c.h.b16 %v4107
    %v4311 = vunpack.c.l.b16 %v4108
    %v4312 = vunpack.c.h.b16 %v4108
    %v4313 = vpack.c.b16 %v4187, %v4185
    %v4314 = vpack.c.b16 %v4188, %v4186
    %v4315 = vpack.c.b16 %v4191, %v4189
    %v4316 = vpack.c.b16 %v4192, %v4190
    %v4317 = vpack.c.b16 %v4195, %v4193
    %v4318 = vpack.c.b16 %v4196, %v4194
    %v4319 = vpack.c.b16 %v4199, %v4197
    %v4320 = vpack.c.b16 %v4200, %v4198
    %v4321 = vpack.c.b16 %v4203, %v4201
    %v4322 = vpack.c.b16 %v4204, %v4202
    %v4323 = vpack.c.b16 %v4207, %v4205
    %v4324 = vpack.c.b16 %v4208, %v4206
    %v4325 = vpack.c.b16 %v4211, %v4209
    %v4326 = vpack.c.b16 %v4212, %v4210
    %v4327 = vpack.c.b16 %v4215, %v4213
    %v4328 = vpack.c.b16 %v4216, %v4214
    %v4329 = vpack.c.b16 %v4219, %v4217
    %v4330 = vpack.c.b16 %v4220, %v4218
    %v4331 = vpack.c.b16 %v4223, %v4221
    %v4332 = vpack.c.b16 %v4224, %v4222
    %v4333 = vpack.c.b16 %v4227, %v4225
    %v4334 = vpack.c.b16 %v4228, %v4226
    %v4335 = vpack.c.b16 %v4231, %v4229
    %v4336 = vpack.c.b16 %v4232, %v4230
    %v4337 = vpack.c.b16 %v4235, %v4233
    %v4338 = vpack.c.b16 %v4236, %v4234
    %v4339 = vpack.c.b16 %v4239, %v4237
    %v4340 = vpack.c.b16 %v4240, %v4238
    %v4341 = vpack.c.b16 %v4243, %v4241
    %v4342 = vpack.c.b16 %v4244, %v4242
    %v4343 = vpack.c.b16 %v4247, %v4245
    %v4344 = vpack.c.b16 %v4248, %v4246
    %v4345 = vpack.c.b16 %v4251, %v4249
    %v4346 = vpack.c.b16 %v4252, %v4250
    %v4347 = vpack.c.b16 %v4255, %v4253
    %v4348 = vpack.c.b16 %v4256, %v4254
    %v4349 = vpack.c.b16 %v4259, %v4257
    %v4350 = vpack.c.b16 %v4260, %v4258
    %v4351 = vpack.c.b16 %v4263, %v4261
    %v4352 = vpack.c.b16 %v4264, %v4262
    %v4353 = vpack.c.b16 %v4267, %v4265
    %v4354 = vpack.c.b16 %v4268, %v4266
    %v4355 = vpack.c.b16 %v4271, %v4269
    %v4356 = vpack.c.b16 %v4272, %v4270
    %v4357 = vpack.c.b16 %v4275, %v4273
    %v4358 = vpack.c.b16 %v4276, %v4274
    %v4359 = vpack.c.b16 %v4279, %v4277
    %v4360 = vpack.c.b16 %v4280, %v4278
    %v4361 = vpack.c.b16 %v4283, %v4281
    %v4362 = vpack.c.b16 %v4284, %v4282
    %v4363 = vpack.c.b16 %v4287, %v4285
    %v4364 = vpack.c.b16 %v4288, %v4286
    %v4365 = vpack.c.b16 %v4291, %v4289
    %v4366 = vpack.c.b16 %v4292, %v4290
    %v4367 = vpack.c.b16 %v4295, %v4293
    %v4368 = vpack.c.b16 %v4296, %v4294
    %v4369 = vpack.c.b16 %v4299, %v4297
    %v4370 = vpack.c.b16 %v4300, %v4298
    %v4371 = vpack.c.b16 %v4303, %v4301
    %v4372 = vpack.c.b16 %v4304, %v4302
    %v4373 = vpack.c.b16 %v4307, %v4305
    %v4374 = vpack.c.b16 %v4308, %v4306
    %v4375 = vpack.c.b16 %v4311, %v4309
    %v4376 = vpack.c.b16 %v4312, %v4310
    %4441 = vmatprep.subr.bf16.mxu0 %v4328
    %4442 = vmatpush1.bf16.msra.mxu0 %v4327
    %4443 = vmatprep.subr.bf16.mxu0 %v4326
    %4444 = vmatpush1.bf16.msra.mxu0 %v4325
    %4445 = vmatprep.subr.bf16.mxu0 %v4324
    %4446 = vmatpush1.bf16.msra.mxu0 %v4323
    %4447 = vmatprep.subr.bf16.mxu0 %v4322
    %4448 = vmatpush1.bf16.msra.mxu0 %v4321
    %4449 = vmatprep.subr.bf16.mxu0 %v4320
    %4450 = vmatpush1.bf16.msra.mxu0 %v4319
    %4451 = vmatprep.subr.bf16.mxu0 %v4318
    %4452 = vmatpush1.bf16.msra.mxu0 %v4317
    %4453 = vmatprep.subr.bf16.mxu0 %v4316
    %4454 = vmatpush1.bf16.msra.mxu0 %v4315
    %4455 = vmatprep.subr.bf16.mxu0 %v4314
    %4456 = vmatpush1.bf16.msra.mxu0 %v4313
    %4457 = vmatprep.subr.bf16.mxu0 %v4344
    %4458 = vmatpush2.bf16.msra.mxu0 %v4343
    %4459 = vmatprep.subr.bf16.mxu0 %v4342
    %4460 = vmatpush2.bf16.msra.mxu0 %v4341
    %4461 = vmatprep.subr.bf16.mxu0 %v4340
    %4462 = vmatpush2.bf16.msra.mxu0 %v4339
    %4463 = vmatprep.subr.bf16.mxu0 %v4338
    %4464 = vmatpush2.bf16.msra.mxu0 %v4337
    %4465 = vmatprep.subr.bf16.mxu0 %v4336
    %4466 = vmatpush2.bf16.msra.mxu0 %v4335
    %4467 = vmatprep.subr.bf16.mxu0 %v4334
    %4468 = vmatpush2.bf16.msra.mxu0 %v4333
    %4469 = vmatprep.subr.bf16.mxu0 %v4332
    %4470 = vmatpush2.bf16.msra.mxu0 %v4331
    %4471 = vmatprep.subr.bf16.mxu0 %v4330
    %4472 = vmatpush2.bf16.msra.mxu0 %v4329
    %4473 = vmatprep.mubr.bf16.mxu0 %v4041
    %4474 = vmatmul.mubr.bf16.gmra.mxu0 %v4040
    %v4475 = vpop.f32.mrf.mxu0
    %v4476 = vadd.f32 %v4114, %v4475
    %v4477 = vpop.f32.mrf.mxu0
    %v4478 = vadd.f32 %v4118, %v4477
    %v4479 = vpop.f32.mrf.mxu0
    %v4480 = vpop.f32.mrf.mxu0
    %4481 = vdwg.mxu0
    %4482 = vmatprep.subr.bf16.mxu0 %v4360
    %4483 = vmatpush1.bf16.msra.mxu0 %v4359
    %4484 = vmatprep.subr.bf16.mxu0 %v4358
    %4485 = vmatpush1.bf16.msra.mxu0 %v4357
    %4486 = vmatprep.subr.bf16.mxu0 %v4356
    %4487 = vmatpush1.bf16.msra.mxu0 %v4355
    %4488 = vmatprep.subr.bf16.mxu0 %v4354
    %4489 = vmatpush1.bf16.msra.mxu0 %v4353
    %4490 = vmatprep.subr.bf16.mxu0 %v4352
    %4491 = vmatpush1.bf16.msra.mxu0 %v4351
    %4492 = vmatprep.subr.bf16.mxu0 %v4350
    %4493 = vmatpush1.bf16.msra.mxu0 %v4349
    %4494 = vmatprep.subr.bf16.mxu0 %v4348
    %4495 = vmatpush1.bf16.msra.mxu0 %v4347
    %4496 = vmatprep.subr.bf16.mxu0 %v4346
    %4497 = vmatpush1.bf16.msra.mxu0 %v4345
    %4498 = vmatprep.subr.bf16.mxu0 %v4376
    %4499 = vmatpush2.bf16.msra.mxu0 %v4375
    %4500 = vmatprep.subr.bf16.mxu0 %v4374
    %4501 = vmatpush2.bf16.msra.mxu0 %v4373
    %4502 = vmatprep.subr.bf16.mxu0 %v4372
    %4503 = vmatpush2.bf16.msra.mxu0 %v4371
    %4504 = vmatprep.subr.bf16.mxu0 %v4370
    %4505 = vmatpush2.bf16.msra.mxu0 %v4369
    %4506 = vmatprep.subr.bf16.mxu0 %v4368
    %4507 = vmatpush2.bf16.msra.mxu0 %v4367
    %4508 = vmatprep.subr.bf16.mxu0 %v4366
    %4509 = vmatpush2.bf16.msra.mxu0 %v4365
    %4510 = vmatprep.subr.bf16.mxu0 %v4364
    %4511 = vmatpush2.bf16.msra.mxu0 %v4363
    %4512 = vmatprep.subr.bf16.mxu0 %v4362
    %4513 = vmatpush2.bf16.msra.mxu0 %v4361
    %4514 = vmatprep.mubr.bf16.mxu0 %v4043
    %4515 = vmatmul.mubr.bf16.gmra.mxu0 %v4042
    %v4516 = vpop.f32.mrf.mxu0
    %v4517 = vadd.f32 %v4476, %v4516
    %v4518 = vpop.f32.mrf.mxu0
    %v4519 = vadd.f32 %v4478, %v4518
    %v4520 = vpop.f32.mrf.mxu0
    %v4521 = vpop.f32.mrf.mxu0
    %4522 = vdwg.mxu0
    %v4523 = vmax.f32 %v4517, 0.0
    %v4524 = vmax.f32 %v4519, 0.0
    %v4525 = vpack.c.bf16 %v4523, %v4523
    %v4526 = vpack.c.bf16 %v4524, %v4524
    %v4527 = vld [vmem:[#allocation11] sm:$0xf]
    %v4528 = vld [vmem:[#allocation11 + $0x4] sm:$0xf]
    %v4529 = vld [vmem:[#allocation11 + $0x8] sm:$0xf]
    %v4530 = vld [vmem:[#allocation11 + $0xc] sm:$0xf]
    %v4531 = vld [vmem:[#allocation11 + $0x10] sm:$0xf]
    %v4532 = vld [vmem:[#allocation11 + $0x14] sm:$0xf]
    %v4533 = vld [vmem:[#allocation11 + $0x18] sm:$0xf]
    %v4534 = vld [vmem:[#allocation11 + $0x1c] sm:$0xf]
    %v4535 = vld [vmem:[#allocation11 + $0x20] sm:$0xf]
    %v4536 = vld [vmem:[#allocation11 + $0x24] sm:$0xf]
    %v4537 = vld [vmem:[#allocation11 + $0x28] sm:$0xf]
    %v4538 = vld [vmem:[#allocation11 + $0x2c] sm:$0xf]
    %v4539 = vld [vmem:[#allocation11 + $0x30] sm:$0xf]
    %v4540 = vld [vmem:[#allocation11 + $0x34] sm:$0xf]
    %v4541 = vld [vmem:[#allocation11 + $0x38] sm:$0xf]
    %v4542 = vld [vmem:[#allocation11 + $0x3c] sm:$0xf]
    %v4543 = vld [vmem:[#allocation11 + $0x40] sm:$0xf]
    %v4544 = vld [vmem:[#allocation11 + $0x44] sm:$0xf]
    %v4545 = vld [vmem:[#allocation11 + $0x48] sm:$0xf]
    %v4546 = vld [vmem:[#allocation11 + $0x4c] sm:$0xf]
    %v4547 = vld [vmem:[#allocation11 + $0x50] sm:$0xf]
    %v4548 = vld [vmem:[#allocation11 + $0x54] sm:$0xf]
    %v4549 = vld [vmem:[#allocation11 + $0x58] sm:$0xf]
    %v4550 = vld [vmem:[#allocation11 + $0x5c] sm:$0xf]
    %v4551 = vld [vmem:[#allocation11 + $0x60] sm:$0xf]
    %v4552 = vld [vmem:[#allocation11 + $0x64] sm:$0xf]
    %v4553 = vld [vmem:[#allocation11 + $0x68] sm:$0xf]
    %v4554 = vld [vmem:[#allocation11 + $0x6c] sm:$0xf]
    %v4555 = vld [vmem:[#allocation11 + $0x70] sm:$0xf]
    %v4556 = vld [vmem:[#allocation11 + $0x74] sm:$0xf]
    %v4557 = vld [vmem:[#allocation11 + $0x78] sm:$0xf]
    %v4558 = vld [vmem:[#allocation11 + $0x7c] sm:$0xf]
    %v4559 = vld [vmem:[#allocation11 + $0x80] sm:$0xf]
    %v4560 = vld [vmem:[#allocation11 + $0x84] sm:$0xf]
    %v4561 = vld [vmem:[#allocation11 + $0x88] sm:$0xf]
    %v4562 = vld [vmem:[#allocation11 + $0x8c] sm:$0xf]
    %v4563 = vld [vmem:[#allocation11 + $0x90] sm:$0xf]
    %v4564 = vld [vmem:[#allocation11 + $0x94] sm:$0xf]
    %v4565 = vld [vmem:[#allocation11 + $0x98] sm:$0xf]
    %v4566 = vld [vmem:[#allocation11 + $0x9c] sm:$0xf]
    %v4567 = vld [vmem:[#allocation11 + $0xa0] sm:$0xf]
    %v4568 = vld [vmem:[#allocation11 + $0xa4] sm:$0xf]
    %v4569 = vld [vmem:[#allocation11 + $0xa8] sm:$0xf]
    %v4570 = vld [vmem:[#allocation11 + $0xac] sm:$0xf]
    %v4571 = vld [vmem:[#allocation11 + $0xb0] sm:$0xf]
    %v4572 = vld [vmem:[#allocation11 + $0xb4] sm:$0xf]
    %v4573 = vld [vmem:[#allocation11 + $0xb8] sm:$0xf]
    %v4574 = vld [vmem:[#allocation11 + $0xbc] sm:$0xf]
    %v4575 = vld [vmem:[#allocation13] sm:$0x1]
    %v4577 = vlaneseq
    %v4578 = vshrl.u32 %v4577, 7
    %v4579 = vsub.s32 0, %v4578
    %v4580 = vrot.slane %v4575, %v4579
    %v4630 = vunpack.c.l.b16 %v4527
    %v4631 = vunpack.c.l.b16 %v4528
    %v4632 = vunpack.c.l.b16 %v4529
    %v4633 = vunpack.c.l.b16 %v4530
    %v4634 = vunpack.c.l.b16 %v4531
    %v4635 = vunpack.c.l.b16 %v4532
    %v4636 = vunpack.c.l.b16 %v4533
    %v4637 = vunpack.c.l.b16 %v4534
    %v4638 = vunpack.c.l.b16 %v4535
    %v4639 = vunpack.c.l.b16 %v4536
    %v4640 = vunpack.c.l.b16 %v4537
    %v4641 = vunpack.c.l.b16 %v4538
    %v4642 = vunpack.c.l.b16 %v4539
    %v4643 = vunpack.c.l.b16 %v4540
    %v4644 = vunpack.c.l.b16 %v4541
    %v4645 = vunpack.c.l.b16 %v4542
    %v4646 = vunpack.c.l.b16 %v4543
    %v4647 = vunpack.c.l.b16 %v4544
    %v4648 = vunpack.c.l.b16 %v4545
    %v4649 = vunpack.c.l.b16 %v4546
    %v4650 = vunpack.c.l.b16 %v4547
    %v4651 = vunpack.c.l.b16 %v4548
    %v4652 = vunpack.c.l.b16 %v4549
    %v4653 = vunpack.c.l.b16 %v4550
    %v4654 = vunpack.c.l.b16 %v4551
    %v4655 = vunpack.c.l.b16 %v4552
    %v4656 = vunpack.c.l.b16 %v4553
    %v4657 = vunpack.c.l.b16 %v4554
    %v4658 = vunpack.c.l.b16 %v4555
    %v4659 = vunpack.c.l.b16 %v4556
    %v4660 = vunpack.c.l.b16 %v4557
    %v4661 = vunpack.c.l.b16 %v4558
    %v4662 = vunpack.c.l.b16 %v4559
    %v4663 = vunpack.c.l.b16 %v4560
    %v4664 = vunpack.c.l.b16 %v4561
    %v4665 = vunpack.c.l.b16 %v4562
    %v4666 = vunpack.c.l.b16 %v4563
    %v4667 = vunpack.c.l.b16 %v4564
    %v4668 = vunpack.c.l.b16 %v4565
    %v4669 = vunpack.c.l.b16 %v4566
    %v4670 = vunpack.c.l.b16 %v4567
    %v4671 = vunpack.c.l.b16 %v4568
    %v4672 = vunpack.c.l.b16 %v4569
    %v4673 = vunpack.c.l.b16 %v4570
    %v4674 = vunpack.c.l.b16 %v4571
    %v4675 = vunpack.c.l.b16 %v4572
    %v4676 = vunpack.c.l.b16 %v4573
    %v4677 = vunpack.c.l.b16 %v4574
    %v4678 = vpack.c.b16 %v4631, %v4630
    %v4679 = vpack.c.b16 %v4633, %v4632
    %v4680 = vpack.c.b16 %v4635, %v4634
    %v4681 = vpack.c.b16 %v4637, %v4636
    %v4682 = vpack.c.b16 %v4639, %v4638
    %v4683 = vpack.c.b16 %v4641, %v4640
    %v4684 = vpack.c.b16 %v4643, %v4642
    %v4685 = vpack.c.b16 %v4645, %v4644
    %v4686 = vpack.c.b16 %v4647, %v4646
    %v4687 = vpack.c.b16 %v4649, %v4648
    %v4688 = vpack.c.b16 %v4651, %v4650
    %v4689 = vpack.c.b16 %v4653, %v4652
    %v4690 = vpack.c.b16 %v4655, %v4654
    %v4691 = vpack.c.b16 %v4657, %v4656
    %v4692 = vpack.c.b16 %v4659, %v4658
    %v4693 = vpack.c.b16 %v4661, %v4660
    %v4694 = vpack.c.b16 %v4663, %v4662
    %v4695 = vpack.c.b16 %v4665, %v4664
    %v4696 = vpack.c.b16 %v4667, %v4666
    %v4697 = vpack.c.b16 %v4669, %v4668
    %v4698 = vpack.c.b16 %v4671, %v4670
    %v4699 = vpack.c.b16 %v4673, %v4672
    %v4700 = vpack.c.b16 %v4675, %v4674
    %v4701 = vpack.c.b16 %v4677, %v4676
    %4726 = vmatprep.subr.bf16.mxu0 0
    %4727 = vmatpush1.bf16.msra.mxu0 %v4685
    %4728 = vmatprep.subr.bf16.mxu0 0
    %4729 = vmatpush1.bf16.msra.mxu0 %v4684
    %4730 = vmatprep.subr.bf16.mxu0 0
    %4731 = vmatpush1.bf16.msra.mxu0 %v4683
    %4732 = vmatprep.subr.bf16.mxu0 0
    %4733 = vmatpush1.bf16.msra.mxu0 %v4682
    %4734 = vmatprep.subr.bf16.mxu0 0
    %4735 = vmatpush1.bf16.msra.mxu0 %v4681
    %4736 = vmatprep.subr.bf16.mxu0 0
    %4737 = vmatpush1.bf16.msra.mxu0 %v4680
    %4738 = vmatprep.subr.bf16.mxu0 0
    %4739 = vmatpush1.bf16.msra.mxu0 %v4679
    %4740 = vmatprep.subr.bf16.mxu0 0
    %4741 = vmatpush1.bf16.msra.mxu0 %v4678
    %4742 = vmatprep.subr.bf16.mxu0 0
    %4743 = vmatpush2.bf16.msra.mxu0 %v4693
    %4744 = vmatprep.subr.bf16.mxu0 0
    %4745 = vmatpush2.bf16.msra.mxu0 %v4692
    %4746 = vmatprep.subr.bf16.mxu0 0
    %4747 = vmatpush2.bf16.msra.mxu0 %v4691
    %4748 = vmatprep.subr.bf16.mxu0 0
    %4749 = vmatpush2.bf16.msra.mxu0 %v4690
    %4750 = vmatprep.subr.bf16.mxu0 0
    %4751 = vmatpush2.bf16.msra.mxu0 %v4689
    %4752 = vmatprep.subr.bf16.mxu0 0
    %4753 = vmatpush2.bf16.msra.mxu0 %v4688
    %4754 = vmatprep.subr.bf16.mxu0 0
    %4755 = vmatpush2.bf16.msra.mxu0 %v4687
    %4756 = vmatprep.subr.bf16.mxu0 0
    %4757 = vmatpush2.bf16.msra.mxu0 %v4686
    %4758 = vmatprep.mubr.bf16.mxu0 %v4526
    %4759 = vmatmul.mubr.bf16.gmra.mxu0 %v4525
    %v4760 = vpop.f32.mrf.mxu0
    %v4761 = vadd.f32 %v4580, %v4760
    %v4762 = vpop.f32.mrf.mxu0
    %v4763 = vpop.f32.mrf.mxu0
    %v4764 = vpop.f32.mrf.mxu0
    %4765 = vdwg.mxu0
    %4766 = vmatprep.subr.bf16.mxu0 0
    %4767 = vmatpush1.bf16.msra.mxu0 %v4701
    %4768 = vmatprep.subr.bf16.mxu0 0
    %4769 = vmatpush1.bf16.msra.mxu0 %v4700
    %4770 = vmatprep.subr.bf16.mxu0 0
    %4771 = vmatpush1.bf16.msra.mxu0 %v4699
    %4772 = vmatprep.subr.bf16.mxu0 0
    %4773 = vmatpush1.bf16.msra.mxu0 %v4698
    %4774 = vmatprep.subr.bf16.mxu0 0
    %4775 = vmatpush1.bf16.msra.mxu0 %v4697
    %4776 = vmatprep.subr.bf16.mxu0 0
    %4777 = vmatpush1.bf16.msra.mxu0 %v4696
    %4778 = vmatprep.subr.bf16.mxu0 0
    %4779 = vmatpush1.bf16.msra.mxu0 %v4695
    %4780 = vmatprep.subr.bf16.mxu0 0
    %4781 = vmatpush1.bf16.msra.mxu0 %v4694
    %4782 = vmatprep.subr.bf16.mxu0 0
    %4783 = vmatpush2.bf16.msra.mxu0 0
    %4784 = vmatprep.subr.bf16.mxu0 0
    %4785 = vmatpush2.bf16.msra.mxu0 0
    %4786 = vmatprep.subr.bf16.mxu0 0
    %4787 = vmatpush2.bf16.msra.mxu0 0
    %4788 = vmatprep.subr.bf16.mxu0 0
    %4789 = vmatpush2.bf16.msra.mxu0 0
    %4790 = vmatprep.subr.bf16.mxu0 0
    %4791 = vmatpush2.bf16.msra.mxu0 0
    %4792 = vmatprep.subr.bf16.mxu0 0
    %4793 = vmatpush2.bf16.msra.mxu0 0
    %4794 = vmatprep.subr.bf16.mxu0 0
    %4795 = vmatpush2.bf16.msra.mxu0 0
    %4796 = vmatprep.subr.bf16.mxu0 0
    %4797 = vmatpush2.bf16.msra.mxu0 0
    %4798 = vmatprep.mubr.bf16.mxu0 0
    %4799 = vmatmul.mubr.bf16.gmra.mxu0 %v4044
    %v4800 = vpop.f32.mrf.mxu0
    %v4801 = vadd.f32 %v4761, %v4800
    %v4802 = vpop.f32.mrf.mxu0
    %v4803 = vpop.f32.mrf.mxu0
    %v4804 = vpop.f32.mrf.mxu0
    %4805 = vdwg.mxu0
    %4806 = vst [vmem:[#allocation14] sm:$0x3] %v4801
    // Predicated region
    $region58: #{tpu_custom_call.1} parent=1 // pred_check
      _
    $region59: #{tpu_custom_call.1} parent=1 // pred_check_branch
      %4808 = sbr.rel (0) target = $region61
    $region60: #{tpu_custom_call.1} parent=1 // pred_region
      %s4810 = ssub.s32 32, 32
      %4811 = vsyncadd [#allocation4], %s4810
      %s4813 = sshll.u32 [#allocation14], 4
      %s4814 = int_to_ptr.vmem [resolvable:$true] %s4813
      %4816 = dma.vmem_to_hbm [thread:$0]  %s4814, 32, %s7, [#allocation4]
    $region61: #{tpu_custom_call.1} parent=1 // pred_fallthru
      _
    // Predicated region
    $region62: #{tpu_custom_call.1} parent=1 // pred_check
      _
    $region63: #{tpu_custom_call.1} parent=1 // pred_check_branch
      %4818 = sbr.rel (0) target = $region65
    $region64: #{tpu_custom_call.1} parent=1 // pred_region
      %4819 = dma.done [#allocation4], 32
    $region65: #{tpu_custom_call.1} parent=1 // pred_fallthru
      _
    %4820 = vsyncpa [#allocation3], 1
    %4821 = vsyncpa [#allocation6], 1
    %4822 = vsyncpa [#allocation9], 1
    %4823 = vsyncpa [#allocation12], 1
    %4824 = vsyncpa [#allocation4], 1

</llo_original>
